<compile_context>
chip_gen: v7x
topology: tpu7x:2x2x1
jax: 0.10.0
libtpu: 0.0.40
codegen_flags: <defaults>
</compile_context>

<pallas_src>
import jax
import jax.numpy as jnp
import numpy as np
from jax.experimental import pallas as pl
from jax.experimental.pallas import tpu as pltpu

# ---- small, self-consistent config (module implies: Embedding + bidirectional 2-layer GRU) ----
VOCAB = 40        # input_size
EMB = 32          # embedding_size
HID = 32          # hidden_size
NUM_LAYERS = 2
SEQ = 8
BATCH = 2
DROPOUT_P = 0.3   # identity at inference

VOCAB_PAD = ((VOCAB + 63) // 64) * 64   # pad table rows so the one-hot gather matmul K is aligned


# ----------------------------- fused Pallas encoder kernel ------------------------------------
def _build_encoder_call(T, N):
    """Single pallas_call running embedding lookup + both GRU layers, both directions."""
    E, H = EMB, HID

    def encoder_kernel(tok_ref, emb_ref, wih_ref, whh_ref, bih_ref, bhh_ref,
                       states_ref, hid_ref):
        # ---------------- in-kernel embedding lookup (one-hot MXU gather) ----------------
        tok = tok_ref[...]                                                   # (T*N, 1) int32
        lane = jax.lax.broadcasted_iota(jnp.int32, (T * N, VOCAB_PAD), 1)
        onehot = (tok == lane).astype(jnp.float32)                           # (T*N, VOCAB_PAD)
        x0 = jnp.dot(onehot, emb_ref[...],
                     preferred_element_type=jnp.float32)                     # (T*N, E)
        # Dropout on the embedding is the inference-mode identity.

        # Block-diagonal direction mask (built once, shared by both layers):
        # rows 0:N keep the first H lanes (fwd state), rows N:2N keep the last H (bwd).
        rid = jax.lax.broadcasted_iota(jnp.int32, (2 * N, 2 * H), 0)
        cid = jax.lax.broadcasted_iota(jnp.int32, (2 * N, 2 * H), 1)
        fwd_row, fwd_col = rid < N, cid < H
        blk_mask = jnp.where((fwd_row & fwd_col) | (~fwd_row & ~fwd_col),
                             1.0, 0.0).astype(jnp.float32)                   # (2N, 2H)

        def bidir_layer(x_flat, row_off, in_size, layer):
            # ---- hoisted input projection: BOTH directions in ONE matmul, bias once ----
            wih = wih_ref[row_off:row_off + in_size, :]                      # (In, 6H)
            bih = bih_ref[layer:layer + 1, :]                                # (1, 6H)
            gi = jnp.dot(x_flat, wih, preferred_element_type=jnp.float32) + bih  # (T*N, 6H)
            gi_f, gi_b = gi[:, 0:3 * H], gi[:, 3 * H:6 * H]

            # Per-step merged gate inputs: rows [fwd @ t=s ; bwd @ t=T-1-s].  These are
            # independent of the recurrence -> off the serial chain.
            gi_steps = [jnp.concatenate(
                [gi_f[s * N:(s + 1) * N, :],
                 gi_b[(T - 1 - s) * N:(T - s) * N, :]], axis=0)              # (2N, 3H)
                for s in range(T)]

            # ---- merged recurrent weights + pre-broadcast recurrent bias (once/layer) ----
            whh = whh_ref[layer * 2 * H:(layer + 1) * 2 * H, :]              # (2H, 3H) [fwd; bwd]
            bhh = bhh_ref[layer:layer + 1, :]                                # (1, 6H)
            bhh_big = jnp.concatenate(
                [jnp.broadcast_to(bhh[:, 0:3 * H], (N, 3 * H)),
                 jnp.broadcast_to(bhh[:, 3 * H:6 * H], (N, 3 * H))], axis=0)  # (2N, 3H)

            # ---- serial recurrence: ONE matmul + ONE sigmoid + ONE tanh per step ----
            # PyTorch gate order (r, z, n); b_hh stays in the recurrence because the
            # n gate uses r * (h @ W_hn^T + b_hn).
            h = jnp.zeros((2 * N, H), jnp.float32)                           # [h_fwd ; h_bwd]
            hs = []
            for s in range(T):
                h2 = jnp.concatenate([h, h], axis=1) * blk_mask              # (2N, 2H) blk-diag
                gh = jnp.dot(h2, whh,
                             preferred_element_type=jnp.float32) + bhh_big   # (2N, 3H)
                gi_s = gi_steps[s]
                rz = jax.nn.sigmoid(gi_s[:, 0:2 * H] + gh[:, 0:2 * H])       # fused r|z sigmoid
                r, z = rz[:, 0:H], rz[:, H:2 * H]
                n = jnp.tanh(gi_s[:, 2 * H:3 * H] + r * gh[:, 2 * H:3 * H])
                h = (1.0 - z) * n + z * h
                hs.append(h)

            fwd_seq = [hs[t][0:N, :] for t in range(T)]                      # time-ordered fwd
            bwd_seq = [hs[T - 1 - t][N:2 * N, :] for t in range(T)]          # time-ordered bwd
            return fwd_seq, bwd_seq, hs[T - 1][0:N, :], hs[T - 1][N:2 * N, :]

        # Layer 0: input = embeddings; output stays in SSA values (no VMEM scratch).
        f0, b0, hf0, hb0 = bidir_layer(x0, 0, E, 0)
        # TODO(synk): inter-layer dropout omitted (inference identity).
        x1 = jnp.concatenate(
            [jnp.concatenate([f0[t], b0[t]], axis=1) for t in range(T)], axis=0)   # (T*N, 2H)
        # Layer 1: input = layer-0 bidirectional output.
        f1, b1, hf1, hb1 = bidir_layer(x1, E, 2 * H, 1)

        # Lane-dense states slab (T, N*2H) = (8, 128), assembled once, stored unmasked.
        rows = []
        for t in range(T):
            parts = []
            for n in range(N):
                parts.append(f1[t][n:n + 1, :])
                parts.append(b1[t][n:n + 1, :])
            rows.append(jnp.concatenate(parts, axis=1))                      # (1, N*2H)
        states_ref[...] = jnp.concatenate(rows, axis=0)                      # (T, N*2H)

        # PyTorch h_n order is [l0_fwd, l0_bwd, l1_fwd, l1_bwd]; the module returns
        # (h[0:L] + h[L:2L]) / 2 -> [(l0_f + l1_f)/2, (l0_b + l1_b)/2]  (NUM_LAYERS=2).
        hid_ref[0] = (hf0 + hf1) * 0.5
        hid_ref[1] = (hb0 + hb1) * 0.5

    vmem = pl.BlockSpec(memory_space=pltpu.MemorySpace.VMEM)
    return pl.pallas_call(
        encoder_kernel,
        out_shape=(jax.ShapeDtypeStruct((T, N * 2 * HID), jnp.float32),
                   jax.ShapeDtypeStruct((NUM_LAYERS, N, HID), jnp.float32)),
        in_specs=[vmem] * 6,     # tokens, emb table, wih_all, whh_all, bih_all, bhh_all
        out_specs=(vmem, vmem),
        compiler_params=pltpu.CompilerParams(vmem_limit_bytes=32 * 1024 * 1024),
    )


# ----------------------------- one-time parameter packing -------------------------------------
def pack_params(raw_params):
    """Pack the 16 GRU tensors + embedding into 5 pre-transposed/padded VMEM slabs."""
    emb = raw_params["embedding"]                                            # (VOCAB, E)
    emb_pad = jnp.zeros((VOCAB_PAD, EMB), jnp.float32).at[0:VOCAB].set(emb)
    wih_blocks, whh_blocks, bih_rows, bhh_rows = [], [], [], []
    for layer in range(NUM_LAYERS):
        w_ih_f, w_hh_f, b_ih_f, b_hh_f = raw_params[f"l{layer}_fwd"]
        w_ih_b, w_hh_b, b_ih_b, b_hh_b = raw_params[f"l{layer}_bwd"]
        wih_blocks.append(jnp.concatenate([w_ih_f.T, w_ih_b.T], axis=1))     # (In_l, 6H)
        whh_blocks.append(jnp.concatenate([w_hh_f.T, w_hh_b.T], axis=0))     # (2H, 3H)
        bih_rows.append(jnp.concatenate([b_ih_f, b_ih_b])[None, :])          # (1, 6H)
        bhh_rows.append(jnp.concatenate([b_hh_f, b_hh_b])[None, :])          # (1, 6H)
    return (emb_pad,
            jnp.concatenate(wih_blocks, axis=0),     # (E + 2H, 6H)
            jnp.concatenate(whh_blocks, axis=0),     # (NUM_LAYERS*2H, 3H)
            jnp.concatenate(bih_rows, axis=0),       # (NUM_LAYERS, 6H)
            jnp.concatenate(bhh_rows, axis=0))       # (NUM_LAYERS, 6H)


# ----------------------------- Encoder forward (Pallas-backed) --------------------------------
def encoder_forward(packed, x_tokens):
    """Mirrors Encoder.forward for cell_type='GRU', bidirectional=True (inference)."""
    T, N = x_tokens.shape
    tok = x_tokens.reshape(T * N, 1).astype(jnp.int32)
    call = _build_encoder_call(T, N)
    states_dense, hidden = call(tok, *packed)
    encoder_states = states_dense.reshape(T, N, 2 * HID)   # row-major reshape is free
    return encoder_states, hidden                           # hidden: (NUM_LAYERS, N, H)


# ----------------------------- Pure-JAX reference (for correctness) ---------------------------
def gru_layer_ref(x, w_ih, w_hh, b_ih, b_hh):
    H = w_hh.shape[1]

    def step(h, xt):
        gi = xt @ w_ih.T + b_ih
        gh = h @ w_hh.T + b_hh
        r = jax.nn.sigmoid(gi[:, :H] + gh[:, :H])
        z = jax.nn.sigmoid(gi[:, H:2 * H] + gh[:, H:2 * H])
        n = jnp.tanh(gi[:, 2 * H:] + r * gh[:, 2 * H:])
        h_new = (1.0 - z) * n + z * h
        return h_new, h_new

    h0 = jnp.zeros((x.shape[1], H), jnp.float32)
    hT, outs = jax.lax.scan(step, h0, x)
    return outs, hT


def encoder_forward_ref(params, x_tokens):
    emb = jnp.take(params["embedding"], x_tokens, axis=0)
    layer_in = emb
    finals = []
    for layer in range(NUM_LAYERS):
        out_f, h_f = gru_layer_ref(layer_in, *params[f"l{layer}_fwd"])
        out_b_rev, h_b = gru_layer_ref(jnp.flip(layer_in, axis=0), *params[f"l{layer}_bwd"])
        out_b = jnp.flip(out_b_rev, axis=0)
        layer_in = jnp.concatenate([out_f, out_b], axis=-1)
        finals += [h_f, h_b]
    hidden = jnp.stack(finals, axis=0)
    hidden = (hidden[0:NUM_LAYERS] + hidden[NUM_LAYERS:2 * NUM_LAYERS]) / 2.0
    return layer_in, hidden


# ----------------------------- Deterministic parameter init -----------------------------------
def init_params(key):
    params = {}
    key, k_emb = jax.random.split(key)
    params["embedding"] = jax.random.normal(k_emb, (VOCAB, EMB), jnp.float32)
    bound = 1.0 / np.sqrt(HID)
    for layer in range(NUM_LAYERS):
        in_size = EMB if layer == 0 else 2 * HID
        for direction in ("fwd", "bwd"):
            key, k1, k2, k3, k4 = jax.random.split(key, 5)
            w_ih = jax.random.uniform(k1, (3 * HID, in_size), jnp.float32, -bound, bound)
            w_hh = jax.random.uniform(k2, (3 * HID, HID), jnp.float32, -bound, bound)
            b_ih = jax.random.uniform(k3, (3 * HID,), jnp.float32, -bound, bound)
            b_hh = jax.random.uniform(k4, (3 * HID,), jnp.float32, -bound, bound)
            params[f"l{layer}_{direction}"] = (w_ih, w_hh, b_ih, b_hh)
    return params


if __name__ == "__main__":
    key = jax.random.PRNGKey(0)
    key, k_tok = jax.random.split(key)
    raw_params = init_params(key)
    packed = pack_params(raw_params)     # one-time weight prep (transpose/pack/pad)

    # x: (seq_length, N) integer token ids, as in the PyTorch forward docstring.
    x_tokens = jax.random.randint(k_tok, (SEQ, BATCH), 0, VOCAB, dtype=jnp.int32)

    fwd = jax.jit(encoder_forward)
    encoder_states, hidden = jax.block_until_ready(fwd(packed, x_tokens))

    # sanity-check against a pure-JAX reference
    ref_states, ref_hidden = jax.block_until_ready(encoder_forward_ref(raw_params, x_tokens))
    assert encoder_states.shape == (SEQ, BATCH, 2 * HID)
    assert hidden.shape == (NUM_LAYERS, BATCH, HID)
    np.testing.assert_allclose(np.asarray(encoder_states), np.asarray(ref_states),
                               rtol=1e-5, atol=1e-5)
    np.testing.assert_allclose(np.asarray(hidden), np.asarray(ref_hidden),
                               rtol=1e-5, atol=1e-5)

    print("KERNEL_OK")
</pallas_src>

<mosaic_0001>
module attributes {stable_mosaic.version = 11 : i64} {
  func.func @encoder_kernel(%arg0: memref<16x1xi32, #tpu.memory_space<vmem>>, %arg1: memref<64x32xf32, #tpu.memory_space<vmem>>, %arg2: memref<96x192xf32, #tpu.memory_space<vmem>>, %arg3: memref<128x96xf32, #tpu.memory_space<vmem>>, %arg4: memref<2x192xf32, #tpu.memory_space<vmem>>, %arg5: memref<2x192xf32, #tpu.memory_space<vmem>>, %arg6: memref<8x128xf32, #tpu.memory_space<vmem>>, %arg7: memref<2x2x32xf32, #tpu.memory_space<vmem>>) attributes {dimension_semantics = [], scalar_prefetch = 0 : i64, scratch_operands = 0 : i64, tpu.core_type = #tpu.core_type<tc>} {
    %c0 = arith.constant 0 : index
    %c0_0 = arith.constant 0 : index
    %0 = vector.load %arg0[%c0, %c0_0] : memref<16x1xi32, #tpu.memory_space<vmem>>, vector<16x1xi32>
    %1 = tpu.iota {dimensions = array<i32: 1>} : vector<16x64xi32>
    %2 = vector.broadcast %0 : vector<16x1xi32> to vector<16x64xi32>
    %3 = arith.cmpi eq, %2, %1 : vector<16x64xi32>
    %4 = arith.extui %3 : vector<16x64xi1> to vector<16x64xi32>
    %5 = arith.sitofp %4 : vector<16x64xi32> to vector<16x64xf32>
    %c0_1 = arith.constant 0 : index
    %c0_2 = arith.constant 0 : index
    %6 = vector.load %arg1[%c0_1, %c0_2] : memref<64x32xf32, #tpu.memory_space<vmem>>, vector<64x32xf32>
    %cst = arith.constant dense<0.000000e+00> : vector<16x32xf32>
    %7 = tpu.matmul %5, %6, %cst {dimension_numbers = #tpu.dot_dimension_numbers<[1], [0], [0], [1], [0, 0, 1, 1], [], []>} : vector<16x64xf32>, vector<64x32xf32>, vector<16x32xf32> -> vector<16x32xf32>
    %8 = tpu.iota {dimensions = array<i32: 0>} : vector<4x64xi32>
    %9 = tpu.iota {dimensions = array<i32: 1>} : vector<4x64xi32>
    %c2_i32 = arith.constant 2 : i32
    %10 = vector.broadcast %c2_i32 : i32 to vector<4x64xi32>
    %11 = arith.cmpi slt, %8, %10 : vector<4x64xi32>
    %c32_i32 = arith.constant 32 : i32
    %12 = vector.broadcast %c32_i32 : i32 to vector<4x64xi32>
    %13 = arith.cmpi slt, %9, %12 : vector<4x64xi32>
    %14 = arith.andi %11, %13 : vector<4x64xi1>
    %cst_3 = arith.constant dense<true> : vector<4x64xi1>
    %15 = arith.xori %11, %cst_3 : vector<4x64xi1>
    %cst_4 = arith.constant dense<true> : vector<4x64xi1>
    %16 = arith.xori %13, %cst_4 : vector<4x64xi1>
    %17 = arith.andi %15, %16 : vector<4x64xi1>
    %18 = arith.ori %14, %17 : vector<4x64xi1>
    %cst_5 = arith.constant 1.000000e+00 : f32
    %cst_6 = arith.constant 0.000000e+00 : f32
    %19 = vector.broadcast %cst_5 : f32 to vector<4x64xf32>
    %20 = vector.broadcast %cst_6 : f32 to vector<4x64xf32>
    %21 = arith.select %18, %19, %20 : vector<4x64xi1>, vector<4x64xf32>
    %c0_7 = arith.constant 0 : index
    %c0_8 = arith.constant 0 : index
    %22 = vector.load %arg2[%c0_7, %c0_8] : memref<96x192xf32, #tpu.memory_space<vmem>>, vector<32x192xf32>
    %c0_9 = arith.constant 0 : index
    %c0_10 = arith.constant 0 : index
    %23 = vector.load %arg4[%c0_9, %c0_10] : memref<2x192xf32, #tpu.memory_space<vmem>>, vector<1x192xf32>
    %cst_11 = arith.constant dense<0.000000e+00> : vector<16x192xf32>
    %24 = tpu.matmul %7, %22, %cst_11 {dimension_numbers = #tpu.dot_dimension_numbers<[1], [0], [0], [1], [0, 0, 1, 1], [], []>} : vector<16x32xf32>, vector<32x192xf32>, vector<16x192xf32> -> vector<16x192xf32>
    %25 = vector.broadcast %23 : vector<1x192xf32> to vector<16x192xf32>
    %26 = arith.addf %24, %25 : vector<16x192xf32>
    %27 = vector.extract_strided_slice %26 {offsets = [0, 0], sizes = [16, 96], strides = [1, 1]} : vector<16x192xf32> to vector<16x96xf32>
    %28 = vector.extract_strided_slice %26 {offsets = [0, 96], sizes = [16, 96], strides = [1, 1]} : vector<16x192xf32> to vector<16x96xf32>
    %29 = vector.extract_strided_slice %27 {offsets = [0, 0], sizes = [2, 96], strides = [1, 1]} : vector<16x96xf32> to vector<2x96xf32>
    %30 = vector.extract_strided_slice %28 {offsets = [14, 0], sizes = [2, 96], strides = [1, 1]} : vector<16x96xf32> to vector<2x96xf32>
    %31 = tpu.concatenate %29, %30 in 0 : vector<2x96xf32>, vector<2x96xf32> -> vector<4x96xf32>
    %32 = vector.extract_strided_slice %27 {offsets = [2, 0], sizes = [2, 96], strides = [1, 1]} : vector<16x96xf32> to vector<2x96xf32>
    %33 = vector.extract_strided_slice %28 {offsets = [12, 0], sizes = [2, 96], strides = [1, 1]} : vector<16x96xf32> to vector<2x96xf32>
    %34 = tpu.concatenate %32, %33 in 0 : vector<2x96xf32>, vector<2x96xf32> -> vector<4x96xf32>
    %35 = vector.extract_strided_slice %27 {offsets = [4, 0], sizes = [2, 96], strides = [1, 1]} : vector<16x96xf32> to vector<2x96xf32>
    %36 = vector.extract_strided_slice %28 {offsets = [10, 0], sizes = [2, 96], strides = [1, 1]} : vector<16x96xf32> to vector<2x96xf32>
    %37 = tpu.concatenate %35, %36 in 0 : vector<2x96xf32>, vector<2x96xf32> -> vector<4x96xf32>
    %38 = vector.extract_strided_slice %27 {offsets = [6, 0], sizes = [2, 96], strides = [1, 1]} : vector<16x96xf32> to vector<2x96xf32>
    %39 = vector.extract_strided_slice %28 {offsets = [8, 0], sizes = [2, 96], strides = [1, 1]} : vector<16x96xf32> to vector<2x96xf32>
    %40 = tpu.concatenate %38, %39 in 0 : vector<2x96xf32>, vector<2x96xf32> -> vector<4x96xf32>
    %41 = vector.extract_strided_slice %27 {offsets = [8, 0], sizes = [2, 96], strides = [1, 1]} : vector<16x96xf32> to vector<2x96xf32>
    %42 = vector.extract_strided_slice %28 {offsets = [6, 0], sizes = [2, 96], strides = [1, 1]} : vector<16x96xf32> to vector<2x96xf32>
    %43 = tpu.concatenate %41, %42 in 0 : vector<2x96xf32>, vector<2x96xf32> -> vector<4x96xf32>
    %44 = vector.extract_strided_slice %27 {offsets = [10, 0], sizes = [2, 96], strides = [1, 1]} : vector<16x96xf32> to vector<2x96xf32>
    %45 = vector.extract_strided_slice %28 {offsets = [4, 0], sizes = [2, 96], strides = [1, 1]} : vector<16x96xf32> to vector<2x96xf32>
    %46 = tpu.concatenate %44, %45 in 0 : vector<2x96xf32>, vector<2x96xf32> -> vector<4x96xf32>
    %47 = vector.extract_strided_slice %27 {offsets = [12, 0], sizes = [2, 96], strides = [1, 1]} : vector<16x96xf32> to vector<2x96xf32>
    %48 = vector.extract_strided_slice %28 {offsets = [2, 0], sizes = [2, 96], strides = [1, 1]} : vector<16x96xf32> to vector<2x96xf32>
    %49 = tpu.concatenate %47, %48 in 0 : vector<2x96xf32>, vector<2x96xf32> -> vector<4x96xf32>
    %50 = vector.extract_strided_slice %27 {offsets = [14, 0], sizes = [2, 96], strides = [1, 1]} : vector<16x96xf32> to vector<2x96xf32>
    %51 = vector.extract_strided_slice %28 {offsets = [0, 0], sizes = [2, 96], strides = [1, 1]} : vector<16x96xf32> to vector<2x96xf32>
    %52 = tpu.concatenate %50, %51 in 0 : vector<2x96xf32>, vector<2x96xf32> -> vector<4x96xf32>
    %c0_12 = arith.constant 0 : index
    %c0_13 = arith.constant 0 : index
    %53 = vector.load %arg3[%c0_12, %c0_13] : memref<128x96xf32, #tpu.memory_space<vmem>>, vector<64x96xf32>
    %c0_14 = arith.constant 0 : index
    %c0_15 = arith.constant 0 : index
    %54 = vector.load %arg5[%c0_14, %c0_15] : memref<2x192xf32, #tpu.memory_space<vmem>>, vector<1x192xf32>
    %55 = vector.extract_strided_slice %54 {offsets = [0, 0], sizes = [1, 96], strides = [1, 1]} : vector<1x192xf32> to vector<1x96xf32>
    %56 = vector.shape_cast %55 : vector<1x96xf32> to vector<1x96xf32>
    %57 = vector.broadcast %56 : vector<1x96xf32> to vector<2x96xf32>
    %58 = vector.extract_strided_slice %54 {offsets = [0, 96], sizes = [1, 96], strides = [1, 1]} : vector<1x192xf32> to vector<1x96xf32>
    %59 = vector.shape_cast %58 : vector<1x96xf32> to vector<1x96xf32>
    %60 = vector.broadcast %59 : vector<1x96xf32> to vector<2x96xf32>
    %61 = tpu.concatenate %57, %60 in 0 : vector<2x96xf32>, vector<2x96xf32> -> vector<4x96xf32>
    %cst_16 = arith.constant 0.000000e+00 : f32
    %62 = vector.broadcast %cst_16 : f32 to vector<4x32xf32>
    %63 = tpu.concatenate %62, %62 in 1 : vector<4x32xf32>, vector<4x32xf32> -> vector<4x64xf32>
    %64 = arith.mulf %63, %21 : vector<4x64xf32>
    %cst_17 = arith.constant dense<0.000000e+00> : vector<4x96xf32>
    %65 = tpu.matmul %64, %53, %cst_17 {dimension_numbers = #tpu.dot_dimension_numbers<[1], [0], [0], [1], [0, 0, 1, 1], [], []>} : vector<4x64xf32>, vector<64x96xf32>, vector<4x96xf32> -> vector<4x96xf32>
    %66 = arith.addf %65, %61 : vector<4x96xf32>
    %67 = vector.extract_strided_slice %31 {offsets = [0, 0], sizes = [4, 64], strides = [1, 1]} : vector<4x96xf32> to vector<4x64xf32>
    %68 = vector.extract_strided_slice %66 {offsets = [0, 0], sizes = [4, 64], strides = [1, 1]} : vector<4x96xf32> to vector<4x64xf32>
    %69 = arith.addf %67, %68 : vector<4x64xf32>
    %70 = arith.negf %69 : vector<4x64xf32>
    %71 = math.exp %70 : vector<4x64xf32>
    %cst_18 = arith.constant 1.000000e+00 : f32
    %72 = vector.broadcast %cst_18 : f32 to vector<4x64xf32>
    %73 = arith.addf %72, %71 : vector<4x64xf32>
    %74 = arith.divf %72, %73 : vector<4x64xf32>
    %75 = vector.extract_strided_slice %74 {offsets = [0, 0], sizes = [4, 32], strides = [1, 1]} : vector<4x64xf32> to vector<4x32xf32>
    %76 = vector.extract_strided_slice %74 {offsets = [0, 32], sizes = [4, 32], strides = [1, 1]} : vector<4x64xf32> to vector<4x32xf32>
    %77 = vector.extract_strided_slice %31 {offsets = [0, 64], sizes = [4, 32], strides = [1, 1]} : vector<4x96xf32> to vector<4x32xf32>
    %78 = vector.extract_strided_slice %66 {offsets = [0, 64], sizes = [4, 32], strides = [1, 1]} : vector<4x96xf32> to vector<4x32xf32>
    %79 = arith.mulf %75, %78 : vector<4x32xf32>
    %80 = arith.addf %77, %79 : vector<4x32xf32>
    %81 = math.tanh %80 : vector<4x32xf32>
    %cst_19 = arith.constant 1.000000e+00 : f32
    %82 = vector.broadcast %cst_19 : f32 to vector<4x32xf32>
    %83 = arith.subf %82, %76 : vector<4x32xf32>
    %84 = arith.mulf %83, %81 : vector<4x32xf32>
    %85 = arith.mulf %76, %62 : vector<4x32xf32>
    %86 = arith.addf %84, %85 : vector<4x32xf32>
    %87 = tpu.concatenate %86, %86 in 1 : vector<4x32xf32>, vector<4x32xf32> -> vector<4x64xf32>
    %88 = arith.mulf %87, %21 : vector<4x64xf32>
    %cst_20 = arith.constant dense<0.000000e+00> : vector<4x96xf32>
    %89 = tpu.matmul %88, %53, %cst_20 {dimension_numbers = #tpu.dot_dimension_numbers<[1], [0], [0], [1], [0, 0, 1, 1], [], []>} : vector<4x64xf32>, vector<64x96xf32>, vector<4x96xf32> -> vector<4x96xf32>
    %90 = arith.addf %89, %61 : vector<4x96xf32>
    %91 = vector.extract_strided_slice %34 {offsets = [0, 0], sizes = [4, 64], strides = [1, 1]} : vector<4x96xf32> to vector<4x64xf32>
    %92 = vector.extract_strided_slice %90 {offsets = [0, 0], sizes = [4, 64], strides = [1, 1]} : vector<4x96xf32> to vector<4x64xf32>
    %93 = arith.addf %91, %92 : vector<4x64xf32>
    %94 = arith.negf %93 : vector<4x64xf32>
    %95 = math.exp %94 : vector<4x64xf32>
    %cst_21 = arith.constant 1.000000e+00 : f32
    %96 = vector.broadcast %cst_21 : f32 to vector<4x64xf32>
    %97 = arith.addf %96, %95 : vector<4x64xf32>
    %98 = arith.divf %96, %97 : vector<4x64xf32>
    %99 = vector.extract_strided_slice %98 {offsets = [0, 0], sizes = [4, 32], strides = [1, 1]} : vector<4x64xf32> to vector<4x32xf32>
    %100 = vector.extract_strided_slice %98 {offsets = [0, 32], sizes = [4, 32], strides = [1, 1]} : vector<4x64xf32> to vector<4x32xf32>
    %101 = vector.extract_strided_slice %34 {offsets = [0, 64], sizes = [4, 32], strides = [1, 1]} : vector<4x96xf32> to vector<4x32xf32>
    %102 = vector.extract_strided_slice %90 {offsets = [0, 64], sizes = [4, 32], strides = [1, 1]} : vector<4x96xf32> to vector<4x32xf32>
    %103 = arith.mulf %99, %102 : vector<4x32xf32>
    %104 = arith.addf %101, %103 : vector<4x32xf32>
    %105 = math.tanh %104 : vector<4x32xf32>
    %cst_22 = arith.constant 1.000000e+00 : f32
    %106 = vector.broadcast %cst_22 : f32 to vector<4x32xf32>
    %107 = arith.subf %106, %100 : vector<4x32xf32>
    %108 = arith.mulf %107, %105 : vector<4x32xf32>
    %109 = arith.mulf %100, %86 : vector<4x32xf32>
    %110 = arith.addf %108, %109 : vector<4x32xf32>
    %111 = tpu.concatenate %110, %110 in 1 : vector<4x32xf32>, vector<4x32xf32> -> vector<4x64xf32>
    %112 = arith.mulf %111, %21 : vector<4x64xf32>
    %cst_23 = arith.constant dense<0.000000e+00> : vector<4x96xf32>
    %113 = tpu.matmul %112, %53, %cst_23 {dimension_numbers = #tpu.dot_dimension_numbers<[1], [0], [0], [1], [0, 0, 1, 1], [], []>} : vector<4x64xf32>, vector<64x96xf32>, vector<4x96xf32> -> vector<4x96xf32>
    %114 = arith.addf %113, %61 : vector<4x96xf32>
    %115 = vector.extract_strided_slice %37 {offsets = [0, 0], sizes = [4, 64], strides = [1, 1]} : vector<4x96xf32> to vector<4x64xf32>
    %116 = vector.extract_strided_slice %114 {offsets = [0, 0], sizes = [4, 64], strides = [1, 1]} : vector<4x96xf32> to vector<4x64xf32>
    %117 = arith.addf %115, %116 : vector<4x64xf32>
    %118 = arith.negf %117 : vector<4x64xf32>
    %119 = math.exp %118 : vector<4x64xf32>
    %cst_24 = arith.constant 1.000000e+00 : f32
    %120 = vector.broadcast %cst_24 : f32 to vector<4x64xf32>
    %121 = arith.addf %120, %119 : vector<4x64xf32>
    %122 = arith.divf %120, %121 : vector<4x64xf32>
    %123 = vector.extract_strided_slice %122 {offsets = [0, 0], sizes = [4, 32], strides = [1, 1]} : vector<4x64xf32> to vector<4x32xf32>
    %124 = vector.extract_strided_slice %122 {offsets = [0, 32], sizes = [4, 32], strides = [1, 1]} : vector<4x64xf32> to vector<4x32xf32>
    %125 = vector.extract_strided_slice %37 {offsets = [0, 64], sizes = [4, 32], strides = [1, 1]} : vector<4x96xf32> to vector<4x32xf32>
    %126 = vector.extract_strided_slice %114 {offsets = [0, 64], sizes = [4, 32], strides = [1, 1]} : vector<4x96xf32> to vector<4x32xf32>
    %127 = arith.mulf %123, %126 : vector<4x32xf32>
    %128 = arith.addf %125, %127 : vector<4x32xf32>
    %129 = math.tanh %128 : vector<4x32xf32>
    %cst_25 = arith.constant 1.000000e+00 : f32
    %130 = vector.broadcast %cst_25 : f32 to vector<4x32xf32>
    %131 = arith.subf %130, %124 : vector<4x32xf32>
    %132 = arith.mulf %131, %129 : vector<4x32xf32>
    %133 = arith.mulf %124, %110 : vector<4x32xf32>
    %134 = arith.addf %132, %133 : vector<4x32xf32>
    %135 = tpu.concatenate %134, %134 in 1 : vector<4x32xf32>, vector<4x32xf32> -> vector<4x64xf32>
    %136 = arith.mulf %135, %21 : vector<4x64xf32>
    %cst_26 = arith.constant dense<0.000000e+00> : vector<4x96xf32>
    %137 = tpu.matmul %136, %53, %cst_26 {dimension_numbers = #tpu.dot_dimension_numbers<[1], [0], [0], [1], [0, 0, 1, 1], [], []>} : vector<4x64xf32>, vector<64x96xf32>, vector<4x96xf32> -> vector<4x96xf32>
    %138 = arith.addf %137, %61 : vector<4x96xf32>
    %139 = vector.extract_strided_slice %40 {offsets = [0, 0], sizes = [4, 64], strides = [1, 1]} : vector<4x96xf32> to vector<4x64xf32>
    %140 = vector.extract_strided_slice %138 {offsets = [0, 0], sizes = [4, 64], strides = [1, 1]} : vector<4x96xf32> to vector<4x64xf32>
    %141 = arith.addf %139, %140 : vector<4x64xf32>
    %142 = arith.negf %141 : vector<4x64xf32>
    %143 = math.exp %142 : vector<4x64xf32>
    %cst_27 = arith.constant 1.000000e+00 : f32
    %144 = vector.broadcast %cst_27 : f32 to vector<4x64xf32>
    %145 = arith.addf %144, %143 : vector<4x64xf32>
    %146 = arith.divf %144, %145 : vector<4x64xf32>
    %147 = vector.extract_strided_slice %146 {offsets = [0, 0], sizes = [4, 32], strides = [1, 1]} : vector<4x64xf32> to vector<4x32xf32>
    %148 = vector.extract_strided_slice %146 {offsets = [0, 32], sizes = [4, 32], strides = [1, 1]} : vector<4x64xf32> to vector<4x32xf32>
    %149 = vector.extract_strided_slice %40 {offsets = [0, 64], sizes = [4, 32], strides = [1, 1]} : vector<4x96xf32> to vector<4x32xf32>
    %150 = vector.extract_strided_slice %138 {offsets = [0, 64], sizes = [4, 32], strides = [1, 1]} : vector<4x96xf32> to vector<4x32xf32>
    %151 = arith.mulf %147, %150 : vector<4x32xf32>
    %152 = arith.addf %149, %151 : vector<4x32xf32>
    %153 = math.tanh %152 : vector<4x32xf32>
    %cst_28 = arith.constant 1.000000e+00 : f32
    %154 = vector.broadcast %cst_28 : f32 to vector<4x32xf32>
    %155 = arith.subf %154, %148 : vector<4x32xf32>
    %156 = arith.mulf %155, %153 : vector<4x32xf32>
    %157 = arith.mulf %148, %134 : vector<4x32xf32>
    %158 = arith.addf %156, %157 : vector<4x32xf32>
    %159 = tpu.concatenate %158, %158 in 1 : vector<4x32xf32>, vector<4x32xf32> -> vector<4x64xf32>
    %160 = arith.mulf %159, %21 : vector<4x64xf32>
    %cst_29 = arith.constant dense<0.000000e+00> : vector<4x96xf32>
    %161 = tpu.matmul %160, %53, %cst_29 {dimension_numbers = #tpu.dot_dimension_numbers<[1], [0], [0], [1], [0, 0, 1, 1], [], []>} : vector<4x64xf32>, vector<64x96xf32>, vector<4x96xf32> -> vector<4x96xf32>
    %162 = arith.addf %161, %61 : vector<4x96xf32>
    %163 = vector.extract_strided_slice %43 {offsets = [0, 0], sizes = [4, 64], strides = [1, 1]} : vector<4x96xf32> to vector<4x64xf32>
    %164 = vector.extract_strided_slice %162 {offsets = [0, 0], sizes = [4, 64], strides = [1, 1]} : vector<4x96xf32> to vector<4x64xf32>
    %165 = arith.addf %163, %164 : vector<4x64xf32>
    %166 = arith.negf %165 : vector<4x64xf32>
    %167 = math.exp %166 : vector<4x64xf32>
    %cst_30 = arith.constant 1.000000e+00 : f32
    %168 = vector.broadcast %cst_30 : f32 to vector<4x64xf32>
    %169 = arith.addf %168, %167 : vector<4x64xf32>
    %170 = arith.divf %168, %169 : vector<4x64xf32>
    %171 = vector.extract_strided_slice %170 {offsets = [0, 0], sizes = [4, 32], strides = [1, 1]} : vector<4x64xf32> to vector<4x32xf32>
    %172 = vector.extract_strided_slice %170 {offsets = [0, 32], sizes = [4, 32], strides = [1, 1]} : vector<4x64xf32> to vector<4x32xf32>
    %173 = vector.extract_strided_slice %43 {offsets = [0, 64], sizes = [4, 32], strides = [1, 1]} : vector<4x96xf32> to vector<4x32xf32>
    %174 = vector.extract_strided_slice %162 {offsets = [0, 64], sizes = [4, 32], strides = [1, 1]} : vector<4x96xf32> to vector<4x32xf32>
    %175 = arith.mulf %171, %174 : vector<4x32xf32>
    %176 = arith.addf %173, %175 : vector<4x32xf32>
    %177 = math.tanh %176 : vector<4x32xf32>
    %cst_31 = arith.constant 1.000000e+00 : f32
    %178 = vector.broadcast %cst_31 : f32 to vector<4x32xf32>
    %179 = arith.subf %178, %172 : vector<4x32xf32>
    %180 = arith.mulf %179, %177 : vector<4x32xf32>
    %181 = arith.mulf %172, %158 : vector<4x32xf32>
    %182 = arith.addf %180, %181 : vector<4x32xf32>
    %183 = tpu.concatenate %182, %182 in 1 : vector<4x32xf32>, vector<4x32xf32> -> vector<4x64xf32>
    %184 = arith.mulf %183, %21 : vector<4x64xf32>
    %cst_32 = arith.constant dense<0.000000e+00> : vector<4x96xf32>
    %185 = tpu.matmul %184, %53, %cst_32 {dimension_numbers = #tpu.dot_dimension_numbers<[1], [0], [0], [1], [0, 0, 1, 1], [], []>} : vector<4x64xf32>, vector<64x96xf32>, vector<4x96xf32> -> vector<4x96xf32>
    %186 = arith.addf %185, %61 : vector<4x96xf32>
    %187 = vector.extract_strided_slice %46 {offsets = [0, 0], sizes = [4, 64], strides = [1, 1]} : vector<4x96xf32> to vector<4x64xf32>
    %188 = vector.extract_strided_slice %186 {offsets = [0, 0], sizes = [4, 64], strides = [1, 1]} : vector<4x96xf32> to vector<4x64xf32>
    %189 = arith.addf %187, %188 : vector<4x64xf32>
    %190 = arith.negf %189 : vector<4x64xf32>
    %191 = math.exp %190 : vector<4x64xf32>
    %cst_33 = arith.constant 1.000000e+00 : f32
    %192 = vector.broadcast %cst_33 : f32 to vector<4x64xf32>
    %193 = arith.addf %192, %191 : vector<4x64xf32>
    %194 = arith.divf %192, %193 : vector<4x64xf32>
    %195 = vector.extract_strided_slice %194 {offsets = [0, 0], sizes = [4, 32], strides = [1, 1]} : vector<4x64xf32> to vector<4x32xf32>
    %196 = vector.extract_strided_slice %194 {offsets = [0, 32], sizes = [4, 32], strides = [1, 1]} : vector<4x64xf32> to vector<4x32xf32>
    %197 = vector.extract_strided_slice %46 {offsets = [0, 64], sizes = [4, 32], strides = [1, 1]} : vector<4x96xf32> to vector<4x32xf32>
    %198 = vector.extract_strided_slice %186 {offsets = [0, 64], sizes = [4, 32], strides = [1, 1]} : vector<4x96xf32> to vector<4x32xf32>
    %199 = arith.mulf %195, %198 : vector<4x32xf32>
    %200 = arith.addf %197, %199 : vector<4x32xf32>
    %201 = math.tanh %200 : vector<4x32xf32>
    %cst_34 = arith.constant 1.000000e+00 : f32
    %202 = vector.broadcast %cst_34 : f32 to vector<4x32xf32>
    %203 = arith.subf %202, %196 : vector<4x32xf32>
    %204 = arith.mulf %203, %201 : vector<4x32xf32>
    %205 = arith.mulf %196, %182 : vector<4x32xf32>
    %206 = arith.addf %204, %205 : vector<4x32xf32>
    %207 = tpu.concatenate %206, %206 in 1 : vector<4x32xf32>, vector<4x32xf32> -> vector<4x64xf32>
    %208 = arith.mulf %207, %21 : vector<4x64xf32>
    %cst_35 = arith.constant dense<0.000000e+00> : vector<4x96xf32>
    %209 = tpu.matmul %208, %53, %cst_35 {dimension_numbers = #tpu.dot_dimension_numbers<[1], [0], [0], [1], [0, 0, 1, 1], [], []>} : vector<4x64xf32>, vector<64x96xf32>, vector<4x96xf32> -> vector<4x96xf32>
    %210 = arith.addf %209, %61 : vector<4x96xf32>
    %211 = vector.extract_strided_slice %49 {offsets = [0, 0], sizes = [4, 64], strides = [1, 1]} : vector<4x96xf32> to vector<4x64xf32>
    %212 = vector.extract_strided_slice %210 {offsets = [0, 0], sizes = [4, 64], strides = [1, 1]} : vector<4x96xf32> to vector<4x64xf32>
    %213 = arith.addf %211, %212 : vector<4x64xf32>
    %214 = arith.negf %213 : vector<4x64xf32>
    %215 = math.exp %214 : vector<4x64xf32>
    %cst_36 = arith.constant 1.000000e+00 : f32
    %216 = vector.broadcast %cst_36 : f32 to vector<4x64xf32>
    %217 = arith.addf %216, %215 : vector<4x64xf32>
    %218 = arith.divf %216, %217 : vector<4x64xf32>
    %219 = vector.extract_strided_slice %218 {offsets = [0, 0], sizes = [4, 32], strides = [1, 1]} : vector<4x64xf32> to vector<4x32xf32>
    %220 = vector.extract_strided_slice %218 {offsets = [0, 32], sizes = [4, 32], strides = [1, 1]} : vector<4x64xf32> to vector<4x32xf32>
    %221 = vector.extract_strided_slice %49 {offsets = [0, 64], sizes = [4, 32], strides = [1, 1]} : vector<4x96xf32> to vector<4x32xf32>
    %222 = vector.extract_strided_slice %210 {offsets = [0, 64], sizes = [4, 32], strides = [1, 1]} : vector<4x96xf32> to vector<4x32xf32>
    %223 = arith.mulf %219, %222 : vector<4x32xf32>
    %224 = arith.addf %221, %223 : vector<4x32xf32>
    %225 = math.tanh %224 : vector<4x32xf32>
    %cst_37 = arith.constant 1.000000e+00 : f32
    %226 = vector.broadcast %cst_37 : f32 to vector<4x32xf32>
    %227 = arith.subf %226, %220 : vector<4x32xf32>
    %228 = arith.mulf %227, %225 : vector<4x32xf32>
    %229 = arith.mulf %220, %206 : vector<4x32xf32>
    %230 = arith.addf %228, %229 : vector<4x32xf32>
    %231 = tpu.concatenate %230, %230 in 1 : vector<4x32xf32>, vector<4x32xf32> -> vector<4x64xf32>
    %232 = arith.mulf %231, %21 : vector<4x64xf32>
    %cst_38 = arith.constant dense<0.000000e+00> : vector<4x96xf32>
    %233 = tpu.matmul %232, %53, %cst_38 {dimension_numbers = #tpu.dot_dimension_numbers<[1], [0], [0], [1], [0, 0, 1, 1], [], []>} : vector<4x64xf32>, vector<64x96xf32>, vector<4x96xf32> -> vector<4x96xf32>
    %234 = arith.addf %233, %61 : vector<4x96xf32>
    %235 = vector.extract_strided_slice %52 {offsets = [0, 0], sizes = [4, 64], strides = [1, 1]} : vector<4x96xf32> to vector<4x64xf32>
    %236 = vector.extract_strided_slice %234 {offsets = [0, 0], sizes = [4, 64], strides = [1, 1]} : vector<4x96xf32> to vector<4x64xf32>
    %237 = arith.addf %235, %236 : vector<4x64xf32>
    %238 = arith.negf %237 : vector<4x64xf32>
    %239 = math.exp %238 : vector<4x64xf32>
    %cst_39 = arith.constant 1.000000e+00 : f32
    %240 = vector.broadcast %cst_39 : f32 to vector<4x64xf32>
    %241 = arith.addf %240, %239 : vector<4x64xf32>
    %242 = arith.divf %240, %241 : vector<4x64xf32>
    %243 = vector.extract_strided_slice %242 {offsets = [0, 0], sizes = [4, 32], strides = [1, 1]} : vector<4x64xf32> to vector<4x32xf32>
    %244 = vector.extract_strided_slice %242 {offsets = [0, 32], sizes = [4, 32], strides = [1, 1]} : vector<4x64xf32> to vector<4x32xf32>
    %245 = vector.extract_strided_slice %52 {offsets = [0, 64], sizes = [4, 32], strides = [1, 1]} : vector<4x96xf32> to vector<4x32xf32>
    %246 = vector.extract_strided_slice %234 {offsets = [0, 64], sizes = [4, 32], strides = [1, 1]} : vector<4x96xf32> to vector<4x32xf32>
    %247 = arith.mulf %243, %246 : vector<4x32xf32>
    %248 = arith.addf %245, %247 : vector<4x32xf32>
    %249 = math.tanh %248 : vector<4x32xf32>
    %cst_40 = arith.constant 1.000000e+00 : f32
    %250 = vector.broadcast %cst_40 : f32 to vector<4x32xf32>
    %251 = arith.subf %250, %244 : vector<4x32xf32>
    %252 = arith.mulf %251, %249 : vector<4x32xf32>
    %253 = arith.mulf %244, %230 : vector<4x32xf32>
    %254 = arith.addf %252, %253 : vector<4x32xf32>
    %255 = vector.extract_strided_slice %86 {offsets = [0, 0], sizes = [2, 32], strides = [1, 1]} : vector<4x32xf32> to vector<2x32xf32>
    %256 = vector.extract_strided_slice %110 {offsets = [0, 0], sizes = [2, 32], strides = [1, 1]} : vector<4x32xf32> to vector<2x32xf32>
    %257 = vector.extract_strided_slice %134 {offsets = [0, 0], sizes = [2, 32], strides = [1, 1]} : vector<4x32xf32> to vector<2x32xf32>
    %258 = vector.extract_strided_slice %158 {offsets = [0, 0], sizes = [2, 32], strides = [1, 1]} : vector<4x32xf32> to vector<2x32xf32>
    %259 = vector.extract_strided_slice %182 {offsets = [0, 0], sizes = [2, 32], strides = [1, 1]} : vector<4x32xf32> to vector<2x32xf32>
    %260 = vector.extract_strided_slice %206 {offsets = [0, 0], sizes = [2, 32], strides = [1, 1]} : vector<4x32xf32> to vector<2x32xf32>
    %261 = vector.extract_strided_slice %230 {offsets = [0, 0], sizes = [2, 32], strides = [1, 1]} : vector<4x32xf32> to vector<2x32xf32>
    %262 = vector.extract_strided_slice %254 {offsets = [0, 0], sizes = [2, 32], strides = [1, 1]} : vector<4x32xf32> to vector<2x32xf32>
    %263 = vector.extract_strided_slice %254 {offsets = [2, 0], sizes = [2, 32], strides = [1, 1]} : vector<4x32xf32> to vector<2x32xf32>
    %264 = vector.extract_strided_slice %230 {offsets = [2, 0], sizes = [2, 32], strides = [1, 1]} : vector<4x32xf32> to vector<2x32xf32>
    %265 = vector.extract_strided_slice %206 {offsets = [2, 0], sizes = [2, 32], strides = [1, 1]} : vector<4x32xf32> to vector<2x32xf32>
    %266 = vector.extract_strided_slice %182 {offsets = [2, 0], sizes = [2, 32], strides = [1, 1]} : vector<4x32xf32> to vector<2x32xf32>
    %267 = vector.extract_strided_slice %158 {offsets = [2, 0], sizes = [2, 32], strides = [1, 1]} : vector<4x32xf32> to vector<2x32xf32>
    %268 = vector.extract_strided_slice %134 {offsets = [2, 0], sizes = [2, 32], strides = [1, 1]} : vector<4x32xf32> to vector<2x32xf32>
    %269 = vector.extract_strided_slice %110 {offsets = [2, 0], sizes = [2, 32], strides = [1, 1]} : vector<4x32xf32> to vector<2x32xf32>
    %270 = vector.extract_strided_slice %86 {offsets = [2, 0], sizes = [2, 32], strides = [1, 1]} : vector<4x32xf32> to vector<2x32xf32>
    %271 = vector.extract_strided_slice %254 {offsets = [0, 0], sizes = [2, 32], strides = [1, 1]} : vector<4x32xf32> to vector<2x32xf32>
    %272 = vector.extract_strided_slice %254 {offsets = [2, 0], sizes = [2, 32], strides = [1, 1]} : vector<4x32xf32> to vector<2x32xf32>
    %273 = tpu.concatenate %255, %263 in 1 : vector<2x32xf32>, vector<2x32xf32> -> vector<2x64xf32>
    %274 = tpu.concatenate %256, %264 in 1 : vector<2x32xf32>, vector<2x32xf32> -> vector<2x64xf32>
    %275 = tpu.concatenate %257, %265 in 1 : vector<2x32xf32>, vector<2x32xf32> -> vector<2x64xf32>
    %276 = tpu.concatenate %258, %266 in 1 : vector<2x32xf32>, vector<2x32xf32> -> vector<2x64xf32>
    %277 = tpu.concatenate %259, %267 in 1 : vector<2x32xf32>, vector<2x32xf32> -> vector<2x64xf32>
    %278 = tpu.concatenate %260, %268 in 1 : vector<2x32xf32>, vector<2x32xf32> -> vector<2x64xf32>
    %279 = tpu.concatenate %261, %269 in 1 : vector<2x32xf32>, vector<2x32xf32> -> vector<2x64xf32>
    %280 = tpu.concatenate %262, %270 in 1 : vector<2x32xf32>, vector<2x32xf32> -> vector<2x64xf32>
    %281 = tpu.concatenate %273, %274, %275, %276, %277, %278, %279, %280 in 0 : vector<2x64xf32>, vector<2x64xf32>, vector<2x64xf32>, vector<2x64xf32>, vector<2x64xf32>, vector<2x64xf32>, vector<2x64xf32>, vector<2x64xf32> -> vector<16x64xf32>
    %c32 = arith.constant 32 : index
    %c0_41 = arith.constant 0 : index
    %282 = vector.load %arg2[%c32, %c0_41] : memref<96x192xf32, #tpu.memory_space<vmem>>, vector<64x192xf32>
    %c1 = arith.constant 1 : index
    %c0_42 = arith.constant 0 : index
    %283 = vector.load %arg4[%c1, %c0_42] : memref<2x192xf32, #tpu.memory_space<vmem>>, vector<1x192xf32>
    %cst_43 = arith.constant dense<0.000000e+00> : vector<16x192xf32>
    %284 = tpu.matmul %281, %282, %cst_43 {dimension_numbers = #tpu.dot_dimension_numbers<[1], [0], [0], [1], [0, 0, 1, 1], [], []>} : vector<16x64xf32>, vector<64x192xf32>, vector<16x192xf32> -> vector<16x192xf32>
    %285 = vector.broadcast %283 : vector<1x192xf32> to vector<16x192xf32>
    %286 = arith.addf %284, %285 : vector<16x192xf32>
    %287 = vector.extract_strided_slice %286 {offsets = [0, 0], sizes = [16, 96], strides = [1, 1]} : vector<16x192xf32> to vector<16x96xf32>
    %288 = vector.extract_strided_slice %286 {offsets = [0, 96], sizes = [16, 96], strides = [1, 1]} : vector<16x192xf32> to vector<16x96xf32>
    %289 = vector.extract_strided_slice %287 {offsets = [0, 0], sizes = [2, 96], strides = [1, 1]} : vector<16x96xf32> to vector<2x96xf32>
    %290 = vector.extract_strided_slice %288 {offsets = [14, 0], sizes = [2, 96], strides = [1, 1]} : vector<16x96xf32> to vector<2x96xf32>
    %291 = tpu.concatenate %289, %290 in 0 : vector<2x96xf32>, vector<2x96xf32> -> vector<4x96xf32>
    %292 = vector.extract_strided_slice %287 {offsets = [2, 0], sizes = [2, 96], strides = [1, 1]} : vector<16x96xf32> to vector<2x96xf32>
    %293 = vector.extract_strided_slice %288 {offsets = [12, 0], sizes = [2, 96], strides = [1, 1]} : vector<16x96xf32> to vector<2x96xf32>
    %294 = tpu.concatenate %292, %293 in 0 : vector<2x96xf32>, vector<2x96xf32> -> vector<4x96xf32>
    %295 = vector.extract_strided_slice %287 {offsets = [4, 0], sizes = [2, 96], strides = [1, 1]} : vector<16x96xf32> to vector<2x96xf32>
    %296 = vector.extract_strided_slice %288 {offsets = [10, 0], sizes = [2, 96], strides = [1, 1]} : vector<16x96xf32> to vector<2x96xf32>
    %297 = tpu.concatenate %295, %296 in 0 : vector<2x96xf32>, vector<2x96xf32> -> vector<4x96xf32>
    %298 = vector.extract_strided_slice %287 {offsets = [6, 0], sizes = [2, 96], strides = [1, 1]} : vector<16x96xf32> to vector<2x96xf32>
    %299 = vector.extract_strided_slice %288 {offsets = [8, 0], sizes = [2, 96], strides = [1, 1]} : vector<16x96xf32> to vector<2x96xf32>
    %300 = tpu.concatenate %298, %299 in 0 : vector<2x96xf32>, vector<2x96xf32> -> vector<4x96xf32>
    %301 = vector.extract_strided_slice %287 {offsets = [8, 0], sizes = [2, 96], strides = [1, 1]} : vector<16x96xf32> to vector<2x96xf32>
    %302 = vector.extract_strided_slice %288 {offsets = [6, 0], sizes = [2, 96], strides = [1, 1]} : vector<16x96xf32> to vector<2x96xf32>
    %303 = tpu.concatenate %301, %302 in 0 : vector<2x96xf32>, vector<2x96xf32> -> vector<4x96xf32>
    %304 = vector.extract_strided_slice %287 {offsets = [10, 0], sizes = [2, 96], strides = [1, 1]} : vector<16x96xf32> to vector<2x96xf32>
    %305 = vector.extract_strided_slice %288 {offsets = [4, 0], sizes = [2, 96], strides = [1, 1]} : vector<16x96xf32> to vector<2x96xf32>
    %306 = tpu.concatenate %304, %305 in 0 : vector<2x96xf32>, vector<2x96xf32> -> vector<4x96xf32>
    %307 = vector.extract_strided_slice %287 {offsets = [12, 0], sizes = [2, 96], strides = [1, 1]} : vector<16x96xf32> to vector<2x96xf32>
    %308 = vector.extract_strided_slice %288 {offsets = [2, 0], sizes = [2, 96], strides = [1, 1]} : vector<16x96xf32> to vector<2x96xf32>
    %309 = tpu.concatenate %307, %308 in 0 : vector<2x96xf32>, vector<2x96xf32> -> vector<4x96xf32>
    %310 = vector.extract_strided_slice %287 {offsets = [14, 0], sizes = [2, 96], strides = [1, 1]} : vector<16x96xf32> to vector<2x96xf32>
    %311 = vector.extract_strided_slice %288 {offsets = [0, 0], sizes = [2, 96], strides = [1, 1]} : vector<16x96xf32> to vector<2x96xf32>
    %312 = tpu.concatenate %310, %311 in 0 : vector<2x96xf32>, vector<2x96xf32> -> vector<4x96xf32>
    %c64 = arith.constant 64 : index
    %c0_44 = arith.constant 0 : index
    %313 = vector.load %arg3[%c64, %c0_44] : memref<128x96xf32, #tpu.memory_space<vmem>>, vector<64x96xf32>
    %c1_45 = arith.constant 1 : index
    %c0_46 = arith.constant 0 : index
    %314 = vector.load %arg5[%c1_45, %c0_46] : memref<2x192xf32, #tpu.memory_space<vmem>>, vector<1x192xf32>
    %315 = vector.extract_strided_slice %314 {offsets = [0, 0], sizes = [1, 96], strides = [1, 1]} : vector<1x192xf32> to vector<1x96xf32>
    %316 = vector.shape_cast %315 : vector<1x96xf32> to vector<1x96xf32>
    %317 = vector.broadcast %316 : vector<1x96xf32> to vector<2x96xf32>
    %318 = vector.extract_strided_slice %314 {offsets = [0, 96], sizes = [1, 96], strides = [1, 1]} : vector<1x192xf32> to vector<1x96xf32>
    %319 = vector.shape_cast %318 : vector<1x96xf32> to vector<1x96xf32>
    %320 = vector.broadcast %319 : vector<1x96xf32> to vector<2x96xf32>
    %321 = tpu.concatenate %317, %320 in 0 : vector<2x96xf32>, vector<2x96xf32> -> vector<4x96xf32>
    %cst_47 = arith.constant 0.000000e+00 : f32
    %322 = vector.broadcast %cst_47 : f32 to vector<4x32xf32>
    %323 = tpu.concatenate %322, %322 in 1 : vector<4x32xf32>, vector<4x32xf32> -> vector<4x64xf32>
    %324 = arith.mulf %323, %21 : vector<4x64xf32>
    %cst_48 = arith.constant dense<0.000000e+00> : vector<4x96xf32>
    %325 = tpu.matmul %324, %313, %cst_48 {dimension_numbers = #tpu.dot_dimension_numbers<[1], [0], [0], [1], [0, 0, 1, 1], [], []>} : vector<4x64xf32>, vector<64x96xf32>, vector<4x96xf32> -> vector<4x96xf32>
    %326 = arith.addf %325, %321 : vector<4x96xf32>
    %327 = vector.extract_strided_slice %291 {offsets = [0, 0], sizes = [4, 64], strides = [1, 1]} : vector<4x96xf32> to vector<4x64xf32>
    %328 = vector.extract_strided_slice %326 {offsets = [0, 0], sizes = [4, 64], strides = [1, 1]} : vector<4x96xf32> to vector<4x64xf32>
    %329 = arith.addf %327, %328 : vector<4x64xf32>
    %330 = arith.negf %329 : vector<4x64xf32>
    %331 = math.exp %330 : vector<4x64xf32>
    %cst_49 = arith.constant 1.000000e+00 : f32
    %332 = vector.broadcast %cst_49 : f32 to vector<4x64xf32>
    %333 = arith.addf %332, %331 : vector<4x64xf32>
    %334 = arith.divf %332, %333 : vector<4x64xf32>
    %335 = vector.extract_strided_slice %334 {offsets = [0, 0], sizes = [4, 32], strides = [1, 1]} : vector<4x64xf32> to vector<4x32xf32>
    %336 = vector.extract_strided_slice %334 {offsets = [0, 32], sizes = [4, 32], strides = [1, 1]} : vector<4x64xf32> to vector<4x32xf32>
    %337 = vector.extract_strided_slice %291 {offsets = [0, 64], sizes = [4, 32], strides = [1, 1]} : vector<4x96xf32> to vector<4x32xf32>
    %338 = vector.extract_strided_slice %326 {offsets = [0, 64], sizes = [4, 32], strides = [1, 1]} : vector<4x96xf32> to vector<4x32xf32>
    %339 = arith.mulf %335, %338 : vector<4x32xf32>
    %340 = arith.addf %337, %339 : vector<4x32xf32>
    %341 = math.tanh %340 : vector<4x32xf32>
    %cst_50 = arith.constant 1.000000e+00 : f32
    %342 = vector.broadcast %cst_50 : f32 to vector<4x32xf32>
    %343 = arith.subf %342, %336 : vector<4x32xf32>
    %344 = arith.mulf %343, %341 : vector<4x32xf32>
    %345 = arith.mulf %336, %322 : vector<4x32xf32>
    %346 = arith.addf %344, %345 : vector<4x32xf32>
    %347 = tpu.concatenate %346, %346 in 1 : vector<4x32xf32>, vector<4x32xf32> -> vector<4x64xf32>
    %348 = arith.mulf %347, %21 : vector<4x64xf32>
    %cst_51 = arith.constant dense<0.000000e+00> : vector<4x96xf32>
    %349 = tpu.matmul %348, %313, %cst_51 {dimension_numbers = #tpu.dot_dimension_numbers<[1], [0], [0], [1], [0, 0, 1, 1], [], []>} : vector<4x64xf32>, vector<64x96xf32>, vector<4x96xf32> -> vector<4x96xf32>
    %350 = arith.addf %349, %321 : vector<4x96xf32>
    %351 = vector.extract_strided_slice %294 {offsets = [0, 0], sizes = [4, 64], strides = [1, 1]} : vector<4x96xf32> to vector<4x64xf32>
    %352 = vector.extract_strided_slice %350 {offsets = [0, 0], sizes = [4, 64], strides = [1, 1]} : vector<4x96xf32> to vector<4x64xf32>
    %353 = arith.addf %351, %352 : vector<4x64xf32>
    %354 = arith.negf %353 : vector<4x64xf32>
    %355 = math.exp %354 : vector<4x64xf32>
    %cst_52 = arith.constant 1.000000e+00 : f32
    %356 = vector.broadcast %cst_52 : f32 to vector<4x64xf32>
    %357 = arith.addf %356, %355 : vector<4x64xf32>
    %358 = arith.divf %356, %357 : vector<4x64xf32>
    %359 = vector.extract_strided_slice %358 {offsets = [0, 0], sizes = [4, 32], strides = [1, 1]} : vector<4x64xf32> to vector<4x32xf32>
    %360 = vector.extract_strided_slice %358 {offsets = [0, 32], sizes = [4, 32], strides = [1, 1]} : vector<4x64xf32> to vector<4x32xf32>
    %361 = vector.extract_strided_slice %294 {offsets = [0, 64], sizes = [4, 32], strides = [1, 1]} : vector<4x96xf32> to vector<4x32xf32>
    %362 = vector.extract_strided_slice %350 {offsets = [0, 64], sizes = [4, 32], strides = [1, 1]} : vector<4x96xf32> to vector<4x32xf32>
    %363 = arith.mulf %359, %362 : vector<4x32xf32>
    %364 = arith.addf %361, %363 : vector<4x32xf32>
    %365 = math.tanh %364 : vector<4x32xf32>
    %cst_53 = arith.constant 1.000000e+00 : f32
    %366 = vector.broadcast %cst_53 : f32 to vector<4x32xf32>
    %367 = arith.subf %366, %360 : vector<4x32xf32>
    %368 = arith.mulf %367, %365 : vector<4x32xf32>
    %369 = arith.mulf %360, %346 : vector<4x32xf32>
    %370 = arith.addf %368, %369 : vector<4x32xf32>
    %371 = tpu.concatenate %370, %370 in 1 : vector<4x32xf32>, vector<4x32xf32> -> vector<4x64xf32>
    %372 = arith.mulf %371, %21 : vector<4x64xf32>
    %cst_54 = arith.constant dense<0.000000e+00> : vector<4x96xf32>
    %373 = tpu.matmul %372, %313, %cst_54 {dimension_numbers = #tpu.dot_dimension_numbers<[1], [0], [0], [1], [0, 0, 1, 1], [], []>} : vector<4x64xf32>, vector<64x96xf32>, vector<4x96xf32> -> vector<4x96xf32>
    %374 = arith.addf %373, %321 : vector<4x96xf32>
    %375 = vector.extract_strided_slice %297 {offsets = [0, 0], sizes = [4, 64], strides = [1, 1]} : vector<4x96xf32> to vector<4x64xf32>
    %376 = vector.extract_strided_slice %374 {offsets = [0, 0], sizes = [4, 64], strides = [1, 1]} : vector<4x96xf32> to vector<4x64xf32>
    %377 = arith.addf %375, %376 : vector<4x64xf32>
    %378 = arith.negf %377 : vector<4x64xf32>
    %379 = math.exp %378 : vector<4x64xf32>
    %cst_55 = arith.constant 1.000000e+00 : f32
    %380 = vector.broadcast %cst_55 : f32 to vector<4x64xf32>
    %381 = arith.addf %380, %379 : vector<4x64xf32>
    %382 = arith.divf %380, %381 : vector<4x64xf32>
    %383 = vector.extract_strided_slice %382 {offsets = [0, 0], sizes = [4, 32], strides = [1, 1]} : vector<4x64xf32> to vector<4x32xf32>
    %384 = vector.extract_strided_slice %382 {offsets = [0, 32], sizes = [4, 32], strides = [1, 1]} : vector<4x64xf32> to vector<4x32xf32>
    %385 = vector.extract_strided_slice %297 {offsets = [0, 64], sizes = [4, 32], strides = [1, 1]} : vector<4x96xf32> to vector<4x32xf32>
    %386 = vector.extract_strided_slice %374 {offsets = [0, 64], sizes = [4, 32], strides = [1, 1]} : vector<4x96xf32> to vector<4x32xf32>
    %387 = arith.mulf %383, %386 : vector<4x32xf32>
    %388 = arith.addf %385, %387 : vector<4x32xf32>
    %389 = math.tanh %388 : vector<4x32xf32>
    %cst_56 = arith.constant 1.000000e+00 : f32
    %390 = vector.broadcast %cst_56 : f32 to vector<4x32xf32>
    %391 = arith.subf %390, %384 : vector<4x32xf32>
    %392 = arith.mulf %391, %389 : vector<4x32xf32>
    %393 = arith.mulf %384, %370 : vector<4x32xf32>
    %394 = arith.addf %392, %393 : vector<4x32xf32>
    %395 = tpu.concatenate %394, %394 in 1 : vector<4x32xf32>, vector<4x32xf32> -> vector<4x64xf32>
    %396 = arith.mulf %395, %21 : vector<4x64xf32>
    %cst_57 = arith.constant dense<0.000000e+00> : vector<4x96xf32>
    %397 = tpu.matmul %396, %313, %cst_57 {dimension_numbers = #tpu.dot_dimension_numbers<[1], [0], [0], [1], [0, 0, 1, 1], [], []>} : vector<4x64xf32>, vector<64x96xf32>, vector<4x96xf32> -> vector<4x96xf32>
    %398 = arith.addf %397, %321 : vector<4x96xf32>
    %399 = vector.extract_strided_slice %300 {offsets = [0, 0], sizes = [4, 64], strides = [1, 1]} : vector<4x96xf32> to vector<4x64xf32>
    %400 = vector.extract_strided_slice %398 {offsets = [0, 0], sizes = [4, 64], strides = [1, 1]} : vector<4x96xf32> to vector<4x64xf32>
    %401 = arith.addf %399, %400 : vector<4x64xf32>
    %402 = arith.negf %401 : vector<4x64xf32>
    %403 = math.exp %402 : vector<4x64xf32>
    %cst_58 = arith.constant 1.000000e+00 : f32
    %404 = vector.broadcast %cst_58 : f32 to vector<4x64xf32>
    %405 = arith.addf %404, %403 : vector<4x64xf32>
    %406 = arith.divf %404, %405 : vector<4x64xf32>
    %407 = vector.extract_strided_slice %406 {offsets = [0, 0], sizes = [4, 32], strides = [1, 1]} : vector<4x64xf32> to vector<4x32xf32>
    %408 = vector.extract_strided_slice %406 {offsets = [0, 32], sizes = [4, 32], strides = [1, 1]} : vector<4x64xf32> to vector<4x32xf32>
    %409 = vector.extract_strided_slice %300 {offsets = [0, 64], sizes = [4, 32], strides = [1, 1]} : vector<4x96xf32> to vector<4x32xf32>
    %410 = vector.extract_strided_slice %398 {offsets = [0, 64], sizes = [4, 32], strides = [1, 1]} : vector<4x96xf32> to vector<4x32xf32>
    %411 = arith.mulf %407, %410 : vector<4x32xf32>
    %412 = arith.addf %409, %411 : vector<4x32xf32>
    %413 = math.tanh %412 : vector<4x32xf32>
    %cst_59 = arith.constant 1.000000e+00 : f32
    %414 = vector.broadcast %cst_59 : f32 to vector<4x32xf32>
    %415 = arith.subf %414, %408 : vector<4x32xf32>
    %416 = arith.mulf %415, %413 : vector<4x32xf32>
    %417 = arith.mulf %408, %394 : vector<4x32xf32>
    %418 = arith.addf %416, %417 : vector<4x32xf32>
    %419 = tpu.concatenate %418, %418 in 1 : vector<4x32xf32>, vector<4x32xf32> -> vector<4x64xf32>
    %420 = arith.mulf %419, %21 : vector<4x64xf32>
    %cst_60 = arith.constant dense<0.000000e+00> : vector<4x96xf32>
    %421 = tpu.matmul %420, %313, %cst_60 {dimension_numbers = #tpu.dot_dimension_numbers<[1], [0], [0], [1], [0, 0, 1, 1], [], []>} : vector<4x64xf32>, vector<64x96xf32>, vector<4x96xf32> -> vector<4x96xf32>
    %422 = arith.addf %421, %321 : vector<4x96xf32>
    %423 = vector.extract_strided_slice %303 {offsets = [0, 0], sizes = [4, 64], strides = [1, 1]} : vector<4x96xf32> to vector<4x64xf32>
    %424 = vector.extract_strided_slice %422 {offsets = [0, 0], sizes = [4, 64], strides = [1, 1]} : vector<4x96xf32> to vector<4x64xf32>
    %425 = arith.addf %423, %424 : vector<4x64xf32>
    %426 = arith.negf %425 : vector<4x64xf32>
    %427 = math.exp %426 : vector<4x64xf32>
    %cst_61 = arith.constant 1.000000e+00 : f32
    %428 = vector.broadcast %cst_61 : f32 to vector<4x64xf32>
    %429 = arith.addf %428, %427 : vector<4x64xf32>
    %430 = arith.divf %428, %429 : vector<4x64xf32>
    %431 = vector.extract_strided_slice %430 {offsets = [0, 0], sizes = [4, 32], strides = [1, 1]} : vector<4x64xf32> to vector<4x32xf32>
    %432 = vector.extract_strided_slice %430 {offsets = [0, 32], sizes = [4, 32], strides = [1, 1]} : vector<4x64xf32> to vector<4x32xf32>
    %433 = vector.extract_strided_slice %303 {offsets = [0, 64], sizes = [4, 32], strides = [1, 1]} : vector<4x96xf32> to vector<4x32xf32>
    %434 = vector.extract_strided_slice %422 {offsets = [0, 64], sizes = [4, 32], strides = [1, 1]} : vector<4x96xf32> to vector<4x32xf32>
    %435 = arith.mulf %431, %434 : vector<4x32xf32>
    %436 = arith.addf %433, %435 : vector<4x32xf32>
    %437 = math.tanh %436 : vector<4x32xf32>
    %cst_62 = arith.constant 1.000000e+00 : f32
    %438 = vector.broadcast %cst_62 : f32 to vector<4x32xf32>
    %439 = arith.subf %438, %432 : vector<4x32xf32>
    %440 = arith.mulf %439, %437 : vector<4x32xf32>
    %441 = arith.mulf %432, %418 : vector<4x32xf32>
    %442 = arith.addf %440, %441 : vector<4x32xf32>
    %443 = tpu.concatenate %442, %442 in 1 : vector<4x32xf32>, vector<4x32xf32> -> vector<4x64xf32>
    %444 = arith.mulf %443, %21 : vector<4x64xf32>
    %cst_63 = arith.constant dense<0.000000e+00> : vector<4x96xf32>
    %445 = tpu.matmul %444, %313, %cst_63 {dimension_numbers = #tpu.dot_dimension_numbers<[1], [0], [0], [1], [0, 0, 1, 1], [], []>} : vector<4x64xf32>, vector<64x96xf32>, vector<4x96xf32> -> vector<4x96xf32>
    %446 = arith.addf %445, %321 : vector<4x96xf32>
    %447 = vector.extract_strided_slice %306 {offsets = [0, 0], sizes = [4, 64], strides = [1, 1]} : vector<4x96xf32> to vector<4x64xf32>
    %448 = vector.extract_strided_slice %446 {offsets = [0, 0], sizes = [4, 64], strides = [1, 1]} : vector<4x96xf32> to vector<4x64xf32>
    %449 = arith.addf %447, %448 : vector<4x64xf32>
    %450 = arith.negf %449 : vector<4x64xf32>
    %451 = math.exp %450 : vector<4x64xf32>
    %cst_64 = arith.constant 1.000000e+00 : f32
    %452 = vector.broadcast %cst_64 : f32 to vector<4x64xf32>
    %453 = arith.addf %452, %451 : vector<4x64xf32>
    %454 = arith.divf %452, %453 : vector<4x64xf32>
    %455 = vector.extract_strided_slice %454 {offsets = [0, 0], sizes = [4, 32], strides = [1, 1]} : vector<4x64xf32> to vector<4x32xf32>
    %456 = vector.extract_strided_slice %454 {offsets = [0, 32], sizes = [4, 32], strides = [1, 1]} : vector<4x64xf32> to vector<4x32xf32>
    %457 = vector.extract_strided_slice %306 {offsets = [0, 64], sizes = [4, 32], strides = [1, 1]} : vector<4x96xf32> to vector<4x32xf32>
    %458 = vector.extract_strided_slice %446 {offsets = [0, 64], sizes = [4, 32], strides = [1, 1]} : vector<4x96xf32> to vector<4x32xf32>
    %459 = arith.mulf %455, %458 : vector<4x32xf32>
    %460 = arith.addf %457, %459 : vector<4x32xf32>
    %461 = math.tanh %460 : vector<4x32xf32>
    %cst_65 = arith.constant 1.000000e+00 : f32
    %462 = vector.broadcast %cst_65 : f32 to vector<4x32xf32>
    %463 = arith.subf %462, %456 : vector<4x32xf32>
    %464 = arith.mulf %463, %461 : vector<4x32xf32>
    %465 = arith.mulf %456, %442 : vector<4x32xf32>
    %466 = arith.addf %464, %465 : vector<4x32xf32>
    %467 = tpu.concatenate %466, %466 in 1 : vector<4x32xf32>, vector<4x32xf32> -> vector<4x64xf32>
    %468 = arith.mulf %467, %21 : vector<4x64xf32>
    %cst_66 = arith.constant dense<0.000000e+00> : vector<4x96xf32>
    %469 = tpu.matmul %468, %313, %cst_66 {dimension_numbers = #tpu.dot_dimension_numbers<[1], [0], [0], [1], [0, 0, 1, 1], [], []>} : vector<4x64xf32>, vector<64x96xf32>, vector<4x96xf32> -> vector<4x96xf32>
    %470 = arith.addf %469, %321 : vector<4x96xf32>
    %471 = vector.extract_strided_slice %309 {offsets = [0, 0], sizes = [4, 64], strides = [1, 1]} : vector<4x96xf32> to vector<4x64xf32>
    %472 = vector.extract_strided_slice %470 {offsets = [0, 0], sizes = [4, 64], strides = [1, 1]} : vector<4x96xf32> to vector<4x64xf32>
    %473 = arith.addf %471, %472 : vector<4x64xf32>
    %474 = arith.negf %473 : vector<4x64xf32>
    %475 = math.exp %474 : vector<4x64xf32>
    %cst_67 = arith.constant 1.000000e+00 : f32
    %476 = vector.broadcast %cst_67 : f32 to vector<4x64xf32>
    %477 = arith.addf %476, %475 : vector<4x64xf32>
    %478 = arith.divf %476, %477 : vector<4x64xf32>
    %479 = vector.extract_strided_slice %478 {offsets = [0, 0], sizes = [4, 32], strides = [1, 1]} : vector<4x64xf32> to vector<4x32xf32>
    %480 = vector.extract_strided_slice %478 {offsets = [0, 32], sizes = [4, 32], strides = [1, 1]} : vector<4x64xf32> to vector<4x32xf32>
    %481 = vector.extract_strided_slice %309 {offsets = [0, 64], sizes = [4, 32], strides = [1, 1]} : vector<4x96xf32> to vector<4x32xf32>
    %482 = vector.extract_strided_slice %470 {offsets = [0, 64], sizes = [4, 32], strides = [1, 1]} : vector<4x96xf32> to vector<4x32xf32>
    %483 = arith.mulf %479, %482 : vector<4x32xf32>
    %484 = arith.addf %481, %483 : vector<4x32xf32>
    %485 = math.tanh %484 : vector<4x32xf32>
    %cst_68 = arith.constant 1.000000e+00 : f32
    %486 = vector.broadcast %cst_68 : f32 to vector<4x32xf32>
    %487 = arith.subf %486, %480 : vector<4x32xf32>
    %488 = arith.mulf %487, %485 : vector<4x32xf32>
    %489 = arith.mulf %480, %466 : vector<4x32xf32>
    %490 = arith.addf %488, %489 : vector<4x32xf32>
    %491 = tpu.concatenate %490, %490 in 1 : vector<4x32xf32>, vector<4x32xf32> -> vector<4x64xf32>
    %492 = arith.mulf %491, %21 : vector<4x64xf32>
    %cst_69 = arith.constant dense<0.000000e+00> : vector<4x96xf32>
    %493 = tpu.matmul %492, %313, %cst_69 {dimension_numbers = #tpu.dot_dimension_numbers<[1], [0], [0], [1], [0, 0, 1, 1], [], []>} : vector<4x64xf32>, vector<64x96xf32>, vector<4x96xf32> -> vector<4x96xf32>
    %494 = arith.addf %493, %321 : vector<4x96xf32>
    %495 = vector.extract_strided_slice %312 {offsets = [0, 0], sizes = [4, 64], strides = [1, 1]} : vector<4x96xf32> to vector<4x64xf32>
    %496 = vector.extract_strided_slice %494 {offsets = [0, 0], sizes = [4, 64], strides = [1, 1]} : vector<4x96xf32> to vector<4x64xf32>
    %497 = arith.addf %495, %496 : vector<4x64xf32>
    %498 = arith.negf %497 : vector<4x64xf32>
    %499 = math.exp %498 : vector<4x64xf32>
    %cst_70 = arith.constant 1.000000e+00 : f32
    %500 = vector.broadcast %cst_70 : f32 to vector<4x64xf32>
    %501 = arith.addf %500, %499 : vector<4x64xf32>
    %502 = arith.divf %500, %501 : vector<4x64xf32>
    %503 = vector.extract_strided_slice %502 {offsets = [0, 0], sizes = [4, 32], strides = [1, 1]} : vector<4x64xf32> to vector<4x32xf32>
    %504 = vector.extract_strided_slice %502 {offsets = [0, 32], sizes = [4, 32], strides = [1, 1]} : vector<4x64xf32> to vector<4x32xf32>
    %505 = vector.extract_strided_slice %312 {offsets = [0, 64], sizes = [4, 32], strides = [1, 1]} : vector<4x96xf32> to vector<4x32xf32>
    %506 = vector.extract_strided_slice %494 {offsets = [0, 64], sizes = [4, 32], strides = [1, 1]} : vector<4x96xf32> to vector<4x32xf32>
    %507 = arith.mulf %503, %506 : vector<4x32xf32>
    %508 = arith.addf %505, %507 : vector<4x32xf32>
    %509 = math.tanh %508 : vector<4x32xf32>
    %cst_71 = arith.constant 1.000000e+00 : f32
    %510 = vector.broadcast %cst_71 : f32 to vector<4x32xf32>
    %511 = arith.subf %510, %504 : vector<4x32xf32>
    %512 = arith.mulf %511, %509 : vector<4x32xf32>
    %513 = arith.mulf %504, %490 : vector<4x32xf32>
    %514 = arith.addf %512, %513 : vector<4x32xf32>
    %515 = vector.extract_strided_slice %346 {offsets = [0, 0], sizes = [2, 32], strides = [1, 1]} : vector<4x32xf32> to vector<2x32xf32>
    %516 = vector.extract_strided_slice %370 {offsets = [0, 0], sizes = [2, 32], strides = [1, 1]} : vector<4x32xf32> to vector<2x32xf32>
    %517 = vector.extract_strided_slice %394 {offsets = [0, 0], sizes = [2, 32], strides = [1, 1]} : vector<4x32xf32> to vector<2x32xf32>
    %518 = vector.extract_strided_slice %418 {offsets = [0, 0], sizes = [2, 32], strides = [1, 1]} : vector<4x32xf32> to vector<2x32xf32>
    %519 = vector.extract_strided_slice %442 {offsets = [0, 0], sizes = [2, 32], strides = [1, 1]} : vector<4x32xf32> to vector<2x32xf32>
    %520 = vector.extract_strided_slice %466 {offsets = [0, 0], sizes = [2, 32], strides = [1, 1]} : vector<4x32xf32> to vector<2x32xf32>
    %521 = vector.extract_strided_slice %490 {offsets = [0, 0], sizes = [2, 32], strides = [1, 1]} : vector<4x32xf32> to vector<2x32xf32>
    %522 = vector.extract_strided_slice %514 {offsets = [0, 0], sizes = [2, 32], strides = [1, 1]} : vector<4x32xf32> to vector<2x32xf32>
    %523 = vector.extract_strided_slice %514 {offsets = [2, 0], sizes = [2, 32], strides = [1, 1]} : vector<4x32xf32> to vector<2x32xf32>
    %524 = vector.extract_strided_slice %490 {offsets = [2, 0], sizes = [2, 32], strides = [1, 1]} : vector<4x32xf32> to vector<2x32xf32>
    %525 = vector.extract_strided_slice %466 {offsets = [2, 0], sizes = [2, 32], strides = [1, 1]} : vector<4x32xf32> to vector<2x32xf32>
    %526 = vector.extract_strided_slice %442 {offsets = [2, 0], sizes = [2, 32], strides = [1, 1]} : vector<4x32xf32> to vector<2x32xf32>
    %527 = vector.extract_strided_slice %418 {offsets = [2, 0], sizes = [2, 32], strides = [1, 1]} : vector<4x32xf32> to vector<2x32xf32>
    %528 = vector.extract_strided_slice %394 {offsets = [2, 0], sizes = [2, 32], strides = [1, 1]} : vector<4x32xf32> to vector<2x32xf32>
    %529 = vector.extract_strided_slice %370 {offsets = [2, 0], sizes = [2, 32], strides = [1, 1]} : vector<4x32xf32> to vector<2x32xf32>
    %530 = vector.extract_strided_slice %346 {offsets = [2, 0], sizes = [2, 32], strides = [1, 1]} : vector<4x32xf32> to vector<2x32xf32>
    %531 = vector.extract_strided_slice %514 {offsets = [0, 0], sizes = [2, 32], strides = [1, 1]} : vector<4x32xf32> to vector<2x32xf32>
    %532 = vector.extract_strided_slice %514 {offsets = [2, 0], sizes = [2, 32], strides = [1, 1]} : vector<4x32xf32> to vector<2x32xf32>
    %533 = vector.extract_strided_slice %515 {offsets = [0, 0], sizes = [1, 32], strides = [1, 1]} : vector<2x32xf32> to vector<1x32xf32>
    %534 = vector.extract_strided_slice %523 {offsets = [0, 0], sizes = [1, 32], strides = [1, 1]} : vector<2x32xf32> to vector<1x32xf32>
    %535 = vector.extract_strided_slice %515 {offsets = [1, 0], sizes = [1, 32], strides = [1, 1]} : vector<2x32xf32> to vector<1x32xf32>
    %536 = vector.extract_strided_slice %523 {offsets = [1, 0], sizes = [1, 32], strides = [1, 1]} : vector<2x32xf32> to vector<1x32xf32>
    %537 = tpu.concatenate %533, %534, %535, %536 in 1 : vector<1x32xf32>, vector<1x32xf32>, vector<1x32xf32>, vector<1x32xf32> -> vector<1x128xf32>
    %538 = vector.extract_strided_slice %516 {offsets = [0, 0], sizes = [1, 32], strides = [1, 1]} : vector<2x32xf32> to vector<1x32xf32>
    %539 = vector.extract_strided_slice %524 {offsets = [0, 0], sizes = [1, 32], strides = [1, 1]} : vector<2x32xf32> to vector<1x32xf32>
    %540 = vector.extract_strided_slice %516 {offsets = [1, 0], sizes = [1, 32], strides = [1, 1]} : vector<2x32xf32> to vector<1x32xf32>
    %541 = vector.extract_strided_slice %524 {offsets = [1, 0], sizes = [1, 32], strides = [1, 1]} : vector<2x32xf32> to vector<1x32xf32>
    %542 = tpu.concatenate %538, %539, %540, %541 in 1 : vector<1x32xf32>, vector<1x32xf32>, vector<1x32xf32>, vector<1x32xf32> -> vector<1x128xf32>
    %543 = vector.extract_strided_slice %517 {offsets = [0, 0], sizes = [1, 32], strides = [1, 1]} : vector<2x32xf32> to vector<1x32xf32>
    %544 = vector.extract_strided_slice %525 {offsets = [0, 0], sizes = [1, 32], strides = [1, 1]} : vector<2x32xf32> to vector<1x32xf32>
    %545 = vector.extract_strided_slice %517 {offsets = [1, 0], sizes = [1, 32], strides = [1, 1]} : vector<2x32xf32> to vector<1x32xf32>
    %546 = vector.extract_strided_slice %525 {offsets = [1, 0], sizes = [1, 32], strides = [1, 1]} : vector<2x32xf32> to vector<1x32xf32>
    %547 = tpu.concatenate %543, %544, %545, %546 in 1 : vector<1x32xf32>, vector<1x32xf32>, vector<1x32xf32>, vector<1x32xf32> -> vector<1x128xf32>
    %548 = vector.extract_strided_slice %518 {offsets = [0, 0], sizes = [1, 32], strides = [1, 1]} : vector<2x32xf32> to vector<1x32xf32>
    %549 = vector.extract_strided_slice %526 {offsets = [0, 0], sizes = [1, 32], strides = [1, 1]} : vector<2x32xf32> to vector<1x32xf32>
    %550 = vector.extract_strided_slice %518 {offsets = [1, 0], sizes = [1, 32], strides = [1, 1]} : vector<2x32xf32> to vector<1x32xf32>
    %551 = vector.extract_strided_slice %526 {offsets = [1, 0], sizes = [1, 32], strides = [1, 1]} : vector<2x32xf32> to vector<1x32xf32>
    %552 = tpu.concatenate %548, %549, %550, %551 in 1 : vector<1x32xf32>, vector<1x32xf32>, vector<1x32xf32>, vector<1x32xf32> -> vector<1x128xf32>
    %553 = vector.extract_strided_slice %519 {offsets = [0, 0], sizes = [1, 32], strides = [1, 1]} : vector<2x32xf32> to vector<1x32xf32>
    %554 = vector.extract_strided_slice %527 {offsets = [0, 0], sizes = [1, 32], strides = [1, 1]} : vector<2x32xf32> to vector<1x32xf32>
    %555 = vector.extract_strided_slice %519 {offsets = [1, 0], sizes = [1, 32], strides = [1, 1]} : vector<2x32xf32> to vector<1x32xf32>
    %556 = vector.extract_strided_slice %527 {offsets = [1, 0], sizes = [1, 32], strides = [1, 1]} : vector<2x32xf32> to vector<1x32xf32>
    %557 = tpu.concatenate %553, %554, %555, %556 in 1 : vector<1x32xf32>, vector<1x32xf32>, vector<1x32xf32>, vector<1x32xf32> -> vector<1x128xf32>
    %558 = vector.extract_strided_slice %520 {offsets = [0, 0], sizes = [1, 32], strides = [1, 1]} : vector<2x32xf32> to vector<1x32xf32>
    %559 = vector.extract_strided_slice %528 {offsets = [0, 0], sizes = [1, 32], strides = [1, 1]} : vector<2x32xf32> to vector<1x32xf32>
    %560 = vector.extract_strided_slice %520 {offsets = [1, 0], sizes = [1, 32], strides = [1, 1]} : vector<2x32xf32> to vector<1x32xf32>
    %561 = vector.extract_strided_slice %528 {offsets = [1, 0], sizes = [1, 32], strides = [1, 1]} : vector<2x32xf32> to vector<1x32xf32>
    %562 = tpu.concatenate %558, %559, %560, %561 in 1 : vector<1x32xf32>, vector<1x32xf32>, vector<1x32xf32>, vector<1x32xf32> -> vector<1x128xf32>
    %563 = vector.extract_strided_slice %521 {offsets = [0, 0], sizes = [1, 32], strides = [1, 1]} : vector<2x32xf32> to vector<1x32xf32>
    %564 = vector.extract_strided_slice %529 {offsets = [0, 0], sizes = [1, 32], strides = [1, 1]} : vector<2x32xf32> to vector<1x32xf32>
    %565 = vector.extract_strided_slice %521 {offsets = [1, 0], sizes = [1, 32], strides = [1, 1]} : vector<2x32xf32> to vector<1x32xf32>
    %566 = vector.extract_strided_slice %529 {offsets = [1, 0], sizes = [1, 32], strides = [1, 1]} : vector<2x32xf32> to vector<1x32xf32>
    %567 = tpu.concatenate %563, %564, %565, %566 in 1 : vector<1x32xf32>, vector<1x32xf32>, vector<1x32xf32>, vector<1x32xf32> -> vector<1x128xf32>
    %568 = vector.extract_strided_slice %522 {offsets = [0, 0], sizes = [1, 32], strides = [1, 1]} : vector<2x32xf32> to vector<1x32xf32>
    %569 = vector.extract_strided_slice %530 {offsets = [0, 0], sizes = [1, 32], strides = [1, 1]} : vector<2x32xf32> to vector<1x32xf32>
    %570 = vector.extract_strided_slice %522 {offsets = [1, 0], sizes = [1, 32], strides = [1, 1]} : vector<2x32xf32> to vector<1x32xf32>
    %571 = vector.extract_strided_slice %530 {offsets = [1, 0], sizes = [1, 32], strides = [1, 1]} : vector<2x32xf32> to vector<1x32xf32>
    %572 = tpu.concatenate %568, %569, %570, %571 in 1 : vector<1x32xf32>, vector<1x32xf32>, vector<1x32xf32>, vector<1x32xf32> -> vector<1x128xf32>
    %573 = tpu.concatenate %537, %542, %547, %552, %557, %562, %567, %572 in 0 : vector<1x128xf32>, vector<1x128xf32>, vector<1x128xf32>, vector<1x128xf32>, vector<1x128xf32>, vector<1x128xf32>, vector<1x128xf32>, vector<1x128xf32> -> vector<8x128xf32>
    %c0_72 = arith.constant 0 : index
    %c0_73 = arith.constant 0 : index
    %574 = vector.load %arg6[%c0_72, %c0_73] : memref<8x128xf32, #tpu.memory_space<vmem>>, vector<8x128xf32>
    tpu.vector_store %arg6[%c0_72, %c0_73], %573 {strides = array<i32>} : memref<8x128xf32, #tpu.memory_space<vmem>>, vector<8x128xf32>,
    %575 = arith.addf %271, %531 : vector<2x32xf32>
    %cst_74 = arith.constant 5.000000e-01 : f32
    %576 = vector.broadcast %cst_74 : f32 to vector<2x32xf32>
    %577 = arith.mulf %575, %576 : vector<2x32xf32>
    %c0_75 = arith.constant 0 : index
    %c0_76 = arith.constant 0 : index
    %c0_77 = arith.constant 0 : index
    %578 = vector.load %arg7[%c0_75, %c0_76, %c0_77] : memref<2x2x32xf32, #tpu.memory_space<vmem>>, vector<1x2x32xf32>
    %579 = vector.shape_cast %578 : vector<1x2x32xf32> to vector<2x32xf32>
    %580 = vector.shape_cast %577 : vector<2x32xf32> to vector<1x2x32xf32>
    tpu.vector_store %arg7[%c0_75, %c0_76, %c0_77], %580 {strides = array<i32>} : memref<2x2x32xf32, #tpu.memory_space<vmem>>, vector<1x2x32xf32>,
    %581 = arith.addf %272, %532 : vector<2x32xf32>
    %cst_78 = arith.constant 5.000000e-01 : f32
    %582 = vector.broadcast %cst_78 : f32 to vector<2x32xf32>
    %583 = arith.mulf %581, %582 : vector<2x32xf32>
    %c1_79 = arith.constant 1 : index
    %c0_80 = arith.constant 0 : index
    %c0_81 = arith.constant 0 : index
    %584 = vector.load %arg7[%c1_79, %c0_80, %c0_81] : memref<2x2x32xf32, #tpu.memory_space<vmem>>, vector<1x2x32xf32>
    %585 = vector.shape_cast %584 : vector<1x2x32xf32> to vector<2x32xf32>
    %586 = vector.shape_cast %583 : vector<2x32xf32> to vector<1x2x32xf32>
    tpu.vector_store %arg7[%c1_79, %c0_80, %c0_81], %586 {strides = array<i32>} : memref<2x2x32xf32, #tpu.memory_space<vmem>>, vector<1x2x32xf32>,
    return
  }
}

</mosaic_0001>

<llo_original>
// kernel: encoder_forward.1
$region0: #{encoder_forward.1}
  #allocation0 [shape = 'u32[]', space=smem, size = 0x4, offset = 0x4, fixed_abs, tag = 'smem constant byte address 0x4 - core index']
  #allocation1 [shape = 'u32[144,128]{1,0:T(1,128)}', space=vmem, size = 0x12000, scoped, tag = 'internal scratch']
  %s0 = inlined_call_operand.vmem [shape: s32[16,1], index: 0, kind: input, shape index: {}]
  %s1 = inlined_call_operand.vmem [shape: f32[64,32], index: 1, kind: input, shape index: {}]
  %s2 = inlined_call_operand.vmem [shape: f32[96,192], index: 2, kind: input, shape index: {}]
  %s3 = inlined_call_operand.vmem [shape: f32[128,96], index: 3, kind: input, shape index: {}]
  %s4 = inlined_call_operand.vmem [shape: f32[2,192], index: 4, kind: input, shape index: {}]
  %s5 = inlined_call_operand.vmem [shape: f32[2,192], index: 5, kind: input, shape index: {}]
  %s6 = inlined_call_operand.vmem [shape: f32[8,128], index: 6, kind: output, shape index: {0}]
  %s7 = inlined_call_operand.hbm [shape: f32[2,2,32], index: 7, kind: output, shape index: {1}]
  %8 = xla_tuple %s6, %s7
  %s9 = sld [smem:[#allocation0]]
  $region42: #{encoder_forward.1} parent=0
    _
  %s11 = ssub.s32 1, %s9
  %s12 = scalar_select 0, %s11, %s9
  $region1: #{encoder_forward.1} parent=0
    #allocation2 [shape = 'u8[2048]{0}', space=vmem, size = 0x800, scoped, tag = 'output window, operand 1, single buffered']
    #allocation3 [shape = 's32[1]{0}', space=sflag, size = 0x4, scoped, tag = 'scoped memory for encoder_forward.1']
    %13 = vsyncpa [#allocation3], 0
    // Predicated region
    $region2: #{encoder_forward.1} parent=1 // pred_check
      _
    $region3: #{encoder_forward.1} parent=1 // pred_check_branch
      %15 = sbr.rel (0) target = $region5
    $region4: #{encoder_forward.1} parent=1 // pred_region
      _
    $region5: #{encoder_forward.1} parent=1 // pred_fallthru
      _
    // Predicated region
    $region6: #{encoder_forward.1} parent=1 // pred_check
      _
    $region7: #{encoder_forward.1} parent=1 // pred_check_branch
      %17 = sbr.rel (0) target = $region9
    $region8: #{encoder_forward.1} parent=1 // pred_region
      _
    $region9: #{encoder_forward.1} parent=1 // pred_fallthru
      _
    // Predicated region
    $region10: #{encoder_forward.1} parent=1 // pred_check
      _
    $region11: #{encoder_forward.1} parent=1 // pred_check_branch
      %19 = sbr.rel (0) target = $region13
    $region12: #{encoder_forward.1} parent=1 // pred_region
      _
    $region13: #{encoder_forward.1} parent=1 // pred_fallthru
      _
    // Predicated region
    $region14: #{encoder_forward.1} parent=1 // pred_check
      _
    $region15: #{encoder_forward.1} parent=1 // pred_check_branch
      %21 = sbr.rel (0) target = $region17
    $region16: #{encoder_forward.1} parent=1 // pred_region
      _
    $region17: #{encoder_forward.1} parent=1 // pred_fallthru
      _
    // Predicated region
    $region18: #{encoder_forward.1} parent=1 // pred_check
      _
    $region19: #{encoder_forward.1} parent=1 // pred_check_branch
      %23 = sbr.rel (0) target = $region21
    $region20: #{encoder_forward.1} parent=1 // pred_region
      _
    $region21: #{encoder_forward.1} parent=1 // pred_fallthru
      _
    // Predicated region
    $region22: #{encoder_forward.1} parent=1 // pred_check
      _
    $region23: #{encoder_forward.1} parent=1 // pred_check_branch
      %25 = sbr.rel (0) target = $region25
    $region24: #{encoder_forward.1} parent=1 // pred_region
      _
    $region25: #{encoder_forward.1} parent=1 // pred_fallthru
      _
    %v26 = vld [vmem:[%s0] sm:$0xff]
    %v27 = vld [vmem:[%s0 + $0x8] sm:$0xff]
    %v28 = vlaneseq
    %v29 = vand.u32 %v28, 127
    %30 = vset.pattern.permute.xlu0 0
    %31 = vperm.xlu0 %30, %v26
    %v32 = vpop.permute.xlu0 %31
    %33 = vset.pattern.permute.xlu0 0
    %34 = vperm.xlu0 %33, %v27
    %v35 = vpop.permute.xlu0 %34
    %vm36 = vcmp.eq.s32.totalorder %v32, %v29
    %vm37 = vcmp.eq.s32.totalorder %v35, %v29
    %v38 = vsel %vm36, 1, 0
    %v39 = vsel %vm37, 1, 0
    %v40 = vcvt.s32.f32 %v38
    %v41 = vcvt.s32.f32 %v39
    %v42 = vld [vmem:[%s1] sm:$0xff]
    %v43 = vld [vmem:[%s1 + $0x8] sm:$0xff]
    %v44 = vld [vmem:[%s1 + $0x10] sm:$0xff]
    %v45 = vld [vmem:[%s1 + $0x18] sm:$0xff]
    %v46 = vld [vmem:[%s1 + $0x20] sm:$0xff]
    %v47 = vld [vmem:[%s1 + $0x28] sm:$0xff]
    %v48 = vld [vmem:[%s1 + $0x30] sm:$0xff]
    %v49 = vld [vmem:[%s1 + $0x38] sm:$0xff]
    %vm50 = vcmask 523264
    %v52 = vsel %vm50, %v40, 0
    %v55 = vsel %vm50, %v41, 0
    %57 = vmatprep.subr.mxu0 0.0
    %58 = vmatpush1.msra.mxu0 %v42
    %59 = vmatprep.subr.mxu0 0.0
    %60 = vmatpush1.msra.mxu0 %v43
    %61 = vmatprep.subr.mxu0 0.0
    %62 = vmatpush1.msra.mxu0 %v44
    %63 = vmatprep.subr.mxu0 0.0
    %64 = vmatpush1.msra.mxu0 %v45
    %65 = vmatprep.subr.mxu0 0.0
    %66 = vmatpush1.msra.mxu0 %v46
    %67 = vmatprep.subr.mxu0 0.0
    %68 = vmatpush1.msra.mxu0 %v47
    %69 = vmatprep.subr.mxu0 0.0
    %70 = vmatpush1.msra.mxu0 %v48
    %71 = vmatprep.subr.mxu0 0.0
    %72 = vmatpush1.msra.mxu0 %v49
    %73 = vmatprep.subr.mxu0 0.0
    %74 = vmatpush1.msra.mxu0 0.0
    %75 = vmatprep.subr.mxu0 0.0
    %76 = vmatpush1.msra.mxu0 0.0
    %77 = vmatprep.subr.mxu0 0.0
    %78 = vmatpush1.msra.mxu0 0.0
    %79 = vmatprep.subr.mxu0 0.0
    %80 = vmatpush1.msra.mxu0 0.0
    %81 = vmatprep.subr.mxu0 0.0
    %82 = vmatpush1.msra.mxu0 0.0
    %83 = vmatprep.subr.mxu0 0.0
    %84 = vmatpush1.msra.mxu0 0.0
    %85 = vmatprep.subr.mxu0 0.0
    %86 = vmatpush1.msra.mxu0 0.0
    %87 = vmatprep.subr.mxu0 0.0
    %88 = vmatpush1.msra.mxu0 0.0
    %89 = vmatprep.subr.mxu0 0.0
    %90 = vmatpush1.msra.mxu0 0.0
    %91 = vmatprep.subr.mxu0 0.0
    %92 = vmatpush1.msra.mxu0 0.0
    %93 = vmatprep.subr.mxu0 0.0
    %94 = vmatpush1.msra.mxu0 0.0
    %95 = vmatprep.subr.mxu0 0.0
    %96 = vmatpush1.msra.mxu0 0.0
    %97 = vmatprep.subr.mxu0 0.0
    %98 = vmatpush1.msra.mxu0 0.0
    %99 = vmatprep.subr.mxu0 0.0
    %100 = vmatpush1.msra.mxu0 0.0
    %101 = vmatprep.subr.mxu0 0.0
    %102 = vmatpush1.msra.mxu0 0.0
    %103 = vmatprep.subr.mxu0 0.0
    %104 = vmatpush1.msra.mxu0 0.0
    %105 = vmatprep.subr.mxu0 0.0
    %106 = vmatpush1.msra.mxu0 0.0
    %107 = vmatprep.subr.mxu0 0.0
    %108 = vmatpush1.msra.mxu0 0.0
    %109 = vmatprep.subr.mxu0 0.0
    %110 = vmatpush1.msra.mxu0 0.0
    %111 = vmatprep.subr.mxu0 0.0
    %112 = vmatpush1.msra.mxu0 0.0
    %113 = vmatprep.subr.mxu0 0.0
    %114 = vmatpush1.msra.mxu0 0.0
    %115 = vmatprep.subr.mxu0 0.0
    %116 = vmatpush1.msra.mxu0 0.0
    %117 = vmatprep.subr.mxu0 0.0
    %118 = vmatpush1.msra.mxu0 0.0
    %119 = vmatprep.subr.mxu0 0.0
    %120 = vmatpush1.msra.mxu0 0.0
    %121 = vmatprep.mubr.f32.mxu0 0.0
    %122 = vmatmul.mubr.f32.gmra.mrb[0].mxu0 %v52
    %v123 = vpop.f32.mrb[0].mxu0
    %v124 = vadd.f32 0.0, %v123
    %v125 = vpop.f32.mrb[0].mxu0
    %126 = vmatprep.mubr.f32.mxu0 0.0
    %127 = vmatmul.mubr.f32.gmra.mrb[0].mxu0 %v55
    %v128 = vpop.f32.mrb[0].mxu0
    %v129 = vadd.f32 0.0, %v128
    %v130 = vpop.f32.mrb[0].mxu0
    %131 = vdwg.mxu0
    %v132 = vlaneseq
    %v133 = vshrl.u32 %v132, 7
    %vm134 = vcmp.lt.s32.totalorder %v133, 2
    %vm135 = vcmp.lt.s32.totalorder %v29, 32
    %vm136 = vmand %vm134, %vm135
    %vm137 = vmxor %vm134, 1
    %vm138 = vmxor %vm135, 1
    %vm139 = vmand %vm137, %vm138
    %vm140 = vmor %vm136, %vm139
    %v141 = vsel %vm140, 1.0, 0.0
    %v142 = vld [vmem:[%s2] sm:$0xff]
    %v143 = vld [vmem:[%s2 + $0x8] sm:$0xff]
    %v144 = vld [vmem:[%s2 + $0x10] sm:$0xff]
    %v145 = vld [vmem:[%s2 + $0x18] sm:$0xff]
    %v146 = vld [vmem:[%s2 + $0x20] sm:$0xff]
    %v147 = vld [vmem:[%s2 + $0x28] sm:$0xff]
    %v148 = vld [vmem:[%s2 + $0x30] sm:$0xff]
    %v149 = vld [vmem:[%s2 + $0x38] sm:$0xff]
    %v150 = vld [vmem:[%s4] ss:$2 sm:$0x3]
    %v152 = vlaneseq
    %v153 = vshrl.u32 %v152, 7
    %v154 = vsub.s32 0, %v153
    %v155 = vrot.slane %v150, %v154
    %v156 = vlaneseq
    %v157 = vshrl.u32 %v156, 7
    %v158 = vsub.s32 1, %v157
    %v159 = vrot.slane %v150, %v158
    %vm162 = vcmask 261120
    %v164 = vsel %vm162, %v124, 0
    %v167 = vsel %vm162, %v129, 0
    %169 = vmatprep.subr.mxu0 %v143
    %170 = vmatpush1.msra.mxu0 %v142
    %171 = vmatprep.subr.mxu0 %v145
    %172 = vmatpush1.msra.mxu0 %v144
    %173 = vmatprep.subr.mxu0 %v147
    %174 = vmatpush1.msra.mxu0 %v146
    %175 = vmatprep.subr.mxu0 %v149
    %176 = vmatpush1.msra.mxu0 %v148
    %177 = vmatprep.subr.mxu0 0.0
    %178 = vmatpush1.msra.mxu0 0.0
    %179 = vmatprep.subr.mxu0 0.0
    %180 = vmatpush1.msra.mxu0 0.0
    %181 = vmatprep.subr.mxu0 0.0
    %182 = vmatpush1.msra.mxu0 0.0
    %183 = vmatprep.subr.mxu0 0.0
    %184 = vmatpush1.msra.mxu0 0.0
    %185 = vmatprep.subr.mxu0 0.0
    %186 = vmatpush1.msra.mxu0 0.0
    %187 = vmatprep.subr.mxu0 0.0
    %188 = vmatpush1.msra.mxu0 0.0
    %189 = vmatprep.subr.mxu0 0.0
    %190 = vmatpush1.msra.mxu0 0.0
    %191 = vmatprep.subr.mxu0 0.0
    %192 = vmatpush1.msra.mxu0 0.0
    %193 = vmatprep.subr.mxu0 0.0
    %194 = vmatpush1.msra.mxu0 0.0
    %195 = vmatprep.subr.mxu0 0.0
    %196 = vmatpush1.msra.mxu0 0.0
    %197 = vmatprep.subr.mxu0 0.0
    %198 = vmatpush1.msra.mxu0 0.0
    %199 = vmatprep.subr.mxu0 0.0
    %200 = vmatpush1.msra.mxu0 0.0
    %201 = vmatprep.subr.mxu0 0.0
    %202 = vmatpush1.msra.mxu0 0.0
    %203 = vmatprep.subr.mxu0 0.0
    %204 = vmatpush1.msra.mxu0 0.0
    %205 = vmatprep.subr.mxu0 0.0
    %206 = vmatpush1.msra.mxu0 0.0
    %207 = vmatprep.subr.mxu0 0.0
    %208 = vmatpush1.msra.mxu0 0.0
    %209 = vmatprep.subr.mxu0 0.0
    %210 = vmatpush1.msra.mxu0 0.0
    %211 = vmatprep.subr.mxu0 0.0
    %212 = vmatpush1.msra.mxu0 0.0
    %213 = vmatprep.subr.mxu0 0.0
    %214 = vmatpush1.msra.mxu0 0.0
    %215 = vmatprep.subr.mxu0 0.0
    %216 = vmatpush1.msra.mxu0 0.0
    %217 = vmatprep.subr.mxu0 0.0
    %218 = vmatpush1.msra.mxu0 0.0
    %219 = vmatprep.subr.mxu0 0.0
    %220 = vmatpush1.msra.mxu0 0.0
    %221 = vmatprep.subr.mxu0 0.0
    %222 = vmatpush1.msra.mxu0 0.0
    %223 = vmatprep.subr.mxu0 0.0
    %224 = vmatpush1.msra.mxu0 0.0
    %225 = vmatprep.subr.mxu0 0.0
    %226 = vmatpush1.msra.mxu0 0.0
    %227 = vmatprep.subr.mxu0 0.0
    %228 = vmatpush1.msra.mxu0 0.0
    %229 = vmatprep.subr.mxu0 0.0
    %230 = vmatpush1.msra.mxu0 0.0
    %231 = vmatprep.subr.mxu0 0.0
    %232 = vmatpush1.msra.mxu0 0.0
    %233 = vmatprep.mubr.f32.mxu0 0.0
    %234 = vmatmul.mubr.f32.gmra.mrb[0].mxu0 %v164
    %v235 = vpop.f32.mrb[0].mxu0
    %v236 = vadd.f32 %v155, %v235
    %v237 = vpop.f32.mrb[0].mxu0
    %v238 = vadd.f32 %v159, %v237
    %239 = vmatprep.mubr.f32.mxu0 0.0
    %240 = vmatmul.mubr.f32.gmra.mrb[0].mxu0 %v167
    %v241 = vpop.f32.mrb[0].mxu0
    %v242 = vadd.f32 %v155, %v241
    %v243 = vpop.f32.mrb[0].mxu0
    %v244 = vadd.f32 %v159, %v243
    %245 = vdwg.mxu0
    %v248 = vrot.slane %v242, 4
    %v249 = vrot.slane %v244, 4
    %250 = vrot.lane.b32.xlu0 %v248, 32
    %v251 = vpop.permute.xlu0 %250
    %252 = vrot.lane.b32.xlu0 %v249, 32
    %v253 = vpop.permute.xlu0 %252
    %v254 = vsel %vm162, %v251, %v253
    %vm256 = vcmask 1041408
    %v257 = vsel %vm256, %v236, %v254
    %v259 = vrot.slane %v236, 2
    %v261 = vrot.slane %v242, 2
    %v262 = vrot.slane %v244, 2
    %263 = vrot.lane.b32.xlu0 %v261, 32
    %v264 = vpop.permute.xlu0 %263
    %265 = vrot.lane.b32.xlu0 %v262, 32
    %v266 = vpop.permute.xlu0 %265
    %v267 = vsel %vm162, %v264, %v266
    %v269 = vsel %vm256, %v259, %v267
    %v270 = vrot.slane %v236, 4
    %272 = vrot.lane.b32.xlu0 %v242, 32
    %v273 = vpop.permute.xlu0 %272
    %274 = vrot.lane.b32.xlu0 %v244, 32
    %v275 = vpop.permute.xlu0 %274
    %v276 = vsel %vm162, %v273, %v275
    %v278 = vsel %vm256, %v270, %v276
    %v279 = vrot.slane %v236, 6
    %v281 = vrot.slane %v242, 6
    %v282 = vrot.slane %v244, 6
    %283 = vrot.lane.b32.xlu0 %v281, 32
    %v284 = vpop.permute.xlu0 %283
    %285 = vrot.lane.b32.xlu0 %v282, 32
    %v286 = vpop.permute.xlu0 %285
    %v287 = vsel %vm162, %v284, %v286
    %v289 = vsel %vm256, %v279, %v287
    %v291 = vrot.slane %v238, 4
    %292 = vrot.lane.b32.xlu0 %v270, 32
    %v293 = vpop.permute.xlu0 %292
    %294 = vrot.lane.b32.xlu0 %v291, 32
    %v295 = vpop.permute.xlu0 %294
    %v296 = vsel %vm162, %v293, %v295
    %v298 = vsel %vm256, %v242, %v296
    %v300 = vrot.slane %v238, 2
    %301 = vrot.lane.b32.xlu0 %v259, 32
    %v302 = vpop.permute.xlu0 %301
    %303 = vrot.lane.b32.xlu0 %v300, 32
    %v304 = vpop.permute.xlu0 %303
    %v305 = vsel %vm162, %v302, %v304
    %v307 = vsel %vm256, %v261, %v305
    %309 = vrot.lane.b32.xlu0 %v236, 32
    %v310 = vpop.permute.xlu0 %309
    %311 = vrot.lane.b32.xlu0 %v238, 32
    %v312 = vpop.permute.xlu0 %311
    %v313 = vsel %vm162, %v310, %v312
    %v315 = vsel %vm256, %v248, %v313
    %v317 = vrot.slane %v238, 6
    %318 = vrot.lane.b32.xlu0 %v279, 32
    %v319 = vpop.permute.xlu0 %318
    %320 = vrot.lane.b32.xlu0 %v317, 32
    %v321 = vpop.permute.xlu0 %320
    %v322 = vsel %vm162, %v319, %v321
    %v324 = vsel %vm256, %v281, %v322
    %v325 = vld [vmem:[%s3] sm:$0xff]
    %v326 = vld [vmem:[%s3 + $0x8] sm:$0xff]
    %v327 = vld [vmem:[%s3 + $0x10] sm:$0xff]
    %v328 = vld [vmem:[%s3 + $0x18] sm:$0xff]
    %v329 = vld [vmem:[%s3 + $0x20] sm:$0xff]
    %v330 = vld [vmem:[%s3 + $0x28] sm:$0xff]
    %v331 = vld [vmem:[%s3 + $0x30] sm:$0xff]
    %v332 = vld [vmem:[%s3 + $0x38] sm:$0xff]
    %v333 = vld [vmem:[%s5] ss:$2 sm:$0x3]
    %v335 = vlaneseq
    %v336 = vshrl.u32 %v335, 7
    %v337 = vsub.s32 0, %v336
    %v338 = vrot.slane %v333, %v337
    %v340 = vlaneseq
    %v341 = vshrl.u32 %v340, 7
    %v342 = vsub.s32 1, %v341
    %v343 = vrot.slane %v333, %v342
    %344 = vrot.lane.b32.xlu0 %v338, 32
    %v345 = vpop.permute.xlu0 %344
    %346 = vrot.lane.b32.xlu0 %v343, 32
    %v347 = vpop.permute.xlu0 %346
    %v348 = vsel %vm162, %v345, %v347
    %v350 = vsel %vm256, %v338, %v348
    %v351 = vmul.f32 %v141, 0.0
    %v353 = vsel %vm50, %v351, 0
    %355 = vmatprep.subr.mxu0 0.0
    %356 = vmatpush1.msra.mxu0 %v325
    %357 = vmatprep.subr.mxu0 0.0
    %358 = vmatpush1.msra.mxu0 %v326
    %359 = vmatprep.subr.mxu0 0.0
    %360 = vmatpush1.msra.mxu0 %v327
    %361 = vmatprep.subr.mxu0 0.0
    %362 = vmatpush1.msra.mxu0 %v328
    %363 = vmatprep.subr.mxu0 0.0
    %364 = vmatpush1.msra.mxu0 %v329
    %365 = vmatprep.subr.mxu0 0.0
    %366 = vmatpush1.msra.mxu0 %v330
    %367 = vmatprep.subr.mxu0 0.0
    %368 = vmatpush1.msra.mxu0 %v331
    %369 = vmatprep.subr.mxu0 0.0
    %370 = vmatpush1.msra.mxu0 %v332
    %371 = vmatprep.subr.mxu0 0.0
    %372 = vmatpush1.msra.mxu0 0.0
    %373 = vmatprep.subr.mxu0 0.0
    %374 = vmatpush1.msra.mxu0 0.0
    %375 = vmatprep.subr.mxu0 0.0
    %376 = vmatpush1.msra.mxu0 0.0
    %377 = vmatprep.subr.mxu0 0.0
    %378 = vmatpush1.msra.mxu0 0.0
    %379 = vmatprep.subr.mxu0 0.0
    %380 = vmatpush1.msra.mxu0 0.0
    %381 = vmatprep.subr.mxu0 0.0
    %382 = vmatpush1.msra.mxu0 0.0
    %383 = vmatprep.subr.mxu0 0.0
    %384 = vmatpush1.msra.mxu0 0.0
    %385 = vmatprep.subr.mxu0 0.0
    %386 = vmatpush1.msra.mxu0 0.0
    %387 = vmatprep.subr.mxu0 0.0
    %388 = vmatpush1.msra.mxu0 0.0
    %389 = vmatprep.subr.mxu0 0.0
    %390 = vmatpush1.msra.mxu0 0.0
    %391 = vmatprep.subr.mxu0 0.0
    %392 = vmatpush1.msra.mxu0 0.0
    %393 = vmatprep.subr.mxu0 0.0
    %394 = vmatpush1.msra.mxu0 0.0
    %395 = vmatprep.subr.mxu0 0.0
    %396 = vmatpush1.msra.mxu0 0.0
    %397 = vmatprep.subr.mxu0 0.0
    %398 = vmatpush1.msra.mxu0 0.0
    %399 = vmatprep.subr.mxu0 0.0
    %400 = vmatpush1.msra.mxu0 0.0
    %401 = vmatprep.subr.mxu0 0.0
    %402 = vmatpush1.msra.mxu0 0.0
    %403 = vmatprep.subr.mxu0 0.0
    %404 = vmatpush1.msra.mxu0 0.0
    %405 = vmatprep.subr.mxu0 0.0
    %406 = vmatpush1.msra.mxu0 0.0
    %407 = vmatprep.subr.mxu0 0.0
    %408 = vmatpush1.msra.mxu0 0.0
    %409 = vmatprep.subr.mxu0 0.0
    %410 = vmatpush1.msra.mxu0 0.0
    %411 = vmatprep.subr.mxu0 0.0
    %412 = vmatpush1.msra.mxu0 0.0
    %413 = vmatprep.subr.mxu0 0.0
    %414 = vmatpush1.msra.mxu0 0.0
    %415 = vmatprep.subr.mxu0 0.0
    %416 = vmatpush1.msra.mxu0 0.0
    %417 = vmatprep.subr.mxu0 0.0
    %418 = vmatpush1.msra.mxu0 0.0
    %419 = vmatprep.mubr.f32.mxu0 0.0
    %420 = vmatmul.mubr.f32.gmra.mrb[0].mxu0 %v353
    %v421 = vpop.f32.mrb[0].mxu0
    %v422 = vadd.f32 %v350, %v421
    %v423 = vpop.f32.mrb[0].mxu0
    %424 = vdwg.mxu0
    %v425 = vadd.f32 %v257, %v422
    %v426 = vxor.u32 %v425, 2147483648
    %v427 = vmul.f32 %v426, 1.442695
    %v428 = vpow.pop %v427
    %v429 = vadd.f32 %v428, 1.0
    %v430 = vrcp.pop %v429
    %v431 = vmul.f32 1.0, %v430
    %433 = vrot.lane.b32.xlu0 %v422, 64
    %v434 = vpop.permute.xlu0 %433
    %v436 = vmul.f32 %v431, %v434
    %438 = vrot.lane.b32.xlu0 %v436, 64
    %v439 = vpop.permute.xlu0 %438
    %v441 = vadd.f32 %v257, %v439
    %v442 = vtanh.pop %v441
    %v443 = vsub.f32 1.0, %v431
    %445 = vrot.lane.b32.xlu0 %v442, 96
    %v446 = vpop.permute.xlu0 %445
    %v448 = vmul.f32 %v443, %v446
    %v449 = vmul.f32 %v431, 0.0
    %v450 = vadd.f32 %v448, %v449
    %452 = vrot.lane.b32.xlu0 %v450, 96
    %v453 = vpop.permute.xlu0 %452
    %v455 = vsel %vm162, %v453, %v450
    %v456 = vmul.f32 %v455, %v141
    %v458 = vsel %vm50, %v456, 0
    %460 = vmatprep.subr.mxu0 0.0
    %461 = vmatpush1.msra.mxu0 %v325
    %462 = vmatprep.subr.mxu0 0.0
    %463 = vmatpush1.msra.mxu0 %v326
    %464 = vmatprep.subr.mxu0 0.0
    %465 = vmatpush1.msra.mxu0 %v327
    %466 = vmatprep.subr.mxu0 0.0
    %467 = vmatpush1.msra.mxu0 %v328
    %468 = vmatprep.subr.mxu0 0.0
    %469 = vmatpush1.msra.mxu0 %v329
    %470 = vmatprep.subr.mxu0 0.0
    %471 = vmatpush1.msra.mxu0 %v330
    %472 = vmatprep.subr.mxu0 0.0
    %473 = vmatpush1.msra.mxu0 %v331
    %474 = vmatprep.subr.mxu0 0.0
    %475 = vmatpush1.msra.mxu0 %v332
    %476 = vmatprep.subr.mxu0 0.0
    %477 = vmatpush1.msra.mxu0 0.0
    %478 = vmatprep.subr.mxu0 0.0
    %479 = vmatpush1.msra.mxu0 0.0
    %480 = vmatprep.subr.mxu0 0.0
    %481 = vmatpush1.msra.mxu0 0.0
    %482 = vmatprep.subr.mxu0 0.0
    %483 = vmatpush1.msra.mxu0 0.0
    %484 = vmatprep.subr.mxu0 0.0
    %485 = vmatpush1.msra.mxu0 0.0
    %486 = vmatprep.subr.mxu0 0.0
    %487 = vmatpush1.msra.mxu0 0.0
    %488 = vmatprep.subr.mxu0 0.0
    %489 = vmatpush1.msra.mxu0 0.0
    %490 = vmatprep.subr.mxu0 0.0
    %491 = vmatpush1.msra.mxu0 0.0
    %492 = vmatprep.subr.mxu0 0.0
    %493 = vmatpush1.msra.mxu0 0.0
    %494 = vmatprep.subr.mxu0 0.0
    %495 = vmatpush1.msra.mxu0 0.0
    %496 = vmatprep.subr.mxu0 0.0
    %497 = vmatpush1.msra.mxu0 0.0
    %498 = vmatprep.subr.mxu0 0.0
    %499 = vmatpush1.msra.mxu0 0.0
    %500 = vmatprep.subr.mxu0 0.0
    %501 = vmatpush1.msra.mxu0 0.0
    %502 = vmatprep.subr.mxu0 0.0
    %503 = vmatpush1.msra.mxu0 0.0
    %504 = vmatprep.subr.mxu0 0.0
    %505 = vmatpush1.msra.mxu0 0.0
    %506 = vmatprep.subr.mxu0 0.0
    %507 = vmatpush1.msra.mxu0 0.0
    %508 = vmatprep.subr.mxu0 0.0
    %509 = vmatpush1.msra.mxu0 0.0
    %510 = vmatprep.subr.mxu0 0.0
    %511 = vmatpush1.msra.mxu0 0.0
    %512 = vmatprep.subr.mxu0 0.0
    %513 = vmatpush1.msra.mxu0 0.0
    %514 = vmatprep.subr.mxu0 0.0
    %515 = vmatpush1.msra.mxu0 0.0
    %516 = vmatprep.subr.mxu0 0.0
    %517 = vmatpush1.msra.mxu0 0.0
    %518 = vmatprep.subr.mxu0 0.0
    %519 = vmatpush1.msra.mxu0 0.0
    %520 = vmatprep.subr.mxu0 0.0
    %521 = vmatpush1.msra.mxu0 0.0
    %522 = vmatprep.subr.mxu0 0.0
    %523 = vmatpush1.msra.mxu0 0.0
    %524 = vmatprep.mubr.f32.mxu0 0.0
    %525 = vmatmul.mubr.f32.gmra.mrb[0].mxu0 %v458
    %v526 = vpop.f32.mrb[0].mxu0
    %v527 = vadd.f32 %v350, %v526
    %v528 = vpop.f32.mrb[0].mxu0
    %529 = vdwg.mxu0
    %v530 = vadd.f32 %v269, %v527
    %v531 = vxor.u32 %v530, 2147483648
    %v532 = vmul.f32 %v531, 1.442695
    %v533 = vpow.pop %v532
    %v534 = vadd.f32 %v533, 1.0
    %v535 = vrcp.pop %v534
    %v536 = vmul.f32 1.0, %v535
    %538 = vrot.lane.b32.xlu0 %v527, 64
    %v539 = vpop.permute.xlu0 %538
    %v541 = vmul.f32 %v536, %v539
    %543 = vrot.lane.b32.xlu0 %v541, 64
    %v544 = vpop.permute.xlu0 %543
    %v546 = vadd.f32 %v269, %v544
    %v547 = vtanh.pop %v546
    %v548 = vsub.f32 1.0, %v536
    %550 = vrot.lane.b32.xlu0 %v547, 96
    %v551 = vpop.permute.xlu0 %550
    %v553 = vmul.f32 %v548, %v551
    %v554 = vmul.f32 %v536, %v450
    %v555 = vadd.f32 %v553, %v554
    %557 = vrot.lane.b32.xlu0 %v555, 96
    %v558 = vpop.permute.xlu0 %557
    %v560 = vsel %vm162, %v558, %v555
    %v561 = vmul.f32 %v560, %v141
    %v563 = vsel %vm50, %v561, 0
    %565 = vmatprep.subr.mxu0 0.0
    %566 = vmatpush1.msra.mxu0 %v325
    %567 = vmatprep.subr.mxu0 0.0
    %568 = vmatpush1.msra.mxu0 %v326
    %569 = vmatprep.subr.mxu0 0.0
    %570 = vmatpush1.msra.mxu0 %v327
    %571 = vmatprep.subr.mxu0 0.0
    %572 = vmatpush1.msra.mxu0 %v328
    %573 = vmatprep.subr.mxu0 0.0
    %574 = vmatpush1.msra.mxu0 %v329
    %575 = vmatprep.subr.mxu0 0.0
    %576 = vmatpush1.msra.mxu0 %v330
    %577 = vmatprep.subr.mxu0 0.0
    %578 = vmatpush1.msra.mxu0 %v331
    %579 = vmatprep.subr.mxu0 0.0
    %580 = vmatpush1.msra.mxu0 %v332
    %581 = vmatprep.subr.mxu0 0.0
    %582 = vmatpush1.msra.mxu0 0.0
    %583 = vmatprep.subr.mxu0 0.0
    %584 = vmatpush1.msra.mxu0 0.0
    %585 = vmatprep.subr.mxu0 0.0
    %586 = vmatpush1.msra.mxu0 0.0
    %587 = vmatprep.subr.mxu0 0.0
    %588 = vmatpush1.msra.mxu0 0.0
    %589 = vmatprep.subr.mxu0 0.0
    %590 = vmatpush1.msra.mxu0 0.0
    %591 = vmatprep.subr.mxu0 0.0
    %592 = vmatpush1.msra.mxu0 0.0
    %593 = vmatprep.subr.mxu0 0.0
    %594 = vmatpush1.msra.mxu0 0.0
    %595 = vmatprep.subr.mxu0 0.0
    %596 = vmatpush1.msra.mxu0 0.0
    %597 = vmatprep.subr.mxu0 0.0
    %598 = vmatpush1.msra.mxu0 0.0
    %599 = vmatprep.subr.mxu0 0.0
    %600 = vmatpush1.msra.mxu0 0.0
    %601 = vmatprep.subr.mxu0 0.0
    %602 = vmatpush1.msra.mxu0 0.0
    %603 = vmatprep.subr.mxu0 0.0
    %604 = vmatpush1.msra.mxu0 0.0
    %605 = vmatprep.subr.mxu0 0.0
    %606 = vmatpush1.msra.mxu0 0.0
    %607 = vmatprep.subr.mxu0 0.0
    %608 = vmatpush1.msra.mxu0 0.0
    %609 = vmatprep.subr.mxu0 0.0
    %610 = vmatpush1.msra.mxu0 0.0
    %611 = vmatprep.subr.mxu0 0.0
    %612 = vmatpush1.msra.mxu0 0.0
    %613 = vmatprep.subr.mxu0 0.0
    %614 = vmatpush1.msra.mxu0 0.0
    %615 = vmatprep.subr.mxu0 0.0
    %616 = vmatpush1.msra.mxu0 0.0
    %617 = vmatprep.subr.mxu0 0.0
    %618 = vmatpush1.msra.mxu0 0.0
    %619 = vmatprep.subr.mxu0 0.0
    %620 = vmatpush1.msra.mxu0 0.0
    %621 = vmatprep.subr.mxu0 0.0
    %622 = vmatpush1.msra.mxu0 0.0
    %623 = vmatprep.subr.mxu0 0.0
    %624 = vmatpush1.msra.mxu0 0.0
    %625 = vmatprep.subr.mxu0 0.0
    %626 = vmatpush1.msra.mxu0 0.0
    %627 = vmatprep.subr.mxu0 0.0
    %628 = vmatpush1.msra.mxu0 0.0
    %629 = vmatprep.mubr.f32.mxu0 0.0
    %630 = vmatmul.mubr.f32.gmra.mrb[0].mxu0 %v563
    %v631 = vpop.f32.mrb[0].mxu0
    %v632 = vadd.f32 %v350, %v631
    %v633 = vpop.f32.mrb[0].mxu0
    %634 = vdwg.mxu0
    %v635 = vadd.f32 %v278, %v632
    %v636 = vxor.u32 %v635, 2147483648
    %v637 = vmul.f32 %v636, 1.442695
    %v638 = vpow.pop %v637
    %v639 = vadd.f32 %v638, 1.0
    %v640 = vrcp.pop %v639
    %v641 = vmul.f32 1.0, %v640
    %643 = vrot.lane.b32.xlu0 %v632, 64
    %v644 = vpop.permute.xlu0 %643
    %v646 = vmul.f32 %v641, %v644
    %648 = vrot.lane.b32.xlu0 %v646, 64
    %v649 = vpop.permute.xlu0 %648
    %v651 = vadd.f32 %v278, %v649
    %v652 = vtanh.pop %v651
    %v653 = vsub.f32 1.0, %v641
    %655 = vrot.lane.b32.xlu0 %v652, 96
    %v656 = vpop.permute.xlu0 %655
    %v658 = vmul.f32 %v653, %v656
    %v659 = vmul.f32 %v641, %v555
    %v660 = vadd.f32 %v658, %v659
    %662 = vrot.lane.b32.xlu0 %v660, 96
    %v663 = vpop.permute.xlu0 %662
    %v665 = vsel %vm162, %v663, %v660
    %v666 = vmul.f32 %v665, %v141
    %v668 = vsel %vm50, %v666, 0
    %670 = vmatprep.subr.mxu0 0.0
    %671 = vmatpush1.msra.mxu0 %v325
    %672 = vmatprep.subr.mxu0 0.0
    %673 = vmatpush1.msra.mxu0 %v326
    %674 = vmatprep.subr.mxu0 0.0
    %675 = vmatpush1.msra.mxu0 %v327
    %676 = vmatprep.subr.mxu0 0.0
    %677 = vmatpush1.msra.mxu0 %v328
    %678 = vmatprep.subr.mxu0 0.0
    %679 = vmatpush1.msra.mxu0 %v329
    %680 = vmatprep.subr.mxu0 0.0
    %681 = vmatpush1.msra.mxu0 %v330
    %682 = vmatprep.subr.mxu0 0.0
    %683 = vmatpush1.msra.mxu0 %v331
    %684 = vmatprep.subr.mxu0 0.0
    %685 = vmatpush1.msra.mxu0 %v332
    %686 = vmatprep.subr.mxu0 0.0
    %687 = vmatpush1.msra.mxu0 0.0
    %688 = vmatprep.subr.mxu0 0.0
    %689 = vmatpush1.msra.mxu0 0.0
    %690 = vmatprep.subr.mxu0 0.0
    %691 = vmatpush1.msra.mxu0 0.0
    %692 = vmatprep.subr.mxu0 0.0
    %693 = vmatpush1.msra.mxu0 0.0
    %694 = vmatprep.subr.mxu0 0.0
    %695 = vmatpush1.msra.mxu0 0.0
    %696 = vmatprep.subr.mxu0 0.0
    %697 = vmatpush1.msra.mxu0 0.0
    %698 = vmatprep.subr.mxu0 0.0
    %699 = vmatpush1.msra.mxu0 0.0
    %700 = vmatprep.subr.mxu0 0.0
    %701 = vmatpush1.msra.mxu0 0.0
    %702 = vmatprep.subr.mxu0 0.0
    %703 = vmatpush1.msra.mxu0 0.0
    %704 = vmatprep.subr.mxu0 0.0
    %705 = vmatpush1.msra.mxu0 0.0
    %706 = vmatprep.subr.mxu0 0.0
    %707 = vmatpush1.msra.mxu0 0.0
    %708 = vmatprep.subr.mxu0 0.0
    %709 = vmatpush1.msra.mxu0 0.0
    %710 = vmatprep.subr.mxu0 0.0
    %711 = vmatpush1.msra.mxu0 0.0
    %712 = vmatprep.subr.mxu0 0.0
    %713 = vmatpush1.msra.mxu0 0.0
    %714 = vmatprep.subr.mxu0 0.0
    %715 = vmatpush1.msra.mxu0 0.0
    %716 = vmatprep.subr.mxu0 0.0
    %717 = vmatpush1.msra.mxu0 0.0
    %718 = vmatprep.subr.mxu0 0.0
    %719 = vmatpush1.msra.mxu0 0.0
    %720 = vmatprep.subr.mxu0 0.0
    %721 = vmatpush1.msra.mxu0 0.0
    %722 = vmatprep.subr.mxu0 0.0
    %723 = vmatpush1.msra.mxu0 0.0
    %724 = vmatprep.subr.mxu0 0.0
    %725 = vmatpush1.msra.mxu0 0.0
    %726 = vmatprep.subr.mxu0 0.0
    %727 = vmatpush1.msra.mxu0 0.0
    %728 = vmatprep.subr.mxu0 0.0
    %729 = vmatpush1.msra.mxu0 0.0
    %730 = vmatprep.subr.mxu0 0.0
    %731 = vmatpush1.msra.mxu0 0.0
    %732 = vmatprep.subr.mxu0 0.0
    %733 = vmatpush1.msra.mxu0 0.0
    %734 = vmatprep.mubr.f32.mxu0 0.0
    %735 = vmatmul.mubr.f32.gmra.mrb[0].mxu0 %v668
    %v736 = vpop.f32.mrb[0].mxu0
    %v737 = vadd.f32 %v350, %v736
    %v738 = vpop.f32.mrb[0].mxu0
    %739 = vdwg.mxu0
    %v740 = vadd.f32 %v289, %v737
    %v741 = vxor.u32 %v740, 2147483648
    %v742 = vmul.f32 %v741, 1.442695
    %v743 = vpow.pop %v742
    %v744 = vadd.f32 %v743, 1.0
    %v745 = vrcp.pop %v744
    %v746 = vmul.f32 1.0, %v745
    %748 = vrot.lane.b32.xlu0 %v737, 64
    %v749 = vpop.permute.xlu0 %748
    %v751 = vmul.f32 %v746, %v749
    %753 = vrot.lane.b32.xlu0 %v751, 64
    %v754 = vpop.permute.xlu0 %753
    %v756 = vadd.f32 %v289, %v754
    %v757 = vtanh.pop %v756
    %v758 = vsub.f32 1.0, %v746
    %760 = vrot.lane.b32.xlu0 %v757, 96
    %v761 = vpop.permute.xlu0 %760
    %v763 = vmul.f32 %v758, %v761
    %v764 = vmul.f32 %v746, %v660
    %v765 = vadd.f32 %v763, %v764
    %767 = vrot.lane.b32.xlu0 %v765, 96
    %v768 = vpop.permute.xlu0 %767
    %v770 = vsel %vm162, %v768, %v765
    %v771 = vmul.f32 %v770, %v141
    %v773 = vsel %vm50, %v771, 0
    %775 = vmatprep.subr.mxu0 0.0
    %776 = vmatpush1.msra.mxu0 %v325
    %777 = vmatprep.subr.mxu0 0.0
    %778 = vmatpush1.msra.mxu0 %v326
    %779 = vmatprep.subr.mxu0 0.0
    %780 = vmatpush1.msra.mxu0 %v327
    %781 = vmatprep.subr.mxu0 0.0
    %782 = vmatpush1.msra.mxu0 %v328
    %783 = vmatprep.subr.mxu0 0.0
    %784 = vmatpush1.msra.mxu0 %v329
    %785 = vmatprep.subr.mxu0 0.0
    %786 = vmatpush1.msra.mxu0 %v330
    %787 = vmatprep.subr.mxu0 0.0
    %788 = vmatpush1.msra.mxu0 %v331
    %789 = vmatprep.subr.mxu0 0.0
    %790 = vmatpush1.msra.mxu0 %v332
    %791 = vmatprep.subr.mxu0 0.0
    %792 = vmatpush1.msra.mxu0 0.0
    %793 = vmatprep.subr.mxu0 0.0
    %794 = vmatpush1.msra.mxu0 0.0
    %795 = vmatprep.subr.mxu0 0.0
    %796 = vmatpush1.msra.mxu0 0.0
    %797 = vmatprep.subr.mxu0 0.0
    %798 = vmatpush1.msra.mxu0 0.0
    %799 = vmatprep.subr.mxu0 0.0
    %800 = vmatpush1.msra.mxu0 0.0
    %801 = vmatprep.subr.mxu0 0.0
    %802 = vmatpush1.msra.mxu0 0.0
    %803 = vmatprep.subr.mxu0 0.0
    %804 = vmatpush1.msra.mxu0 0.0
    %805 = vmatprep.subr.mxu0 0.0
    %806 = vmatpush1.msra.mxu0 0.0
    %807 = vmatprep.subr.mxu0 0.0
    %808 = vmatpush1.msra.mxu0 0.0
    %809 = vmatprep.subr.mxu0 0.0
    %810 = vmatpush1.msra.mxu0 0.0
    %811 = vmatprep.subr.mxu0 0.0
    %812 = vmatpush1.msra.mxu0 0.0
    %813 = vmatprep.subr.mxu0 0.0
    %814 = vmatpush1.msra.mxu0 0.0
    %815 = vmatprep.subr.mxu0 0.0
    %816 = vmatpush1.msra.mxu0 0.0
    %817 = vmatprep.subr.mxu0 0.0
    %818 = vmatpush1.msra.mxu0 0.0
    %819 = vmatprep.subr.mxu0 0.0
    %820 = vmatpush1.msra.mxu0 0.0
    %821 = vmatprep.subr.mxu0 0.0
    %822 = vmatpush1.msra.mxu0 0.0
    %823 = vmatprep.subr.mxu0 0.0
    %824 = vmatpush1.msra.mxu0 0.0
    %825 = vmatprep.subr.mxu0 0.0
    %826 = vmatpush1.msra.mxu0 0.0
    %827 = vmatprep.subr.mxu0 0.0
    %828 = vmatpush1.msra.mxu0 0.0
    %829 = vmatprep.subr.mxu0 0.0
    %830 = vmatpush1.msra.mxu0 0.0
    %831 = vmatprep.subr.mxu0 0.0
    %832 = vmatpush1.msra.mxu0 0.0
    %833 = vmatprep.subr.mxu0 0.0
    %834 = vmatpush1.msra.mxu0 0.0
    %835 = vmatprep.subr.mxu0 0.0
    %836 = vmatpush1.msra.mxu0 0.0
    %837 = vmatprep.subr.mxu0 0.0
    %838 = vmatpush1.msra.mxu0 0.0
    %839 = vmatprep.mubr.f32.mxu0 0.0
    %840 = vmatmul.mubr.f32.gmra.mrb[0].mxu0 %v773
    %v841 = vpop.f32.mrb[0].mxu0
    %v842 = vadd.f32 %v350, %v841
    %v843 = vpop.f32.mrb[0].mxu0
    %844 = vdwg.mxu0
    %v845 = vadd.f32 %v298, %v842
    %v846 = vxor.u32 %v845, 2147483648
    %v847 = vmul.f32 %v846, 1.442695
    %v848 = vpow.pop %v847
    %v849 = vadd.f32 %v848, 1.0
    %v850 = vrcp.pop %v849
    %v851 = vmul.f32 1.0, %v850
    %853 = vrot.lane.b32.xlu0 %v842, 64
    %v854 = vpop.permute.xlu0 %853
    %v856 = vmul.f32 %v851, %v854
    %858 = vrot.lane.b32.xlu0 %v856, 64
    %v859 = vpop.permute.xlu0 %858
    %v861 = vadd.f32 %v298, %v859
    %v862 = vtanh.pop %v861
    %v863 = vsub.f32 1.0, %v851
    %865 = vrot.lane.b32.xlu0 %v862, 96
    %v866 = vpop.permute.xlu0 %865
    %v868 = vmul.f32 %v863, %v866
    %v869 = vmul.f32 %v851, %v765
    %v870 = vadd.f32 %v868, %v869
    %872 = vrot.lane.b32.xlu0 %v870, 96
    %v873 = vpop.permute.xlu0 %872
    %v875 = vsel %vm162, %v873, %v870
    %v876 = vmul.f32 %v875, %v141
    %v878 = vsel %vm50, %v876, 0
    %880 = vmatprep.subr.mxu0 0.0
    %881 = vmatpush1.msra.mxu0 %v325
    %882 = vmatprep.subr.mxu0 0.0
    %883 = vmatpush1.msra.mxu0 %v326
    %884 = vmatprep.subr.mxu0 0.0
    %885 = vmatpush1.msra.mxu0 %v327
    %886 = vmatprep.subr.mxu0 0.0
    %887 = vmatpush1.msra.mxu0 %v328
    %888 = vmatprep.subr.mxu0 0.0
    %889 = vmatpush1.msra.mxu0 %v329
    %890 = vmatprep.subr.mxu0 0.0
    %891 = vmatpush1.msra.mxu0 %v330
    %892 = vmatprep.subr.mxu0 0.0
    %893 = vmatpush1.msra.mxu0 %v331
    %894 = vmatprep.subr.mxu0 0.0
    %895 = vmatpush1.msra.mxu0 %v332
    %896 = vmatprep.subr.mxu0 0.0
    %897 = vmatpush1.msra.mxu0 0.0
    %898 = vmatprep.subr.mxu0 0.0
    %899 = vmatpush1.msra.mxu0 0.0
    %900 = vmatprep.subr.mxu0 0.0
    %901 = vmatpush1.msra.mxu0 0.0
    %902 = vmatprep.subr.mxu0 0.0
    %903 = vmatpush1.msra.mxu0 0.0
    %904 = vmatprep.subr.mxu0 0.0
    %905 = vmatpush1.msra.mxu0 0.0
    %906 = vmatprep.subr.mxu0 0.0
    %907 = vmatpush1.msra.mxu0 0.0
    %908 = vmatprep.subr.mxu0 0.0
    %909 = vmatpush1.msra.mxu0 0.0
    %910 = vmatprep.subr.mxu0 0.0
    %911 = vmatpush1.msra.mxu0 0.0
    %912 = vmatprep.subr.mxu0 0.0
    %913 = vmatpush1.msra.mxu0 0.0
    %914 = vmatprep.subr.mxu0 0.0
    %915 = vmatpush1.msra.mxu0 0.0
    %916 = vmatprep.subr.mxu0 0.0
    %917 = vmatpush1.msra.mxu0 0.0
    %918 = vmatprep.subr.mxu0 0.0
    %919 = vmatpush1.msra.mxu0 0.0
    %920 = vmatprep.subr.mxu0 0.0
    %921 = vmatpush1.msra.mxu0 0.0
    %922 = vmatprep.subr.mxu0 0.0
    %923 = vmatpush1.msra.mxu0 0.0
    %924 = vmatprep.subr.mxu0 0.0
    %925 = vmatpush1.msra.mxu0 0.0
    %926 = vmatprep.subr.mxu0 0.0
    %927 = vmatpush1.msra.mxu0 0.0
    %928 = vmatprep.subr.mxu0 0.0
    %929 = vmatpush1.msra.mxu0 0.0
    %930 = vmatprep.subr.mxu0 0.0
    %931 = vmatpush1.msra.mxu0 0.0
    %932 = vmatprep.subr.mxu0 0.0
    %933 = vmatpush1.msra.mxu0 0.0
    %934 = vmatprep.subr.mxu0 0.0
    %935 = vmatpush1.msra.mxu0 0.0
    %936 = vmatprep.subr.mxu0 0.0
    %937 = vmatpush1.msra.mxu0 0.0
    %938 = vmatprep.subr.mxu0 0.0
    %939 = vmatpush1.msra.mxu0 0.0
    %940 = vmatprep.subr.mxu0 0.0
    %941 = vmatpush1.msra.mxu0 0.0
    %942 = vmatprep.subr.mxu0 0.0
    %943 = vmatpush1.msra.mxu0 0.0
    %944 = vmatprep.mubr.f32.mxu0 0.0
    %945 = vmatmul.mubr.f32.gmra.mrb[0].mxu0 %v878
    %v946 = vpop.f32.mrb[0].mxu0
    %v947 = vadd.f32 %v350, %v946
    %v948 = vpop.f32.mrb[0].mxu0
    %949 = vdwg.mxu0
    %v950 = vadd.f32 %v307, %v947
    %v951 = vxor.u32 %v950, 2147483648
    %v952 = vmul.f32 %v951, 1.442695
    %v953 = vpow.pop %v952
    %v954 = vadd.f32 %v953, 1.0
    %v955 = vrcp.pop %v954
    %v956 = vmul.f32 1.0, %v955
    %958 = vrot.lane.b32.xlu0 %v947, 64
    %v959 = vpop.permute.xlu0 %958
    %v961 = vmul.f32 %v956, %v959
    %963 = vrot.lane.b32.xlu0 %v961, 64
    %v964 = vpop.permute.xlu0 %963
    %v966 = vadd.f32 %v307, %v964
    %v967 = vtanh.pop %v966
    %v968 = vsub.f32 1.0, %v956
    %970 = vrot.lane.b32.xlu0 %v967, 96
    %v971 = vpop.permute.xlu0 %970
    %v973 = vmul.f32 %v968, %v971
    %v974 = vmul.f32 %v956, %v870
    %v975 = vadd.f32 %v973, %v974
    %977 = vrot.lane.b32.xlu0 %v975, 96
    %v978 = vpop.permute.xlu0 %977
    %v980 = vsel %vm162, %v978, %v975
    %v981 = vmul.f32 %v980, %v141
    %v983 = vsel %vm50, %v981, 0
    %985 = vmatprep.subr.mxu0 0.0
    %986 = vmatpush1.msra.mxu0 %v325
    %987 = vmatprep.subr.mxu0 0.0
    %988 = vmatpush1.msra.mxu0 %v326
    %989 = vmatprep.subr.mxu0 0.0
    %990 = vmatpush1.msra.mxu0 %v327
    %991 = vmatprep.subr.mxu0 0.0
    %992 = vmatpush1.msra.mxu0 %v328
    %993 = vmatprep.subr.mxu0 0.0
    %994 = vmatpush1.msra.mxu0 %v329
    %995 = vmatprep.subr.mxu0 0.0
    %996 = vmatpush1.msra.mxu0 %v330
    %997 = vmatprep.subr.mxu0 0.0
    %998 = vmatpush1.msra.mxu0 %v331
    %999 = vmatprep.subr.mxu0 0.0
    %1000 = vmatpush1.msra.mxu0 %v332
    %1001 = vmatprep.subr.mxu0 0.0
    %1002 = vmatpush1.msra.mxu0 0.0
    %1003 = vmatprep.subr.mxu0 0.0
    %1004 = vmatpush1.msra.mxu0 0.0
    %1005 = vmatprep.subr.mxu0 0.0
    %1006 = vmatpush1.msra.mxu0 0.0
    %1007 = vmatprep.subr.mxu0 0.0
    %1008 = vmatpush1.msra.mxu0 0.0
    %1009 = vmatprep.subr.mxu0 0.0
    %1010 = vmatpush1.msra.mxu0 0.0
    %1011 = vmatprep.subr.mxu0 0.0
    %1012 = vmatpush1.msra.mxu0 0.0
    %1013 = vmatprep.subr.mxu0 0.0
    %1014 = vmatpush1.msra.mxu0 0.0
    %1015 = vmatprep.subr.mxu0 0.0
    %1016 = vmatpush1.msra.mxu0 0.0
    %1017 = vmatprep.subr.mxu0 0.0
    %1018 = vmatpush1.msra.mxu0 0.0
    %1019 = vmatprep.subr.mxu0 0.0
    %1020 = vmatpush1.msra.mxu0 0.0
    %1021 = vmatprep.subr.mxu0 0.0
    %1022 = vmatpush1.msra.mxu0 0.0
    %1023 = vmatprep.subr.mxu0 0.0
    %1024 = vmatpush1.msra.mxu0 0.0
    %1025 = vmatprep.subr.mxu0 0.0
    %1026 = vmatpush1.msra.mxu0 0.0
    %1027 = vmatprep.subr.mxu0 0.0
    %1028 = vmatpush1.msra.mxu0 0.0
    %1029 = vmatprep.subr.mxu0 0.0
    %1030 = vmatpush1.msra.mxu0 0.0
    %1031 = vmatprep.subr.mxu0 0.0
    %1032 = vmatpush1.msra.mxu0 0.0
    %1033 = vmatprep.subr.mxu0 0.0
    %1034 = vmatpush1.msra.mxu0 0.0
    %1035 = vmatprep.subr.mxu0 0.0
    %1036 = vmatpush1.msra.mxu0 0.0
    %1037 = vmatprep.subr.mxu0 0.0
    %1038 = vmatpush1.msra.mxu0 0.0
    %1039 = vmatprep.subr.mxu0 0.0
    %1040 = vmatpush1.msra.mxu0 0.0
    %1041 = vmatprep.subr.mxu0 0.0
    %1042 = vmatpush1.msra.mxu0 0.0
    %1043 = vmatprep.subr.mxu0 0.0
    %1044 = vmatpush1.msra.mxu0 0.0
    %1045 = vmatprep.subr.mxu0 0.0
    %1046 = vmatpush1.msra.mxu0 0.0
    %1047 = vmatprep.subr.mxu0 0.0
    %1048 = vmatpush1.msra.mxu0 0.0
    %1049 = vmatprep.mubr.f32.mxu0 0.0
    %1050 = vmatmul.mubr.f32.gmra.mrb[0].mxu0 %v983
    %v1051 = vpop.f32.mrb[0].mxu0
    %v1052 = vadd.f32 %v350, %v1051
    %v1053 = vpop.f32.mrb[0].mxu0
    %1054 = vdwg.mxu0
    %v1055 = vadd.f32 %v315, %v1052
    %v1056 = vxor.u32 %v1055, 2147483648
    %v1057 = vmul.f32 %v1056, 1.442695
    %v1058 = vpow.pop %v1057
    %v1059 = vadd.f32 %v1058, 1.0
    %v1060 = vrcp.pop %v1059
    %v1061 = vmul.f32 1.0, %v1060
    %1063 = vrot.lane.b32.xlu0 %v1052, 64
    %v1064 = vpop.permute.xlu0 %1063
    %v1066 = vmul.f32 %v1061, %v1064
    %1068 = vrot.lane.b32.xlu0 %v1066, 64
    %v1069 = vpop.permute.xlu0 %1068
    %v1071 = vadd.f32 %v315, %v1069
    %v1072 = vtanh.pop %v1071
    %v1073 = vsub.f32 1.0, %v1061
    %1075 = vrot.lane.b32.xlu0 %v1072, 96
    %v1076 = vpop.permute.xlu0 %1075
    %v1078 = vmul.f32 %v1073, %v1076
    %v1079 = vmul.f32 %v1061, %v975
    %v1080 = vadd.f32 %v1078, %v1079
    %1082 = vrot.lane.b32.xlu0 %v1080, 96
    %v1083 = vpop.permute.xlu0 %1082
    %v1085 = vsel %vm162, %v1083, %v1080
    %v1086 = vmul.f32 %v1085, %v141
    %v1088 = vsel %vm50, %v1086, 0
    %1090 = vmatprep.subr.mxu0 0.0
    %1091 = vmatpush1.msra.mxu0 %v325
    %1092 = vmatprep.subr.mxu0 0.0
    %1093 = vmatpush1.msra.mxu0 %v326
    %1094 = vmatprep.subr.mxu0 0.0
    %1095 = vmatpush1.msra.mxu0 %v327
    %1096 = vmatprep.subr.mxu0 0.0
    %1097 = vmatpush1.msra.mxu0 %v328
    %1098 = vmatprep.subr.mxu0 0.0
    %1099 = vmatpush1.msra.mxu0 %v329
    %1100 = vmatprep.subr.mxu0 0.0
    %1101 = vmatpush1.msra.mxu0 %v330
    %1102 = vmatprep.subr.mxu0 0.0
    %1103 = vmatpush1.msra.mxu0 %v331
    %1104 = vmatprep.subr.mxu0 0.0
    %1105 = vmatpush1.msra.mxu0 %v332
    %1106 = vmatprep.subr.mxu0 0.0
    %1107 = vmatpush1.msra.mxu0 0.0
    %1108 = vmatprep.subr.mxu0 0.0
    %1109 = vmatpush1.msra.mxu0 0.0
    %1110 = vmatprep.subr.mxu0 0.0
    %1111 = vmatpush1.msra.mxu0 0.0
    %1112 = vmatprep.subr.mxu0 0.0
    %1113 = vmatpush1.msra.mxu0 0.0
    %1114 = vmatprep.subr.mxu0 0.0
    %1115 = vmatpush1.msra.mxu0 0.0
    %1116 = vmatprep.subr.mxu0 0.0
    %1117 = vmatpush1.msra.mxu0 0.0
    %1118 = vmatprep.subr.mxu0 0.0
    %1119 = vmatpush1.msra.mxu0 0.0
    %1120 = vmatprep.subr.mxu0 0.0
    %1121 = vmatpush1.msra.mxu0 0.0
    %1122 = vmatprep.subr.mxu0 0.0
    %1123 = vmatpush1.msra.mxu0 0.0
    %1124 = vmatprep.subr.mxu0 0.0
    %1125 = vmatpush1.msra.mxu0 0.0
    %1126 = vmatprep.subr.mxu0 0.0
    %1127 = vmatpush1.msra.mxu0 0.0
    %1128 = vmatprep.subr.mxu0 0.0
    %1129 = vmatpush1.msra.mxu0 0.0
    %1130 = vmatprep.subr.mxu0 0.0
    %1131 = vmatpush1.msra.mxu0 0.0
    %1132 = vmatprep.subr.mxu0 0.0
    %1133 = vmatpush1.msra.mxu0 0.0
    %1134 = vmatprep.subr.mxu0 0.0
    %1135 = vmatpush1.msra.mxu0 0.0
    %1136 = vmatprep.subr.mxu0 0.0
    %1137 = vmatpush1.msra.mxu0 0.0
    %1138 = vmatprep.subr.mxu0 0.0
    %1139 = vmatpush1.msra.mxu0 0.0
    %1140 = vmatprep.subr.mxu0 0.0
    %1141 = vmatpush1.msra.mxu0 0.0
    %1142 = vmatprep.subr.mxu0 0.0
    %1143 = vmatpush1.msra.mxu0 0.0
    %1144 = vmatprep.subr.mxu0 0.0
    %1145 = vmatpush1.msra.mxu0 0.0
    %1146 = vmatprep.subr.mxu0 0.0
    %1147 = vmatpush1.msra.mxu0 0.0
    %1148 = vmatprep.subr.mxu0 0.0
    %1149 = vmatpush1.msra.mxu0 0.0
    %1150 = vmatprep.subr.mxu0 0.0
    %1151 = vmatpush1.msra.mxu0 0.0
    %1152 = vmatprep.subr.mxu0 0.0
    %1153 = vmatpush1.msra.mxu0 0.0
    %1154 = vmatprep.mubr.f32.mxu0 0.0
    %1155 = vmatmul.mubr.f32.gmra.mrb[0].mxu0 %v1088
    %v1156 = vpop.f32.mrb[0].mxu0
    %v1157 = vadd.f32 %v350, %v1156
    %v1158 = vpop.f32.mrb[0].mxu0
    %1159 = vdwg.mxu0
    %v1160 = vadd.f32 %v324, %v1157
    %v1161 = vxor.u32 %v1160, 2147483648
    %v1162 = vmul.f32 %v1161, 1.442695
    %v1163 = vpow.pop %v1162
    %v1164 = vadd.f32 %v1163, 1.0
    %v1165 = vrcp.pop %v1164
    %v1166 = vmul.f32 1.0, %v1165
    %1168 = vrot.lane.b32.xlu0 %v1157, 64
    %v1169 = vpop.permute.xlu0 %1168
    %v1171 = vmul.f32 %v1166, %v1169
    %1173 = vrot.lane.b32.xlu0 %v1171, 64
    %v1174 = vpop.permute.xlu0 %1173
    %v1176 = vadd.f32 %v324, %v1174
    %v1177 = vtanh.pop %v1176
    %v1178 = vsub.f32 1.0, %v1166
    %1180 = vrot.lane.b32.xlu0 %v1177, 96
    %v1181 = vpop.permute.xlu0 %1180
    %v1183 = vmul.f32 %v1178, %v1181
    %v1184 = vmul.f32 %v1166, %v1080
    %v1185 = vadd.f32 %v1183, %v1184
    %v1187 = vrot.slane %v1185, 2
    %v1189 = vsel %vm162, %v453, %v1187
    %v1190 = vrot.slane %v1080, 2
    %v1192 = vsel %vm162, %v558, %v1190
    %v1193 = vrot.slane %v975, 2
    %v1195 = vsel %vm162, %v663, %v1193
    %v1196 = vrot.slane %v870, 2
    %v1198 = vsel %vm162, %v768, %v1196
    %v1199 = vrot.slane %v765, 2
    %v1201 = vsel %vm162, %v873, %v1199
    %v1202 = vrot.slane %v660, 2
    %v1204 = vsel %vm162, %v978, %v1202
    %v1205 = vrot.slane %v555, 2
    %v1207 = vsel %vm162, %v1083, %v1205
    %1208 = vrot.lane.b32.xlu0 %v1185, 96
    %v1209 = vpop.permute.xlu0 %1208
    %v1211 = vrot.slane %v450, 2
    %v1213 = vsel %vm162, %v1209, %v1211
    %v1215 = vrot.slane %v1192, 6
    %v1218 = vrot.slane %v1195, 4
    %v1221 = vrot.slane %v1198, 2
    %v1224 = vrot.slane %v1204, 6
    %v1227 = vrot.slane %v1207, 4
    %v1230 = vrot.slane %v1213, 2
    %v1232 = vsel %vm256, %v1189, %v1215
    %vm1233 = vcmask 1043456
    %v1234 = vsel %vm1233, %v1232, %v1218
    %vm1235 = vcmask 1045504
    %v1236 = vsel %vm1235, %v1234, %v1221
    %v1237 = vsel %vm256, %v1201, %v1224
    %v1238 = vsel %vm1233, %v1237, %v1227
    %v1239 = vsel %vm1235, %v1238, %v1230
    %v1240 = vld [vmem:[%s2 + $0x40] sm:$0xff]
    %v1241 = vld [vmem:[%s2 + $0x48] sm:$0xff]
    %v1242 = vld [vmem:[%s2 + $0x50] sm:$0xff]
    %v1243 = vld [vmem:[%s2 + $0x58] sm:$0xff]
    %v1244 = vld [vmem:[%s2 + $0x60] sm:$0xff]
    %v1245 = vld [vmem:[%s2 + $0x68] sm:$0xff]
    %v1246 = vld [vmem:[%s2 + $0x70] sm:$0xff]
    %v1247 = vld [vmem:[%s2 + $0x78] sm:$0xff]
    %v1248 = vld [vmem:[%s2 + $0x80] sm:$0xff]
    %v1249 = vld [vmem:[%s2 + $0x88] sm:$0xff]
    %v1250 = vld [vmem:[%s2 + $0x90] sm:$0xff]
    %v1251 = vld [vmem:[%s2 + $0x98] sm:$0xff]
    %v1252 = vld [vmem:[%s2 + $0xa0] sm:$0xff]
    %v1253 = vld [vmem:[%s2 + $0xa8] sm:$0xff]
    %v1254 = vld [vmem:[%s2 + $0xb0] sm:$0xff]
    %v1255 = vld [vmem:[%s2 + $0xb8] sm:$0xff]
    %s1256 = scalar_lea.vmem %s4, 1
    %v1257 = vld [vmem:[%s1256] ss:$2 sm:$0x3]
    %v1259 = vlaneseq
    %v1260 = vshrl.u32 %v1259, 7
    %v1261 = vsub.s32 0, %v1260
    %v1262 = vrot.slane %v1257, %v1261
    %v1263 = vlaneseq
    %v1264 = vshrl.u32 %v1263, 7
    %v1265 = vsub.s32 1, %v1264
    %v1266 = vrot.slane %v1257, %v1265
    %v1270 = vsel %vm50, %v1236, 0
    %v1273 = vsel %vm50, %v1239, 0
    %1275 = vmatprep.subr.mxu0 %v1241
    %1276 = vmatpush1.msra.mxu0 %v1240
    %1277 = vmatprep.subr.mxu0 %v1243
    %1278 = vmatpush1.msra.mxu0 %v1242
    %1279 = vmatprep.subr.mxu0 %v1245
    %1280 = vmatpush1.msra.mxu0 %v1244
    %1281 = vmatprep.subr.mxu0 %v1247
    %1282 = vmatpush1.msra.mxu0 %v1246
    %1283 = vmatprep.subr.mxu0 %v1249
    %1284 = vmatpush1.msra.mxu0 %v1248
    %1285 = vmatprep.subr.mxu0 %v1251
    %1286 = vmatpush1.msra.mxu0 %v1250
    %1287 = vmatprep.subr.mxu0 %v1253
    %1288 = vmatpush1.msra.mxu0 %v1252
    %1289 = vmatprep.subr.mxu0 %v1255
    %1290 = vmatpush1.msra.mxu0 %v1254
    %1291 = vmatprep.subr.mxu0 0.0
    %1292 = vmatpush1.msra.mxu0 0.0
    %1293 = vmatprep.subr.mxu0 0.0
    %1294 = vmatpush1.msra.mxu0 0.0
    %1295 = vmatprep.subr.mxu0 0.0
    %1296 = vmatpush1.msra.mxu0 0.0
    %1297 = vmatprep.subr.mxu0 0.0
    %1298 = vmatpush1.msra.mxu0 0.0
    %1299 = vmatprep.subr.mxu0 0.0
    %1300 = vmatpush1.msra.mxu0 0.0
    %1301 = vmatprep.subr.mxu0 0.0
    %1302 = vmatpush1.msra.mxu0 0.0
    %1303 = vmatprep.subr.mxu0 0.0
    %1304 = vmatpush1.msra.mxu0 0.0
    %1305 = vmatprep.subr.mxu0 0.0
    %1306 = vmatpush1.msra.mxu0 0.0
    %1307 = vmatprep.subr.mxu0 0.0
    %1308 = vmatpush1.msra.mxu0 0.0
    %1309 = vmatprep.subr.mxu0 0.0
    %1310 = vmatpush1.msra.mxu0 0.0
    %1311 = vmatprep.subr.mxu0 0.0
    %1312 = vmatpush1.msra.mxu0 0.0
    %1313 = vmatprep.subr.mxu0 0.0
    %1314 = vmatpush1.msra.mxu0 0.0
    %1315 = vmatprep.subr.mxu0 0.0
    %1316 = vmatpush1.msra.mxu0 0.0
    %1317 = vmatprep.subr.mxu0 0.0
    %1318 = vmatpush1.msra.mxu0 0.0
    %1319 = vmatprep.subr.mxu0 0.0
    %1320 = vmatpush1.msra.mxu0 0.0
    %1321 = vmatprep.subr.mxu0 0.0
    %1322 = vmatpush1.msra.mxu0 0.0
    %1323 = vmatprep.subr.mxu0 0.0
    %1324 = vmatpush1.msra.mxu0 0.0
    %1325 = vmatprep.subr.mxu0 0.0
    %1326 = vmatpush1.msra.mxu0 0.0
    %1327 = vmatprep.subr.mxu0 0.0
    %1328 = vmatpush1.msra.mxu0 0.0
    %1329 = vmatprep.subr.mxu0 0.0
    %1330 = vmatpush1.msra.mxu0 0.0
    %1331 = vmatprep.subr.mxu0 0.0
    %1332 = vmatpush1.msra.mxu0 0.0
    %1333 = vmatprep.subr.mxu0 0.0
    %1334 = vmatpush1.msra.mxu0 0.0
    %1335 = vmatprep.subr.mxu0 0.0
    %1336 = vmatpush1.msra.mxu0 0.0
    %1337 = vmatprep.subr.mxu0 0.0
    %1338 = vmatpush1.msra.mxu0 0.0
    %1339 = vmatprep.mubr.f32.mxu0 0.0
    %1340 = vmatmul.mubr.f32.gmra.mrb[0].mxu0 %v1270
    %v1341 = vpop.f32.mrb[0].mxu0
    %v1342 = vadd.f32 %v1262, %v1341
    %v1343 = vpop.f32.mrb[0].mxu0
    %v1344 = vadd.f32 %v1266, %v1343
    %1345 = vmatprep.mubr.f32.mxu0 0.0
    %1346 = vmatmul.mubr.f32.gmra.mrb[0].mxu0 %v1273
    %v1347 = vpop.f32.mrb[0].mxu0
    %v1348 = vadd.f32 %v1262, %v1347
    %v1349 = vpop.f32.mrb[0].mxu0
    %v1350 = vadd.f32 %v1266, %v1349
    %1351 = vdwg.mxu0
    %v1354 = vrot.slane %v1348, 4
    %v1355 = vrot.slane %v1350, 4
    %1356 = vrot.lane.b32.xlu0 %v1354, 32
    %v1357 = vpop.permute.xlu0 %1356
    %1358 = vrot.lane.b32.xlu0 %v1355, 32
    %v1359 = vpop.permute.xlu0 %1358
    %v1360 = vsel %vm162, %v1357, %v1359
    %v1362 = vsel %vm256, %v1342, %v1360
    %v1364 = vrot.slane %v1342, 2
    %v1366 = vrot.slane %v1348, 2
    %v1367 = vrot.slane %v1350, 2
    %1368 = vrot.lane.b32.xlu0 %v1366, 32
    %v1369 = vpop.permute.xlu0 %1368
    %1370 = vrot.lane.b32.xlu0 %v1367, 32
    %v1371 = vpop.permute.xlu0 %1370
    %v1372 = vsel %vm162, %v1369, %v1371
    %v1374 = vsel %vm256, %v1364, %v1372
    %v1375 = vrot.slane %v1342, 4
    %1377 = vrot.lane.b32.xlu0 %v1348, 32
    %v1378 = vpop.permute.xlu0 %1377
    %1379 = vrot.lane.b32.xlu0 %v1350, 32
    %v1380 = vpop.permute.xlu0 %1379
    %v1381 = vsel %vm162, %v1378, %v1380
    %v1383 = vsel %vm256, %v1375, %v1381
    %v1384 = vrot.slane %v1342, 6
    %v1386 = vrot.slane %v1348, 6
    %v1387 = vrot.slane %v1350, 6
    %1388 = vrot.lane.b32.xlu0 %v1386, 32
    %v1389 = vpop.permute.xlu0 %1388
    %1390 = vrot.lane.b32.xlu0 %v1387, 32
    %v1391 = vpop.permute.xlu0 %1390
    %v1392 = vsel %vm162, %v1389, %v1391
    %v1394 = vsel %vm256, %v1384, %v1392
    %v1396 = vrot.slane %v1344, 4
    %1397 = vrot.lane.b32.xlu0 %v1375, 32
    %v1398 = vpop.permute.xlu0 %1397
    %1399 = vrot.lane.b32.xlu0 %v1396, 32
    %v1400 = vpop.permute.xlu0 %1399
    %v1401 = vsel %vm162, %v1398, %v1400
    %v1403 = vsel %vm256, %v1348, %v1401
    %v1405 = vrot.slane %v1344, 2
    %1406 = vrot.lane.b32.xlu0 %v1364, 32
    %v1407 = vpop.permute.xlu0 %1406
    %1408 = vrot.lane.b32.xlu0 %v1405, 32
    %v1409 = vpop.permute.xlu0 %1408
    %v1410 = vsel %vm162, %v1407, %v1409
    %v1412 = vsel %vm256, %v1366, %v1410
    %1414 = vrot.lane.b32.xlu0 %v1342, 32
    %v1415 = vpop.permute.xlu0 %1414
    %1416 = vrot.lane.b32.xlu0 %v1344, 32
    %v1417 = vpop.permute.xlu0 %1416
    %v1418 = vsel %vm162, %v1415, %v1417
    %v1420 = vsel %vm256, %v1354, %v1418
    %v1422 = vrot.slane %v1344, 6
    %1423 = vrot.lane.b32.xlu0 %v1384, 32
    %v1424 = vpop.permute.xlu0 %1423
    %1425 = vrot.lane.b32.xlu0 %v1422, 32
    %v1426 = vpop.permute.xlu0 %1425
    %v1427 = vsel %vm162, %v1424, %v1426
    %v1429 = vsel %vm256, %v1386, %v1427
    %v1430 = vld [vmem:[%s3 + $0x40] sm:$0xff]
    %v1431 = vld [vmem:[%s3 + $0x48] sm:$0xff]
    %v1432 = vld [vmem:[%s3 + $0x50] sm:$0xff]
    %v1433 = vld [vmem:[%s3 + $0x58] sm:$0xff]
    %v1434 = vld [vmem:[%s3 + $0x60] sm:$0xff]
    %v1435 = vld [vmem:[%s3 + $0x68] sm:$0xff]
    %v1436 = vld [vmem:[%s3 + $0x70] sm:$0xff]
    %v1437 = vld [vmem:[%s3 + $0x78] sm:$0xff]
    %s1438 = scalar_lea.vmem %s5, 1
    %v1439 = vld [vmem:[%s1438] ss:$2 sm:$0x3]
    %v1441 = vlaneseq
    %v1442 = vshrl.u32 %v1441, 7
    %v1443 = vsub.s32 0, %v1442
    %v1444 = vrot.slane %v1439, %v1443
    %v1446 = vlaneseq
    %v1447 = vshrl.u32 %v1446, 7
    %v1448 = vsub.s32 1, %v1447
    %v1449 = vrot.slane %v1439, %v1448
    %1450 = vrot.lane.b32.xlu0 %v1444, 32
    %v1451 = vpop.permute.xlu0 %1450
    %1452 = vrot.lane.b32.xlu0 %v1449, 32
    %v1453 = vpop.permute.xlu0 %1452
    %v1454 = vsel %vm162, %v1451, %v1453
    %v1456 = vsel %vm256, %v1444, %v1454
    %1457 = vmatprep.subr.mxu0 0.0
    %1458 = vmatpush1.msra.mxu0 %v1430
    %1459 = vmatprep.subr.mxu0 0.0
    %1460 = vmatpush1.msra.mxu0 %v1431
    %1461 = vmatprep.subr.mxu0 0.0
    %1462 = vmatpush1.msra.mxu0 %v1432
    %1463 = vmatprep.subr.mxu0 0.0
    %1464 = vmatpush1.msra.mxu0 %v1433
    %1465 = vmatprep.subr.mxu0 0.0
    %1466 = vmatpush1.msra.mxu0 %v1434
    %1467 = vmatprep.subr.mxu0 0.0
    %1468 = vmatpush1.msra.mxu0 %v1435
    %1469 = vmatprep.subr.mxu0 0.0
    %1470 = vmatpush1.msra.mxu0 %v1436
    %1471 = vmatprep.subr.mxu0 0.0
    %1472 = vmatpush1.msra.mxu0 %v1437
    %1473 = vmatprep.subr.mxu0 0.0
    %1474 = vmatpush1.msra.mxu0 0.0
    %1475 = vmatprep.subr.mxu0 0.0
    %1476 = vmatpush1.msra.mxu0 0.0
    %1477 = vmatprep.subr.mxu0 0.0
    %1478 = vmatpush1.msra.mxu0 0.0
    %1479 = vmatprep.subr.mxu0 0.0
    %1480 = vmatpush1.msra.mxu0 0.0
    %1481 = vmatprep.subr.mxu0 0.0
    %1482 = vmatpush1.msra.mxu0 0.0
    %1483 = vmatprep.subr.mxu0 0.0
    %1484 = vmatpush1.msra.mxu0 0.0
    %1485 = vmatprep.subr.mxu0 0.0
    %1486 = vmatpush1.msra.mxu0 0.0
    %1487 = vmatprep.subr.mxu0 0.0
    %1488 = vmatpush1.msra.mxu0 0.0
    %1489 = vmatprep.subr.mxu0 0.0
    %1490 = vmatpush1.msra.mxu0 0.0
    %1491 = vmatprep.subr.mxu0 0.0
    %1492 = vmatpush1.msra.mxu0 0.0
    %1493 = vmatprep.subr.mxu0 0.0
    %1494 = vmatpush1.msra.mxu0 0.0
    %1495 = vmatprep.subr.mxu0 0.0
    %1496 = vmatpush1.msra.mxu0 0.0
    %1497 = vmatprep.subr.mxu0 0.0
    %1498 = vmatpush1.msra.mxu0 0.0
    %1499 = vmatprep.subr.mxu0 0.0
    %1500 = vmatpush1.msra.mxu0 0.0
    %1501 = vmatprep.subr.mxu0 0.0
    %1502 = vmatpush1.msra.mxu0 0.0
    %1503 = vmatprep.subr.mxu0 0.0
    %1504 = vmatpush1.msra.mxu0 0.0
    %1505 = vmatprep.subr.mxu0 0.0
    %1506 = vmatpush1.msra.mxu0 0.0
    %1507 = vmatprep.subr.mxu0 0.0
    %1508 = vmatpush1.msra.mxu0 0.0
    %1509 = vmatprep.subr.mxu0 0.0
    %1510 = vmatpush1.msra.mxu0 0.0
    %1511 = vmatprep.subr.mxu0 0.0
    %1512 = vmatpush1.msra.mxu0 0.0
    %1513 = vmatprep.subr.mxu0 0.0
    %1514 = vmatpush1.msra.mxu0 0.0
    %1515 = vmatprep.subr.mxu0 0.0
    %1516 = vmatpush1.msra.mxu0 0.0
    %1517 = vmatprep.subr.mxu0 0.0
    %1518 = vmatpush1.msra.mxu0 0.0
    %1519 = vmatprep.subr.mxu0 0.0
    %1520 = vmatpush1.msra.mxu0 0.0
    %1521 = vmatprep.mubr.f32.mxu0 0.0
    %1522 = vmatmul.mubr.f32.gmra.mrb[0].mxu0 %v353
    %v1523 = vpop.f32.mrb[0].mxu0
    %v1524 = vadd.f32 %v1456, %v1523
    %v1525 = vpop.f32.mrb[0].mxu0
    %1526 = vdwg.mxu0
    %v1527 = vadd.f32 %v1362, %v1524
    %v1528 = vxor.u32 %v1527, 2147483648
    %v1529 = vmul.f32 %v1528, 1.442695
    %v1530 = vpow.pop %v1529
    %v1531 = vadd.f32 %v1530, 1.0
    %v1532 = vrcp.pop %v1531
    %v1533 = vmul.f32 1.0, %v1532
    %1535 = vrot.lane.b32.xlu0 %v1524, 64
    %v1536 = vpop.permute.xlu0 %1535
    %v1538 = vmul.f32 %v1533, %v1536
    %1540 = vrot.lane.b32.xlu0 %v1538, 64
    %v1541 = vpop.permute.xlu0 %1540
    %v1543 = vadd.f32 %v1362, %v1541
    %v1544 = vtanh.pop %v1543
    %v1545 = vsub.f32 1.0, %v1533
    %1547 = vrot.lane.b32.xlu0 %v1544, 96
    %v1548 = vpop.permute.xlu0 %1547
    %v1550 = vmul.f32 %v1545, %v1548
    %v1551 = vmul.f32 %v1533, 0.0
    %v1552 = vadd.f32 %v1550, %v1551
    %1554 = vrot.lane.b32.xlu0 %v1552, 96
    %v1555 = vpop.permute.xlu0 %1554
    %v1557 = vsel %vm162, %v1555, %v1552
    %v1558 = vmul.f32 %v1557, %v141
    %v1560 = vsel %vm50, %v1558, 0
    %1562 = vmatprep.subr.mxu0 0.0
    %1563 = vmatpush1.msra.mxu0 %v1430
    %1564 = vmatprep.subr.mxu0 0.0
    %1565 = vmatpush1.msra.mxu0 %v1431
    %1566 = vmatprep.subr.mxu0 0.0
    %1567 = vmatpush1.msra.mxu0 %v1432
    %1568 = vmatprep.subr.mxu0 0.0
    %1569 = vmatpush1.msra.mxu0 %v1433
    %1570 = vmatprep.subr.mxu0 0.0
    %1571 = vmatpush1.msra.mxu0 %v1434
    %1572 = vmatprep.subr.mxu0 0.0
    %1573 = vmatpush1.msra.mxu0 %v1435
    %1574 = vmatprep.subr.mxu0 0.0
    %1575 = vmatpush1.msra.mxu0 %v1436
    %1576 = vmatprep.subr.mxu0 0.0
    %1577 = vmatpush1.msra.mxu0 %v1437
    %1578 = vmatprep.subr.mxu0 0.0
    %1579 = vmatpush1.msra.mxu0 0.0
    %1580 = vmatprep.subr.mxu0 0.0
    %1581 = vmatpush1.msra.mxu0 0.0
    %1582 = vmatprep.subr.mxu0 0.0
    %1583 = vmatpush1.msra.mxu0 0.0
    %1584 = vmatprep.subr.mxu0 0.0
    %1585 = vmatpush1.msra.mxu0 0.0
    %1586 = vmatprep.subr.mxu0 0.0
    %1587 = vmatpush1.msra.mxu0 0.0
    %1588 = vmatprep.subr.mxu0 0.0
    %1589 = vmatpush1.msra.mxu0 0.0
    %1590 = vmatprep.subr.mxu0 0.0
    %1591 = vmatpush1.msra.mxu0 0.0
    %1592 = vmatprep.subr.mxu0 0.0
    %1593 = vmatpush1.msra.mxu0 0.0
    %1594 = vmatprep.subr.mxu0 0.0
    %1595 = vmatpush1.msra.mxu0 0.0
    %1596 = vmatprep.subr.mxu0 0.0
    %1597 = vmatpush1.msra.mxu0 0.0
    %1598 = vmatprep.subr.mxu0 0.0
    %1599 = vmatpush1.msra.mxu0 0.0
    %1600 = vmatprep.subr.mxu0 0.0
    %1601 = vmatpush1.msra.mxu0 0.0
    %1602 = vmatprep.subr.mxu0 0.0
    %1603 = vmatpush1.msra.mxu0 0.0
    %1604 = vmatprep.subr.mxu0 0.0
    %1605 = vmatpush1.msra.mxu0 0.0
    %1606 = vmatprep.subr.mxu0 0.0
    %1607 = vmatpush1.msra.mxu0 0.0
    %1608 = vmatprep.subr.mxu0 0.0
    %1609 = vmatpush1.msra.mxu0 0.0
    %1610 = vmatprep.subr.mxu0 0.0
    %1611 = vmatpush1.msra.mxu0 0.0
    %1612 = vmatprep.subr.mxu0 0.0
    %1613 = vmatpush1.msra.mxu0 0.0
    %1614 = vmatprep.subr.mxu0 0.0
    %1615 = vmatpush1.msra.mxu0 0.0
    %1616 = vmatprep.subr.mxu0 0.0
    %1617 = vmatpush1.msra.mxu0 0.0
    %1618 = vmatprep.subr.mxu0 0.0
    %1619 = vmatpush1.msra.mxu0 0.0
    %1620 = vmatprep.subr.mxu0 0.0
    %1621 = vmatpush1.msra.mxu0 0.0
    %1622 = vmatprep.subr.mxu0 0.0
    %1623 = vmatpush1.msra.mxu0 0.0
    %1624 = vmatprep.subr.mxu0 0.0
    %1625 = vmatpush1.msra.mxu0 0.0
    %1626 = vmatprep.mubr.f32.mxu0 0.0
    %1627 = vmatmul.mubr.f32.gmra.mrb[0].mxu0 %v1560
    %v1628 = vpop.f32.mrb[0].mxu0
    %v1629 = vadd.f32 %v1456, %v1628
    %v1630 = vpop.f32.mrb[0].mxu0
    %1631 = vdwg.mxu0
    %v1632 = vadd.f32 %v1374, %v1629
    %v1633 = vxor.u32 %v1632, 2147483648
    %v1634 = vmul.f32 %v1633, 1.442695
    %v1635 = vpow.pop %v1634
    %v1636 = vadd.f32 %v1635, 1.0
    %v1637 = vrcp.pop %v1636
    %v1638 = vmul.f32 1.0, %v1637
    %1640 = vrot.lane.b32.xlu0 %v1629, 64
    %v1641 = vpop.permute.xlu0 %1640
    %v1643 = vmul.f32 %v1638, %v1641
    %1645 = vrot.lane.b32.xlu0 %v1643, 64
    %v1646 = vpop.permute.xlu0 %1645
    %v1648 = vadd.f32 %v1374, %v1646
    %v1649 = vtanh.pop %v1648
    %v1650 = vsub.f32 1.0, %v1638
    %1652 = vrot.lane.b32.xlu0 %v1649, 96
    %v1653 = vpop.permute.xlu0 %1652
    %v1655 = vmul.f32 %v1650, %v1653
    %v1656 = vmul.f32 %v1638, %v1552
    %v1657 = vadd.f32 %v1655, %v1656
    %1659 = vrot.lane.b32.xlu0 %v1657, 96
    %v1660 = vpop.permute.xlu0 %1659
    %v1662 = vsel %vm162, %v1660, %v1657
    %v1663 = vmul.f32 %v1662, %v141
    %v1665 = vsel %vm50, %v1663, 0
    %1667 = vmatprep.subr.mxu0 0.0
    %1668 = vmatpush1.msra.mxu0 %v1430
    %1669 = vmatprep.subr.mxu0 0.0
    %1670 = vmatpush1.msra.mxu0 %v1431
    %1671 = vmatprep.subr.mxu0 0.0
    %1672 = vmatpush1.msra.mxu0 %v1432
    %1673 = vmatprep.subr.mxu0 0.0
    %1674 = vmatpush1.msra.mxu0 %v1433
    %1675 = vmatprep.subr.mxu0 0.0
    %1676 = vmatpush1.msra.mxu0 %v1434
    %1677 = vmatprep.subr.mxu0 0.0
    %1678 = vmatpush1.msra.mxu0 %v1435
    %1679 = vmatprep.subr.mxu0 0.0
    %1680 = vmatpush1.msra.mxu0 %v1436
    %1681 = vmatprep.subr.mxu0 0.0
    %1682 = vmatpush1.msra.mxu0 %v1437
    %1683 = vmatprep.subr.mxu0 0.0
    %1684 = vmatpush1.msra.mxu0 0.0
    %1685 = vmatprep.subr.mxu0 0.0
    %1686 = vmatpush1.msra.mxu0 0.0
    %1687 = vmatprep.subr.mxu0 0.0
    %1688 = vmatpush1.msra.mxu0 0.0
    %1689 = vmatprep.subr.mxu0 0.0
    %1690 = vmatpush1.msra.mxu0 0.0
    %1691 = vmatprep.subr.mxu0 0.0
    %1692 = vmatpush1.msra.mxu0 0.0
    %1693 = vmatprep.subr.mxu0 0.0
    %1694 = vmatpush1.msra.mxu0 0.0
    %1695 = vmatprep.subr.mxu0 0.0
    %1696 = vmatpush1.msra.mxu0 0.0
    %1697 = vmatprep.subr.mxu0 0.0
    %1698 = vmatpush1.msra.mxu0 0.0
    %1699 = vmatprep.subr.mxu0 0.0
    %1700 = vmatpush1.msra.mxu0 0.0
    %1701 = vmatprep.subr.mxu0 0.0
    %1702 = vmatpush1.msra.mxu0 0.0
    %1703 = vmatprep.subr.mxu0 0.0
    %1704 = vmatpush1.msra.mxu0 0.0
    %1705 = vmatprep.subr.mxu0 0.0
    %1706 = vmatpush1.msra.mxu0 0.0
    %1707 = vmatprep.subr.mxu0 0.0
    %1708 = vmatpush1.msra.mxu0 0.0
    %1709 = vmatprep.subr.mxu0 0.0
    %1710 = vmatpush1.msra.mxu0 0.0
    %1711 = vmatprep.subr.mxu0 0.0
    %1712 = vmatpush1.msra.mxu0 0.0
    %1713 = vmatprep.subr.mxu0 0.0
    %1714 = vmatpush1.msra.mxu0 0.0
    %1715 = vmatprep.subr.mxu0 0.0
    %1716 = vmatpush1.msra.mxu0 0.0
    %1717 = vmatprep.subr.mxu0 0.0
    %1718 = vmatpush1.msra.mxu0 0.0
    %1719 = vmatprep.subr.mxu0 0.0
    %1720 = vmatpush1.msra.mxu0 0.0
    %1721 = vmatprep.subr.mxu0 0.0
    %1722 = vmatpush1.msra.mxu0 0.0
    %1723 = vmatprep.subr.mxu0 0.0
    %1724 = vmatpush1.msra.mxu0 0.0
    %1725 = vmatprep.subr.mxu0 0.0
    %1726 = vmatpush1.msra.mxu0 0.0
    %1727 = vmatprep.subr.mxu0 0.0
    %1728 = vmatpush1.msra.mxu0 0.0
    %1729 = vmatprep.subr.mxu0 0.0
    %1730 = vmatpush1.msra.mxu0 0.0
    %1731 = vmatprep.mubr.f32.mxu0 0.0
    %1732 = vmatmul.mubr.f32.gmra.mrb[0].mxu0 %v1665
    %v1733 = vpop.f32.mrb[0].mxu0
    %v1734 = vadd.f32 %v1456, %v1733
    %v1735 = vpop.f32.mrb[0].mxu0
    %1736 = vdwg.mxu0
    %v1737 = vadd.f32 %v1383, %v1734
    %v1738 = vxor.u32 %v1737, 2147483648
    %v1739 = vmul.f32 %v1738, 1.442695
    %v1740 = vpow.pop %v1739
    %v1741 = vadd.f32 %v1740, 1.0
    %v1742 = vrcp.pop %v1741
    %v1743 = vmul.f32 1.0, %v1742
    %1745 = vrot.lane.b32.xlu0 %v1734, 64
    %v1746 = vpop.permute.xlu0 %1745
    %v1748 = vmul.f32 %v1743, %v1746
    %1750 = vrot.lane.b32.xlu0 %v1748, 64
    %v1751 = vpop.permute.xlu0 %1750
    %v1753 = vadd.f32 %v1383, %v1751
    %v1754 = vtanh.pop %v1753
    %v1755 = vsub.f32 1.0, %v1743
    %1757 = vrot.lane.b32.xlu0 %v1754, 96
    %v1758 = vpop.permute.xlu0 %1757
    %v1760 = vmul.f32 %v1755, %v1758
    %v1761 = vmul.f32 %v1743, %v1657
    %v1762 = vadd.f32 %v1760, %v1761
    %1764 = vrot.lane.b32.xlu0 %v1762, 96
    %v1765 = vpop.permute.xlu0 %1764
    %v1767 = vsel %vm162, %v1765, %v1762
    %v1768 = vmul.f32 %v1767, %v141
    %v1770 = vsel %vm50, %v1768, 0
    %1772 = vmatprep.subr.mxu0 0.0
    %1773 = vmatpush1.msra.mxu0 %v1430
    %1774 = vmatprep.subr.mxu0 0.0
    %1775 = vmatpush1.msra.mxu0 %v1431
    %1776 = vmatprep.subr.mxu0 0.0
    %1777 = vmatpush1.msra.mxu0 %v1432
    %1778 = vmatprep.subr.mxu0 0.0
    %1779 = vmatpush1.msra.mxu0 %v1433
    %1780 = vmatprep.subr.mxu0 0.0
    %1781 = vmatpush1.msra.mxu0 %v1434
    %1782 = vmatprep.subr.mxu0 0.0
    %1783 = vmatpush1.msra.mxu0 %v1435
    %1784 = vmatprep.subr.mxu0 0.0
    %1785 = vmatpush1.msra.mxu0 %v1436
    %1786 = vmatprep.subr.mxu0 0.0
    %1787 = vmatpush1.msra.mxu0 %v1437
    %1788 = vmatprep.subr.mxu0 0.0
    %1789 = vmatpush1.msra.mxu0 0.0
    %1790 = vmatprep.subr.mxu0 0.0
    %1791 = vmatpush1.msra.mxu0 0.0
    %1792 = vmatprep.subr.mxu0 0.0
    %1793 = vmatpush1.msra.mxu0 0.0
    %1794 = vmatprep.subr.mxu0 0.0
    %1795 = vmatpush1.msra.mxu0 0.0
    %1796 = vmatprep.subr.mxu0 0.0
    %1797 = vmatpush1.msra.mxu0 0.0
    %1798 = vmatprep.subr.mxu0 0.0
    %1799 = vmatpush1.msra.mxu0 0.0
    %1800 = vmatprep.subr.mxu0 0.0
    %1801 = vmatpush1.msra.mxu0 0.0
    %1802 = vmatprep.subr.mxu0 0.0
    %1803 = vmatpush1.msra.mxu0 0.0
    %1804 = vmatprep.subr.mxu0 0.0
    %1805 = vmatpush1.msra.mxu0 0.0
    %1806 = vmatprep.subr.mxu0 0.0
    %1807 = vmatpush1.msra.mxu0 0.0
    %1808 = vmatprep.subr.mxu0 0.0
    %1809 = vmatpush1.msra.mxu0 0.0
    %1810 = vmatprep.subr.mxu0 0.0
    %1811 = vmatpush1.msra.mxu0 0.0
    %1812 = vmatprep.subr.mxu0 0.0
    %1813 = vmatpush1.msra.mxu0 0.0
    %1814 = vmatprep.subr.mxu0 0.0
    %1815 = vmatpush1.msra.mxu0 0.0
    %1816 = vmatprep.subr.mxu0 0.0
    %1817 = vmatpush1.msra.mxu0 0.0
    %1818 = vmatprep.subr.mxu0 0.0
    %1819 = vmatpush1.msra.mxu0 0.0
    %1820 = vmatprep.subr.mxu0 0.0
    %1821 = vmatpush1.msra.mxu0 0.0
    %1822 = vmatprep.subr.mxu0 0.0
    %1823 = vmatpush1.msra.mxu0 0.0
    %1824 = vmatprep.subr.mxu0 0.0
    %1825 = vmatpush1.msra.mxu0 0.0
    %1826 = vmatprep.subr.mxu0 0.0
    %1827 = vmatpush1.msra.mxu0 0.0
    %1828 = vmatprep.subr.mxu0 0.0
    %1829 = vmatpush1.msra.mxu0 0.0
    %1830 = vmatprep.subr.mxu0 0.0
    %1831 = vmatpush1.msra.mxu0 0.0
    %1832 = vmatprep.subr.mxu0 0.0
    %1833 = vmatpush1.msra.mxu0 0.0
    %1834 = vmatprep.subr.mxu0 0.0
    %1835 = vmatpush1.msra.mxu0 0.0
    %1836 = vmatprep.mubr.f32.mxu0 0.0
    %1837 = vmatmul.mubr.f32.gmra.mrb[0].mxu0 %v1770
    %v1838 = vpop.f32.mrb[0].mxu0
    %v1839 = vadd.f32 %v1456, %v1838
    %v1840 = vpop.f32.mrb[0].mxu0
    %1841 = vdwg.mxu0
    %v1842 = vadd.f32 %v1394, %v1839
    %v1843 = vxor.u32 %v1842, 2147483648
    %v1844 = vmul.f32 %v1843, 1.442695
    %v1845 = vpow.pop %v1844
    %v1846 = vadd.f32 %v1845, 1.0
    %v1847 = vrcp.pop %v1846
    %v1848 = vmul.f32 1.0, %v1847
    %1850 = vrot.lane.b32.xlu0 %v1839, 64
    %v1851 = vpop.permute.xlu0 %1850
    %v1853 = vmul.f32 %v1848, %v1851
    %1855 = vrot.lane.b32.xlu0 %v1853, 64
    %v1856 = vpop.permute.xlu0 %1855
    %v1858 = vadd.f32 %v1394, %v1856
    %v1859 = vtanh.pop %v1858
    %v1860 = vsub.f32 1.0, %v1848
    %1862 = vrot.lane.b32.xlu0 %v1859, 96
    %v1863 = vpop.permute.xlu0 %1862
    %v1865 = vmul.f32 %v1860, %v1863
    %v1866 = vmul.f32 %v1848, %v1762
    %v1867 = vadd.f32 %v1865, %v1866
    %1869 = vrot.lane.b32.xlu0 %v1867, 96
    %v1870 = vpop.permute.xlu0 %1869
    %v1872 = vsel %vm162, %v1870, %v1867
    %v1873 = vmul.f32 %v1872, %v141
    %v1875 = vsel %vm50, %v1873, 0
    %1877 = vmatprep.subr.mxu0 0.0
    %1878 = vmatpush1.msra.mxu0 %v1430
    %1879 = vmatprep.subr.mxu0 0.0
    %1880 = vmatpush1.msra.mxu0 %v1431
    %1881 = vmatprep.subr.mxu0 0.0
    %1882 = vmatpush1.msra.mxu0 %v1432
    %1883 = vmatprep.subr.mxu0 0.0
    %1884 = vmatpush1.msra.mxu0 %v1433
    %1885 = vmatprep.subr.mxu0 0.0
    %1886 = vmatpush1.msra.mxu0 %v1434
    %1887 = vmatprep.subr.mxu0 0.0
    %1888 = vmatpush1.msra.mxu0 %v1435
    %1889 = vmatprep.subr.mxu0 0.0
    %1890 = vmatpush1.msra.mxu0 %v1436
    %1891 = vmatprep.subr.mxu0 0.0
    %1892 = vmatpush1.msra.mxu0 %v1437
    %1893 = vmatprep.subr.mxu0 0.0
    %1894 = vmatpush1.msra.mxu0 0.0
    %1895 = vmatprep.subr.mxu0 0.0
    %1896 = vmatpush1.msra.mxu0 0.0
    %1897 = vmatprep.subr.mxu0 0.0
    %1898 = vmatpush1.msra.mxu0 0.0
    %1899 = vmatprep.subr.mxu0 0.0
    %1900 = vmatpush1.msra.mxu0 0.0
    %1901 = vmatprep.subr.mxu0 0.0
    %1902 = vmatpush1.msra.mxu0 0.0
    %1903 = vmatprep.subr.mxu0 0.0
    %1904 = vmatpush1.msra.mxu0 0.0
    %1905 = vmatprep.subr.mxu0 0.0
    %1906 = vmatpush1.msra.mxu0 0.0
    %1907 = vmatprep.subr.mxu0 0.0
    %1908 = vmatpush1.msra.mxu0 0.0
    %1909 = vmatprep.subr.mxu0 0.0
    %1910 = vmatpush1.msra.mxu0 0.0
    %1911 = vmatprep.subr.mxu0 0.0
    %1912 = vmatpush1.msra.mxu0 0.0
    %1913 = vmatprep.subr.mxu0 0.0
    %1914 = vmatpush1.msra.mxu0 0.0
    %1915 = vmatprep.subr.mxu0 0.0
    %1916 = vmatpush1.msra.mxu0 0.0
    %1917 = vmatprep.subr.mxu0 0.0
    %1918 = vmatpush1.msra.mxu0 0.0
    %1919 = vmatprep.subr.mxu0 0.0
    %1920 = vmatpush1.msra.mxu0 0.0
    %1921 = vmatprep.subr.mxu0 0.0
    %1922 = vmatpush1.msra.mxu0 0.0
    %1923 = vmatprep.subr.mxu0 0.0
    %1924 = vmatpush1.msra.mxu0 0.0
    %1925 = vmatprep.subr.mxu0 0.0
    %1926 = vmatpush1.msra.mxu0 0.0
    %1927 = vmatprep.subr.mxu0 0.0
    %1928 = vmatpush1.msra.mxu0 0.0
    %1929 = vmatprep.subr.mxu0 0.0
    %1930 = vmatpush1.msra.mxu0 0.0
    %1931 = vmatprep.subr.mxu0 0.0
    %1932 = vmatpush1.msra.mxu0 0.0
    %1933 = vmatprep.subr.mxu0 0.0
    %1934 = vmatpush1.msra.mxu0 0.0
    %1935 = vmatprep.subr.mxu0 0.0
    %1936 = vmatpush1.msra.mxu0 0.0
    %1937 = vmatprep.subr.mxu0 0.0
    %1938 = vmatpush1.msra.mxu0 0.0
    %1939 = vmatprep.subr.mxu0 0.0
    %1940 = vmatpush1.msra.mxu0 0.0
    %1941 = vmatprep.mubr.f32.mxu0 0.0
    %1942 = vmatmul.mubr.f32.gmra.mrb[0].mxu0 %v1875
    %v1943 = vpop.f32.mrb[0].mxu0
    %v1944 = vadd.f32 %v1456, %v1943
    %v1945 = vpop.f32.mrb[0].mxu0
    %1946 = vdwg.mxu0
    %v1947 = vadd.f32 %v1403, %v1944
    %v1948 = vxor.u32 %v1947, 2147483648
    %v1949 = vmul.f32 %v1948, 1.442695
    %v1950 = vpow.pop %v1949
    %v1951 = vadd.f32 %v1950, 1.0
    %v1952 = vrcp.pop %v1951
    %v1953 = vmul.f32 1.0, %v1952
    %1955 = vrot.lane.b32.xlu0 %v1944, 64
    %v1956 = vpop.permute.xlu0 %1955
    %v1958 = vmul.f32 %v1953, %v1956
    %1960 = vrot.lane.b32.xlu0 %v1958, 64
    %v1961 = vpop.permute.xlu0 %1960
    %v1963 = vadd.f32 %v1403, %v1961
    %v1964 = vtanh.pop %v1963
    %v1965 = vsub.f32 1.0, %v1953
    %1967 = vrot.lane.b32.xlu0 %v1964, 96
    %v1968 = vpop.permute.xlu0 %1967
    %v1970 = vmul.f32 %v1965, %v1968
    %v1971 = vmul.f32 %v1953, %v1867
    %v1972 = vadd.f32 %v1970, %v1971
    %1974 = vrot.lane.b32.xlu0 %v1972, 96
    %v1975 = vpop.permute.xlu0 %1974
    %v1977 = vsel %vm162, %v1975, %v1972
    %v1978 = vmul.f32 %v1977, %v141
    %v1980 = vsel %vm50, %v1978, 0
    %1982 = vmatprep.subr.mxu0 0.0
    %1983 = vmatpush1.msra.mxu0 %v1430
    %1984 = vmatprep.subr.mxu0 0.0
    %1985 = vmatpush1.msra.mxu0 %v1431
    %1986 = vmatprep.subr.mxu0 0.0
    %1987 = vmatpush1.msra.mxu0 %v1432
    %1988 = vmatprep.subr.mxu0 0.0
    %1989 = vmatpush1.msra.mxu0 %v1433
    %1990 = vmatprep.subr.mxu0 0.0
    %1991 = vmatpush1.msra.mxu0 %v1434
    %1992 = vmatprep.subr.mxu0 0.0
    %1993 = vmatpush1.msra.mxu0 %v1435
    %1994 = vmatprep.subr.mxu0 0.0
    %1995 = vmatpush1.msra.mxu0 %v1436
    %1996 = vmatprep.subr.mxu0 0.0
    %1997 = vmatpush1.msra.mxu0 %v1437
    %1998 = vmatprep.subr.mxu0 0.0
    %1999 = vmatpush1.msra.mxu0 0.0
    %2000 = vmatprep.subr.mxu0 0.0
    %2001 = vmatpush1.msra.mxu0 0.0
    %2002 = vmatprep.subr.mxu0 0.0
    %2003 = vmatpush1.msra.mxu0 0.0
    %2004 = vmatprep.subr.mxu0 0.0
    %2005 = vmatpush1.msra.mxu0 0.0
    %2006 = vmatprep.subr.mxu0 0.0
    %2007 = vmatpush1.msra.mxu0 0.0
    %2008 = vmatprep.subr.mxu0 0.0
    %2009 = vmatpush1.msra.mxu0 0.0
    %2010 = vmatprep.subr.mxu0 0.0
    %2011 = vmatpush1.msra.mxu0 0.0
    %2012 = vmatprep.subr.mxu0 0.0
    %2013 = vmatpush1.msra.mxu0 0.0
    %2014 = vmatprep.subr.mxu0 0.0
    %2015 = vmatpush1.msra.mxu0 0.0
    %2016 = vmatprep.subr.mxu0 0.0
    %2017 = vmatpush1.msra.mxu0 0.0
    %2018 = vmatprep.subr.mxu0 0.0
    %2019 = vmatpush1.msra.mxu0 0.0
    %2020 = vmatprep.subr.mxu0 0.0
    %2021 = vmatpush1.msra.mxu0 0.0
    %2022 = vmatprep.subr.mxu0 0.0
    %2023 = vmatpush1.msra.mxu0 0.0
    %2024 = vmatprep.subr.mxu0 0.0
    %2025 = vmatpush1.msra.mxu0 0.0
    %2026 = vmatprep.subr.mxu0 0.0
    %2027 = vmatpush1.msra.mxu0 0.0
    %2028 = vmatprep.subr.mxu0 0.0
    %2029 = vmatpush1.msra.mxu0 0.0
    %2030 = vmatprep.subr.mxu0 0.0
    %2031 = vmatpush1.msra.mxu0 0.0
    %2032 = vmatprep.subr.mxu0 0.0
    %2033 = vmatpush1.msra.mxu0 0.0
    %2034 = vmatprep.subr.mxu0 0.0
    %2035 = vmatpush1.msra.mxu0 0.0
    %2036 = vmatprep.subr.mxu0 0.0
    %2037 = vmatpush1.msra.mxu0 0.0
    %2038 = vmatprep.subr.mxu0 0.0
    %2039 = vmatpush1.msra.mxu0 0.0
    %2040 = vmatprep.subr.mxu0 0.0
    %2041 = vmatpush1.msra.mxu0 0.0
    %2042 = vmatprep.subr.mxu0 0.0
    %2043 = vmatpush1.msra.mxu0 0.0
    %2044 = vmatprep.subr.mxu0 0.0
    %2045 = vmatpush1.msra.mxu0 0.0
    %2046 = vmatprep.mubr.f32.mxu0 0.0
    %2047 = vmatmul.mubr.f32.gmra.mrb[0].mxu0 %v1980
    %v2048 = vpop.f32.mrb[0].mxu0
    %v2049 = vadd.f32 %v1456, %v2048
    %v2050 = vpop.f32.mrb[0].mxu0
    %2051 = vdwg.mxu0
    %v2052 = vadd.f32 %v1412, %v2049
    %v2053 = vxor.u32 %v2052, 2147483648
    %v2054 = vmul.f32 %v2053, 1.442695
    %v2055 = vpow.pop %v2054
    %v2056 = vadd.f32 %v2055, 1.0
    %v2057 = vrcp.pop %v2056
    %v2058 = vmul.f32 1.0, %v2057
    %2060 = vrot.lane.b32.xlu0 %v2049, 64
    %v2061 = vpop.permute.xlu0 %2060
    %v2063 = vmul.f32 %v2058, %v2061
    %2065 = vrot.lane.b32.xlu0 %v2063, 64
    %v2066 = vpop.permute.xlu0 %2065
    %v2068 = vadd.f32 %v1412, %v2066
    %v2069 = vtanh.pop %v2068
    %v2070 = vsub.f32 1.0, %v2058
    %2072 = vrot.lane.b32.xlu0 %v2069, 96
    %v2073 = vpop.permute.xlu0 %2072
    %v2075 = vmul.f32 %v2070, %v2073
    %v2076 = vmul.f32 %v2058, %v1972
    %v2077 = vadd.f32 %v2075, %v2076
    %2079 = vrot.lane.b32.xlu0 %v2077, 96
    %v2080 = vpop.permute.xlu0 %2079
    %v2082 = vsel %vm162, %v2080, %v2077
    %v2083 = vmul.f32 %v2082, %v141
    %v2085 = vsel %vm50, %v2083, 0
    %2087 = vmatprep.subr.mxu0 0.0
    %2088 = vmatpush1.msra.mxu0 %v1430
    %2089 = vmatprep.subr.mxu0 0.0
    %2090 = vmatpush1.msra.mxu0 %v1431
    %2091 = vmatprep.subr.mxu0 0.0
    %2092 = vmatpush1.msra.mxu0 %v1432
    %2093 = vmatprep.subr.mxu0 0.0
    %2094 = vmatpush1.msra.mxu0 %v1433
    %2095 = vmatprep.subr.mxu0 0.0
    %2096 = vmatpush1.msra.mxu0 %v1434
    %2097 = vmatprep.subr.mxu0 0.0
    %2098 = vmatpush1.msra.mxu0 %v1435
    %2099 = vmatprep.subr.mxu0 0.0
    %2100 = vmatpush1.msra.mxu0 %v1436
    %2101 = vmatprep.subr.mxu0 0.0
    %2102 = vmatpush1.msra.mxu0 %v1437
    %2103 = vmatprep.subr.mxu0 0.0
    %2104 = vmatpush1.msra.mxu0 0.0
    %2105 = vmatprep.subr.mxu0 0.0
    %2106 = vmatpush1.msra.mxu0 0.0
    %2107 = vmatprep.subr.mxu0 0.0
    %2108 = vmatpush1.msra.mxu0 0.0
    %2109 = vmatprep.subr.mxu0 0.0
    %2110 = vmatpush1.msra.mxu0 0.0
    %2111 = vmatprep.subr.mxu0 0.0
    %2112 = vmatpush1.msra.mxu0 0.0
    %2113 = vmatprep.subr.mxu0 0.0
    %2114 = vmatpush1.msra.mxu0 0.0
    %2115 = vmatprep.subr.mxu0 0.0
    %2116 = vmatpush1.msra.mxu0 0.0
    %2117 = vmatprep.subr.mxu0 0.0
    %2118 = vmatpush1.msra.mxu0 0.0
    %2119 = vmatprep.subr.mxu0 0.0
    %2120 = vmatpush1.msra.mxu0 0.0
    %2121 = vmatprep.subr.mxu0 0.0
    %2122 = vmatpush1.msra.mxu0 0.0
    %2123 = vmatprep.subr.mxu0 0.0
    %2124 = vmatpush1.msra.mxu0 0.0
    %2125 = vmatprep.subr.mxu0 0.0
    %2126 = vmatpush1.msra.mxu0 0.0
    %2127 = vmatprep.subr.mxu0 0.0
    %2128 = vmatpush1.msra.mxu0 0.0
    %2129 = vmatprep.subr.mxu0 0.0
    %2130 = vmatpush1.msra.mxu0 0.0
    %2131 = vmatprep.subr.mxu0 0.0
    %2132 = vmatpush1.msra.mxu0 0.0
    %2133 = vmatprep.subr.mxu0 0.0
    %2134 = vmatpush1.msra.mxu0 0.0
    %2135 = vmatprep.subr.mxu0 0.0
    %2136 = vmatpush1.msra.mxu0 0.0
    %2137 = vmatprep.subr.mxu0 0.0
    %2138 = vmatpush1.msra.mxu0 0.0
    %2139 = vmatprep.subr.mxu0 0.0
    %2140 = vmatpush1.msra.mxu0 0.0
    %2141 = vmatprep.subr.mxu0 0.0
    %2142 = vmatpush1.msra.mxu0 0.0
    %2143 = vmatprep.subr.mxu0 0.0
    %2144 = vmatpush1.msra.mxu0 0.0
    %2145 = vmatprep.subr.mxu0 0.0
    %2146 = vmatpush1.msra.mxu0 0.0
    %2147 = vmatprep.subr.mxu0 0.0
    %2148 = vmatpush1.msra.mxu0 0.0
    %2149 = vmatprep.subr.mxu0 0.0
    %2150 = vmatpush1.msra.mxu0 0.0
    %2151 = vmatprep.mubr.f32.mxu0 0.0
    %2152 = vmatmul.mubr.f32.gmra.mrb[0].mxu0 %v2085
    %v2153 = vpop.f32.mrb[0].mxu0
    %v2154 = vadd.f32 %v1456, %v2153
    %v2155 = vpop.f32.mrb[0].mxu0
    %2156 = vdwg.mxu0
    %v2157 = vadd.f32 %v1420, %v2154
    %v2158 = vxor.u32 %v2157, 2147483648
    %v2159 = vmul.f32 %v2158, 1.442695
    %v2160 = vpow.pop %v2159
    %v2161 = vadd.f32 %v2160, 1.0
    %v2162 = vrcp.pop %v2161
    %v2163 = vmul.f32 1.0, %v2162
    %2165 = vrot.lane.b32.xlu0 %v2154, 64
    %v2166 = vpop.permute.xlu0 %2165
    %v2168 = vmul.f32 %v2163, %v2166
    %2170 = vrot.lane.b32.xlu0 %v2168, 64
    %v2171 = vpop.permute.xlu0 %2170
    %v2173 = vadd.f32 %v1420, %v2171
    %v2174 = vtanh.pop %v2173
    %v2175 = vsub.f32 1.0, %v2163
    %2177 = vrot.lane.b32.xlu0 %v2174, 96
    %v2178 = vpop.permute.xlu0 %2177
    %v2180 = vmul.f32 %v2175, %v2178
    %v2181 = vmul.f32 %v2163, %v2077
    %v2182 = vadd.f32 %v2180, %v2181
    %2184 = vrot.lane.b32.xlu0 %v2182, 96
    %v2185 = vpop.permute.xlu0 %2184
    %v2187 = vsel %vm162, %v2185, %v2182
    %v2188 = vmul.f32 %v2187, %v141
    %v2190 = vsel %vm50, %v2188, 0
    %2192 = vmatprep.subr.mxu0 0.0
    %2193 = vmatpush1.msra.mxu0 %v1430
    %2194 = vmatprep.subr.mxu0 0.0
    %2195 = vmatpush1.msra.mxu0 %v1431
    %2196 = vmatprep.subr.mxu0 0.0
    %2197 = vmatpush1.msra.mxu0 %v1432
    %2198 = vmatprep.subr.mxu0 0.0
    %2199 = vmatpush1.msra.mxu0 %v1433
    %2200 = vmatprep.subr.mxu0 0.0
    %2201 = vmatpush1.msra.mxu0 %v1434
    %2202 = vmatprep.subr.mxu0 0.0
    %2203 = vmatpush1.msra.mxu0 %v1435
    %2204 = vmatprep.subr.mxu0 0.0
    %2205 = vmatpush1.msra.mxu0 %v1436
    %2206 = vmatprep.subr.mxu0 0.0
    %2207 = vmatpush1.msra.mxu0 %v1437
    %2208 = vmatprep.subr.mxu0 0.0
    %2209 = vmatpush1.msra.mxu0 0.0
    %2210 = vmatprep.subr.mxu0 0.0
    %2211 = vmatpush1.msra.mxu0 0.0
    %2212 = vmatprep.subr.mxu0 0.0
    %2213 = vmatpush1.msra.mxu0 0.0
    %2214 = vmatprep.subr.mxu0 0.0
    %2215 = vmatpush1.msra.mxu0 0.0
    %2216 = vmatprep.subr.mxu0 0.0
    %2217 = vmatpush1.msra.mxu0 0.0
    %2218 = vmatprep.subr.mxu0 0.0
    %2219 = vmatpush1.msra.mxu0 0.0
    %2220 = vmatprep.subr.mxu0 0.0
    %2221 = vmatpush1.msra.mxu0 0.0
    %2222 = vmatprep.subr.mxu0 0.0
    %2223 = vmatpush1.msra.mxu0 0.0
    %2224 = vmatprep.subr.mxu0 0.0
    %2225 = vmatpush1.msra.mxu0 0.0
    %2226 = vmatprep.subr.mxu0 0.0
    %2227 = vmatpush1.msra.mxu0 0.0
    %2228 = vmatprep.subr.mxu0 0.0
    %2229 = vmatpush1.msra.mxu0 0.0
    %2230 = vmatprep.subr.mxu0 0.0
    %2231 = vmatpush1.msra.mxu0 0.0
    %2232 = vmatprep.subr.mxu0 0.0
    %2233 = vmatpush1.msra.mxu0 0.0
    %2234 = vmatprep.subr.mxu0 0.0
    %2235 = vmatpush1.msra.mxu0 0.0
    %2236 = vmatprep.subr.mxu0 0.0
    %2237 = vmatpush1.msra.mxu0 0.0
    %2238 = vmatprep.subr.mxu0 0.0
    %2239 = vmatpush1.msra.mxu0 0.0
    %2240 = vmatprep.subr.mxu0 0.0
    %2241 = vmatpush1.msra.mxu0 0.0
    %2242 = vmatprep.subr.mxu0 0.0
    %2243 = vmatpush1.msra.mxu0 0.0
    %2244 = vmatprep.subr.mxu0 0.0
    %2245 = vmatpush1.msra.mxu0 0.0
    %2246 = vmatprep.subr.mxu0 0.0
    %2247 = vmatpush1.msra.mxu0 0.0
    %2248 = vmatprep.subr.mxu0 0.0
    %2249 = vmatpush1.msra.mxu0 0.0
    %2250 = vmatprep.subr.mxu0 0.0
    %2251 = vmatpush1.msra.mxu0 0.0
    %2252 = vmatprep.subr.mxu0 0.0
    %2253 = vmatpush1.msra.mxu0 0.0
    %2254 = vmatprep.subr.mxu0 0.0
    %2255 = vmatpush1.msra.mxu0 0.0
    %2256 = vmatprep.mubr.f32.mxu0 0.0
    %2257 = vmatmul.mubr.f32.gmra.mrb[0].mxu0 %v2190
    %v2258 = vpop.f32.mrb[0].mxu0
    %v2259 = vadd.f32 %v1456, %v2258
    %v2260 = vpop.f32.mrb[0].mxu0
    %2261 = vdwg.mxu0
    %v2262 = vadd.f32 %v1429, %v2259
    %v2263 = vxor.u32 %v2262, 2147483648
    %v2264 = vmul.f32 %v2263, 1.442695
    %v2265 = vpow.pop %v2264
    %v2266 = vadd.f32 %v2265, 1.0
    %v2267 = vrcp.pop %v2266
    %v2268 = vmul.f32 1.0, %v2267
    %2270 = vrot.lane.b32.xlu0 %v2259, 64
    %v2271 = vpop.permute.xlu0 %2270
    %v2273 = vmul.f32 %v2268, %v2271
    %2275 = vrot.lane.b32.xlu0 %v2273, 64
    %v2276 = vpop.permute.xlu0 %2275
    %v2278 = vadd.f32 %v1429, %v2276
    %v2279 = vtanh.pop %v2278
    %v2280 = vsub.f32 1.0, %v2268
    %2282 = vrot.lane.b32.xlu0 %v2279, 96
    %v2283 = vpop.permute.xlu0 %2282
    %v2285 = vmul.f32 %v2280, %v2283
    %v2286 = vmul.f32 %v2268, %v2182
    %v2287 = vadd.f32 %v2285, %v2286
    %v2289 = vrot.slane %v2287, 2
    %v2291 = vrot.slane %v1552, 1
    %2292 = vrot.lane.b32.xlu0 %v2291, 32
    %v2293 = vpop.permute.xlu0 %2292
    %v2295 = vrot.slane %v2287, 3
    %2296 = vrot.lane.b32.xlu0 %v2295, 64
    %v2297 = vpop.permute.xlu0 %2296
    %v2299 = vsel %vm162, %v1555, %v2289
    %v2300 = vsel %vm50, %v2299, %v2293
    %vm2301 = vcmask 785408
    %v2302 = vsel %vm2301, %v2300, %v2297
    %v2303 = vrot.slane %v2182, 2
    %v2305 = vrot.slane %v1657, 1
    %2306 = vrot.lane.b32.xlu0 %v2305, 32
    %v2307 = vpop.permute.xlu0 %2306
    %v2309 = vrot.slane %v2182, 3
    %2310 = vrot.lane.b32.xlu0 %v2309, 64
    %v2311 = vpop.permute.xlu0 %2310
    %v2313 = vsel %vm162, %v1660, %v2303
    %v2314 = vsel %vm50, %v2313, %v2307
    %v2315 = vsel %vm2301, %v2314, %v2311
    %v2316 = vrot.slane %v2077, 2
    %v2318 = vrot.slane %v1762, 1
    %2319 = vrot.lane.b32.xlu0 %v2318, 32
    %v2320 = vpop.permute.xlu0 %2319
    %v2322 = vrot.slane %v2077, 3
    %2323 = vrot.lane.b32.xlu0 %v2322, 64
    %v2324 = vpop.permute.xlu0 %2323
    %v2326 = vsel %vm162, %v1765, %v2316
    %v2327 = vsel %vm50, %v2326, %v2320
    %v2328 = vsel %vm2301, %v2327, %v2324
    %v2329 = vrot.slane %v1972, 2
    %v2331 = vrot.slane %v1867, 1
    %2332 = vrot.lane.b32.xlu0 %v2331, 32
    %v2333 = vpop.permute.xlu0 %2332
    %v2335 = vrot.slane %v1972, 3
    %2336 = vrot.lane.b32.xlu0 %v2335, 64
    %v2337 = vpop.permute.xlu0 %2336
    %v2339 = vsel %vm162, %v1870, %v2329
    %v2340 = vsel %vm50, %v2339, %v2333
    %v2341 = vsel %vm2301, %v2340, %v2337
    %v2342 = vrot.slane %v1867, 2
    %v2344 = vrot.slane %v1972, 1
    %2345 = vrot.lane.b32.xlu0 %v2344, 32
    %v2346 = vpop.permute.xlu0 %2345
    %v2348 = vrot.slane %v1867, 3
    %2349 = vrot.lane.b32.xlu0 %v2348, 64
    %v2350 = vpop.permute.xlu0 %2349
    %v2352 = vsel %vm162, %v1975, %v2342
    %v2353 = vsel %vm50, %v2352, %v2346
    %v2354 = vsel %vm2301, %v2353, %v2350
    %v2355 = vrot.slane %v1762, 2
    %v2357 = vrot.slane %v2077, 1
    %2358 = vrot.lane.b32.xlu0 %v2357, 32
    %v2359 = vpop.permute.xlu0 %2358
    %v2361 = vrot.slane %v1762, 3
    %2362 = vrot.lane.b32.xlu0 %v2361, 64
    %v2363 = vpop.permute.xlu0 %2362
    %v2365 = vsel %vm162, %v2080, %v2355
    %v2366 = vsel %vm50, %v2365, %v2359
    %v2367 = vsel %vm2301, %v2366, %v2363
    %v2368 = vrot.slane %v1657, 2
    %v2370 = vrot.slane %v2182, 1
    %2371 = vrot.lane.b32.xlu0 %v2370, 32
    %v2372 = vpop.permute.xlu0 %2371
    %v2374 = vrot.slane %v1657, 3
    %2375 = vrot.lane.b32.xlu0 %v2374, 64
    %v2376 = vpop.permute.xlu0 %2375
    %v2378 = vsel %vm162, %v2185, %v2368
    %v2379 = vsel %vm50, %v2378, %v2372
    %v2380 = vsel %vm2301, %v2379, %v2376
    %2381 = vrot.lane.b32.xlu0 %v2287, 96
    %v2382 = vpop.permute.xlu0 %2381
    %v2384 = vrot.slane %v1552, 2
    %v2386 = vrot.slane %v2287, 1
    %2387 = vrot.lane.b32.xlu0 %v2386, 32
    %v2388 = vpop.permute.xlu0 %2387
    %v2390 = vrot.slane %v1552, 3
    %2391 = vrot.lane.b32.xlu0 %v2390, 64
    %v2392 = vpop.permute.xlu0 %2391
    %v2394 = vsel %vm162, %v2382, %v2384
    %v2395 = vsel %vm50, %v2394, %v2388
    %v2396 = vsel %vm2301, %v2395, %v2392
    %v2398 = vrot.slane %v2315, 7
    %v2401 = vrot.slane %v2328, 6
    %v2404 = vrot.slane %v2341, 5
    %v2407 = vrot.slane %v2354, 4
    %v2410 = vrot.slane %v2367, 3
    %v2413 = vrot.slane %v2380, 2
    %v2416 = vrot.slane %v2396, 1
    %vm2418 = vcmask 1040384
    %v2419 = vsel %vm2418, %v2302, %v2398
    %v2420 = vsel %vm256, %v2419, %v2401
    %vm2421 = vcmask 1042432
    %v2422 = vsel %vm2421, %v2420, %v2404
    %v2423 = vsel %vm1233, %v2422, %v2407
    %vm2424 = vcmask 1044480
    %v2425 = vsel %vm2424, %v2423, %v2410
    %v2426 = vsel %vm1235, %v2425, %v2413
    %vm2427 = vcmask 1046528
    %v2428 = vsel %vm2427, %v2426, %v2416
    %2429 = vst [vmem:[%s6] sm:$0xff] %v2428
    %v2430 = vadd.f32 %v1185, %v2287
    %v2431 = vmul.f32 %v2430, 0.5
    %2433 = vrot.lane.b32.xlu0 %v2431, 96
    %v2434 = vpop.permute.xlu0 %2433
    %vm2436 = vcmask 254976
    %2437 = vst.msk [vmem:[#allocation2] sm:$0x3] %vm2436, %v2434
    %s2438 = scalar_lea.vmem [#allocation2], 2
    %vm2439 = vcmask 257026
    %2440 = vst.msk [vmem:[%s2438 - $0x2] sm:$0xc] %vm2439, %v2434
    // Predicated region
    $region26: #{encoder_forward.1} parent=1 // pred_check
      _
    $region27: #{encoder_forward.1} parent=1 // pred_check_branch
      %2442 = sbr.rel (0) target = $region29
    $region28: #{encoder_forward.1} parent=1 // pred_region
      _
    $region29: #{encoder_forward.1} parent=1 // pred_fallthru
      _
    // Predicated region
    $region30: #{encoder_forward.1} parent=1 // pred_check
      _
    $region31: #{encoder_forward.1} parent=1 // pred_check_branch
      %2444 = sbr.rel (0) target = $region33
    $region32: #{encoder_forward.1} parent=1 // pred_region
      %s2446 = ssub.s32 64, 64
      %2447 = vsyncadd [#allocation3], %s2446
      %s2448 = sshll.u32 [#allocation2], 4
      %s2449 = int_to_ptr.vmem [resolvable:$true] %s2448
      %2454 = dma.vmem_to_hbm [thread:$0]  %s2449, 64, %s7, [#allocation3], 32, 32, 2
    $region33: #{encoder_forward.1} parent=1 // pred_fallthru
      _
    // Predicated region
    $region34: #{encoder_forward.1} parent=1 // pred_check
      _
    $region35: #{encoder_forward.1} parent=1 // pred_check_branch
      %2456 = sbr.rel (0) target = $region37
    $region36: #{encoder_forward.1} parent=1 // pred_region
      _
    $region37: #{encoder_forward.1} parent=1 // pred_fallthru
      _
    // Predicated region
    $region38: #{encoder_forward.1} parent=1 // pred_check
      _
    $region39: #{encoder_forward.1} parent=1 // pred_check_branch
      %2458 = sbr.rel (0) target = $region41
    $region40: #{encoder_forward.1} parent=1 // pred_region
      %2459 = dma.done [#allocation3], 64
    $region41: #{encoder_forward.1} parent=1 // pred_fallthru
      _
    %2460 = vsyncpa [#allocation3], 1

</llo_original>
